<compile_context>
chip_gen: v5e
topology: v5e:2x2
jax: 0.10.0
libtpu: 0.0.40
codegen_flags: <defaults>
</compile_context>

<pallas_src>
import functools

import jax
import jax.numpy as jnp
import numpy as np
from jax.experimental import pallas as pl
from jax.experimental.pallas import tpu as pltpu

HIDDEN_NF = 32
EDGE_FEAT_NF = 2      # 1 radial distance + 1 external edge attribute
N_LAYERS = 2
NORM_CONSTANT = 1.0
NORM_FACTOR = 100.0   # normalization_factor with aggregation_method='sum'
X_PAD = 8             # coordinates padded 3 -> 8 (zero columns, exact math)


def _silu(v):
    return v * jax.nn.sigmoid(v)


def _round_up(v, m):
    return ((v + m - 1) // m) * m


# ---------------------------------------------------------------------------
# Fused kernel.  grid = (N_LAYERS + 1, num_edge_tiles)
#   phase 0 .. N_LAYERS-1 : GCL layers
#   phase N_LAYERS        : EquivariantUpdate (coordinate update)
# ---------------------------------------------------------------------------
def fused_block_kernel(
        # edge-tiled inputs (packed)
        rc_ref, rowl_ref, ea_ref,
        # node-level inputs (VMEM-resident across the whole grid)
        h_in_ref, x_ref, nmask_ref, rgmask_ref,
        # per-phase GCL weights (layer selected by the BlockSpec index_map)
        we1s_ref, we1t_ref, we1e_ref, be1_ref, we2_ref, be2_ref,
        wat_ref, ba_ref, wn1_ref, bn1_ref, wn2_ref, bn2_ref,
        # EquivariantUpdate weights
        wc1s_ref, wc1t_ref, wc1e_ref, bc1_ref, wc2_ref, bc2_ref, wc3t_ref,
        # outputs
        hout_ref, xout_ref,
        # scratch (persists across grid iterations)
        h_scr, hwcat_scr, aggh_scr, aggx_scr, rad_scr, cdiff_scr):
    phase = pl.program_id(0)
    et = pl.program_id(1)
    n_et = pl.num_programs(1)
    is_gcl = phase < N_LAYERS
    is_equiv = phase == N_LAYERS
    is_first = phase == 0

    tile_e = rc_ref.shape[0]
    n_pad = x_ref.shape[0]

    # ---- one-time init: copy h into the VMEM-resident working buffer ------
    @pl.when(is_first & (et == 0))
    def _():
        h_scr[...] = h_in_ref[...]

    # ---- per-phase init: zero the used accumulator; fold the h[row]/h[col]
    # gathers into one projected, bf16, stacked buffer [h@W_src ; h@W_tgt] ---
    @pl.when(et == 0)
    def _():
        h = h_scr[...]

        @pl.when(is_gcl)
        def _():
            aggh_scr[...] = jnp.zeros_like(aggh_scr)
            hwcat_scr[pl.ds(0, n_pad), :] = jnp.dot(
                h, we1s_ref[0], preferred_element_type=jnp.float32
            ).astype(jnp.bfloat16)
            hwcat_scr[pl.ds(n_pad, n_pad), :] = jnp.dot(
                h, we1t_ref[0], preferred_element_type=jnp.float32
            ).astype(jnp.bfloat16)

        @pl.when(is_equiv)
        def _():
            aggx_scr[...] = jnp.zeros_like(aggx_scr)
            hwcat_scr[pl.ds(0, n_pad), :] = jnp.dot(
                h, wc1s_ref[...], preferred_element_type=jnp.float32
            ).astype(jnp.bfloat16)
            hwcat_scr[pl.ds(n_pad, n_pad), :] = jnp.dot(
                h, wc1t_ref[...], preferred_element_type=jnp.float32
            ).astype(jnp.bfloat16)

    # ---- per-tile edge data -------------------------------------------------
    rc = rc_ref[...]                                          # (tile_e, 2) i32
    row_ids = rc[:, 0:1]                                      # (tile_e, 1)
    col_ids = rc[:, 1:2]
    ea = ea_ref[...]                                          # (tile_e, 2) f32
    eattr = ea[:, 0:1]
    emask = ea[:, 1:2]

    # combined gather one-hot (tile_e, 2*n_pad), bf16 -> single MXU push that
    # yields  src_proj + tgt_proj  directly.
    iota2 = jax.lax.broadcasted_iota(jnp.int32, (tile_e, 2 * n_pad), 1)
    oh_cat = ((iota2 == row_ids) |
              (iota2 == (col_ids + n_pad))).astype(jnp.bfloat16)
    st_p = jnp.dot(oh_cat, hwcat_scr[...],
                   preferred_element_type=jnp.float32)        # (tile_e, H)

    # transposed scatter one-hot (n_pad, tile_e), built directly from the
    # lane-major row stream -> segment-sum is a plain A@B (no XLU transpose).
    iota_t = jax.lax.broadcasted_iota(jnp.int32, (n_pad, tile_e), 0)
    oh_rowT = (iota_t == rowl_ref[...]).astype(jnp.bfloat16)  # (n_pad, tile_e)

    # ---- geometry: computed & cached at phase 0 only (x never changes) -----
    @pl.when(is_first)
    def _():
        iota_n = jax.lax.broadcasted_iota(jnp.int32, (tile_e, n_pad), 1)
        sel_signed = ((iota_n == row_ids).astype(jnp.float32)
                      - (iota_n == col_ids).astype(jnp.float32))
        diff = jnp.dot(sel_signed, x_ref[...],
                       preferred_element_type=jnp.float32)    # x[row]-x[col]
        radial = jnp.sum(diff * diff, axis=1, keepdims=True)  # (tile_e, 1)
        cdiff = diff / (jnp.sqrt(radial + 1e-8) + NORM_CONSTANT)
        rad_scr[et] = radial
        cdiff_scr[et] = cdiff

    radial = rad_scr[et]                                      # (tile_e, 1)

    # ---- GCL phases ---------------------------------------------------------
    @pl.when(is_gcl)
    def _():
        we1e = we1e_ref[0]                                    # (2, H)
        pre1 = (st_p + be1_ref[0]
                + radial * we1e[0:1, :] + eattr * we1e[1:2, :])
        m = _silu(pre1)
        mij = _silu(jnp.dot(m, we2_ref[0], preferred_element_type=jnp.float32)
                    + be2_ref[0])
        # attention gate: width-1 output -> VPU mul + lane reduce (not MXU)
        att = jax.nn.sigmoid(
            jnp.sum(mij * wat_ref[0], axis=1, keepdims=True) + ba_ref[0])
        edge_feat = (mij * att * emask).astype(jnp.bfloat16)
        # unsorted_segment_sum over `row`  ==  oh_rowT @ edge_feat
        aggh_scr[...] += jnp.dot(oh_rowT, edge_feat,
                                 preferred_element_type=jnp.float32)

        # finalize this layer: node MLP + residual + node mask
        @pl.when(et == n_et - 1)
        def _():
            h = h_scr[...]
            agg = aggh_scr[...] * (1.0 / NORM_FACTOR)
            node_in = jnp.concatenate([h, agg], axis=1)       # (n_pad, 2H)
            pre_n = (jnp.dot(node_in, wn1_ref[0],
                             preferred_element_type=jnp.float32) + bn1_ref[0])
            out = (jnp.dot(_silu(pre_n), wn2_ref[0],
                           preferred_element_type=jnp.float32) + bn2_ref[0])
            h_scr[...] = (h + out) * nmask_ref[...]

    # ---- EquivariantUpdate phase -------------------------------------------
    @pl.when(is_equiv)
    def _():
        wc1e = wc1e_ref[...]                                  # (2, H)
        pre1 = (st_p + bc1_ref[...]
                + radial * wc1e[0:1, :] + eattr * wc1e[1:2, :])
        m = _silu(pre1)
        m = _silu(jnp.dot(m, wc2_ref[...], preferred_element_type=jnp.float32)
                  + bc2_ref[...])
        phi = jnp.sum(m * wc3t_ref[...], axis=1, keepdims=True)   # (tile_e, 1)
        trans = (cdiff_scr[et] * phi * emask).astype(jnp.bfloat16)
        aggx_scr[...] += jnp.dot(oh_rowT, trans,
                                 preferred_element_type=jnp.float32)

        @pl.when(et == n_et - 1)
        def _():
            aggx = aggx_scr[...] * (1.0 / NORM_FACTOR) * rgmask_ref[...]
            xout_ref[...] = (x_ref[...] + aggx) * nmask_ref[...]
            hout_ref[...] = h_scr[...] * nmask_ref[...]


# ---------------------------------------------------------------------------
# Wrapper
# ---------------------------------------------------------------------------
@functools.partial(jax.jit, static_argnames=('tile_e',))
def equivariant_block_forward(h, x, row, col, edge_attr_in,
                              node_mask, rgroup_mask, edge_mask, params,
                              tile_e=512):
    N, H = h.shape
    E = row.shape[0]

    # n_pad multiple of 16 so bf16 sublane offsets in hwcat_scr stay aligned.
    n_pad = _round_up(max(N, 16), 16)
    # tile_e multiple of 128 so the lane-major (1, tile_e) row block is legal.
    tile_e = _round_up(min(tile_e, _round_up(max(E, 1), 128)), 128)
    e_pad = _round_up(E, tile_e)
    n_et = e_pad // tile_e

    def pad_rows(a, target):
        return jnp.pad(a, ((0, target - a.shape[0]), (0, 0)))

    # packed edge-level arrays (padded edges: row/col -> node 0, edge_mask -> 0)
    rowi = row.astype(jnp.int32)
    coli = col.astype(jnp.int32)
    rc = pad_rows(jnp.stack([rowi, coli], axis=1), e_pad)            # (e_pad, 2)
    rowl = jnp.pad(rowi, (0, e_pad - E)).reshape(1, e_pad)           # lane-major
    ea = pad_rows(jnp.concatenate([edge_attr_in.astype(jnp.float32),
                                   edge_mask.astype(jnp.float32)],
                                  axis=1), e_pad)                    # (e_pad, 2)

    # node-level arrays (padded nodes masked out by node_mask = 0)
    hp = pad_rows(h.astype(jnp.float32), n_pad)
    xp = jnp.pad(x.astype(jnp.float32),
                 ((0, n_pad - N), (0, X_PAD - x.shape[1])))
    nmaskp = pad_rows(node_mask.astype(jnp.float32), n_pad)
    rgmaskp = pad_rows(rgroup_mask.astype(jnp.float32), n_pad)

    # stack per-layer GCL weights with a dummy trailing entry so the per-phase
    # BlockSpec index_map (p, 0, 0) is always in bounds at the equiv phase.
    gcl = params['gcl']

    def stk(key, fn=lambda w: w):
        ws = [fn(p[key]) for p in gcl]
        ws.append(ws[-1])                 # unused dummy for phase == N_LAYERS
        return jnp.stack(ws)

    we1s = stk('we1', lambda w: w[:H])
    we1t = stk('we1', lambda w: w[H:2 * H])
    we1e = stk('we1', lambda w: w[2 * H:])
    be1 = stk('be1')
    we2 = stk('we2')
    be2 = stk('be2')
    wat = stk('wa', lambda w: w.T)        # (L+1, 1, H)
    ba = stk('ba')
    wn1 = stk('wn1')                      # unsplit: concat([h, agg]) @ wn1
    bn1 = stk('bn1')
    wn2 = stk('wn2')
    bn2 = stk('bn2')

    pe = params['equiv']
    wc1s, wc1t, wc1e = pe['wc1'][:H], pe['wc1'][H:2 * H], pe['wc1'][2 * H:]
    bc1, wc2, bc2 = pe['bc1'], pe['wc2'], pe['bc2']
    wc3t = pe['wc3'].T                    # (1, H)

    node_args = (hp, xp, nmaskp, rgmaskp)
    gcl_args = (we1s, we1t, we1e, be1, we2, be2, wat, ba,
                wn1, bn1, wn2, bn2)
    eq_args = (wc1s, wc1t, wc1e, bc1, wc2, bc2, wc3t)

    def full_spec(a):
        nd = a.ndim
        return pl.BlockSpec(tuple(a.shape), lambda p, e, _nd=nd: (0,) * _nd)

    def layer_spec(a):
        nd = a.ndim
        return pl.BlockSpec((1,) + tuple(a.shape[1:]),
                            lambda p, e, _nd=nd: (p,) + (0,) * (_nd - 1))

    in_specs = ([pl.BlockSpec((tile_e, 2), lambda p, e: (e, 0)),   # row/col
                 pl.BlockSpec((1, tile_e), lambda p, e: (0, e)),   # row (lane)
                 pl.BlockSpec((tile_e, 2), lambda p, e: (e, 0))]   # attr/mask
                + [full_spec(a) for a in node_args]
                + [layer_spec(a) for a in gcl_args]
                + [full_spec(a) for a in eq_args])

    out_specs = (pl.BlockSpec((n_pad, H), lambda p, e: (0, 0)),
                 pl.BlockSpec((n_pad, X_PAD), lambda p, e: (0, 0)))

    hout, xout = pl.pallas_call(
        fused_block_kernel,
        out_shape=(jax.ShapeDtypeStruct((n_pad, H), jnp.float32),
                   jax.ShapeDtypeStruct((n_pad, X_PAD), jnp.float32)),
        grid_spec=pltpu.PrefetchScalarGridSpec(
            num_scalar_prefetch=0,
            grid=(N_LAYERS + 1, n_et),
            in_specs=in_specs,
            out_specs=out_specs,
            scratch_shapes=[
                pltpu.VMEM((n_pad, H), jnp.float32),           # resident h
                pltpu.VMEM((2 * n_pad, H), jnp.bfloat16),      # [h@Wsrc ; h@Wtgt]
                pltpu.VMEM((n_pad, H), jnp.float32),           # node seg-sum acc
                pltpu.VMEM((n_pad, X_PAD), jnp.float32),       # coord seg-sum acc
                pltpu.VMEM((n_et, tile_e, 1), jnp.float32),    # radial cache
                pltpu.VMEM((n_et, tile_e, X_PAD), jnp.float32),# cdiff cache
            ]),
        compiler_params=pltpu.CompilerParams(
            dimension_semantics=("arbitrary", "arbitrary"),
            # 32 MiB comfortably covers default tile_e=512 on molecule-scale
            # graphs; raise on v5e/v6e (128 MiB parts) if sweeping tile_e>=1024.
            vmem_limit_bytes=32 * 1024 * 1024),
    )(rc, rowl, ea, *node_args, *gcl_args, *eq_args)

    return hout[:N], xout[:N, :3]


# ---------------------------------------------------------------------------
# Deterministic parameter init (synthetic; mirrors the module's layer shapes)
# ---------------------------------------------------------------------------
def init_params(key):
    H, D = HIDDEN_NF, EDGE_FEAT_NF

    def uni(k, shape, bound):
        return jax.random.uniform(k, shape, jnp.float32, -bound, bound)

    def linear(k, fan_in, fan_out):
        kw, kb = jax.random.split(k)
        bound = 1.0 / np.sqrt(fan_in)
        return uni(kw, (fan_in, fan_out), bound), uni(kb, (1, fan_out), bound)

    params = {'gcl': [], 'equiv': {}}
    keys = jax.random.split(key, N_LAYERS + 1)
    for l in range(N_LAYERS):
        k = jax.random.split(keys[l], 5)
        we1, be1 = linear(k[0], 2 * H + D, H)
        we2, be2 = linear(k[1], H, H)
        wa, ba = linear(k[2], H, 1)
        wn1, bn1 = linear(k[3], 2 * H, H)
        wn2, bn2 = linear(k[4], H, H)
        params['gcl'].append(dict(we1=we1, be1=be1, we2=we2, be2=be2,
                                  wa=wa, ba=ba, wn1=wn1, bn1=bn1,
                                  wn2=wn2, bn2=bn2))
    k = jax.random.split(keys[-1], 3)
    wc1, bc1 = linear(k[0], 2 * H + D, H)
    wc2, bc2 = linear(k[1], H, H)
    # last coord layer: Linear(H, 1, bias=False), xavier_uniform gain=0.001
    bound = 0.001 * np.sqrt(6.0 / (H + 1))
    wc3 = uni(k[2], (H, 1), bound)
    params['equiv'] = dict(wc1=wc1, bc1=bc1, wc2=wc2, bc2=bc2, wc3=wc3)
    return params


# ---------------------------------------------------------------------------
# Pure-JAX reference (mirrors the PyTorch semantics exactly) for validation
# ---------------------------------------------------------------------------
def reference_forward(h, x, row, col, edge_attr_in,
                      node_mask, rgroup_mask, edge_mask, params):
    N = h.shape[0]
    diff = x[row] - x[col]
    radial = jnp.sum(diff ** 2, axis=1, keepdims=True)
    norm = jnp.sqrt(radial + 1e-8)
    coord_diff = diff / (norm + NORM_CONSTANT)
    edge_attr = jnp.concatenate([radial, edge_attr_in], axis=1)

    for l in range(N_LAYERS):
        p = params['gcl'][l]
        inp = jnp.concatenate([h[row], h[col], edge_attr], axis=1)
        m = _silu(inp @ p['we1'] + p['be1'])
        mij = _silu(m @ p['we2'] + p['be2'])
        att = jax.nn.sigmoid(mij @ p['wa'] + p['ba'])
        edge_feat = mij * att * edge_mask
        agg = jnp.zeros((N, edge_feat.shape[1]), jnp.float32).at[row].add(edge_feat) / NORM_FACTOR
        node_inp = jnp.concatenate([h, agg], axis=1)
        out = _silu(node_inp @ p['wn1'] + p['bn1']) @ p['wn2'] + p['bn2']
        h = (h + out) * node_mask

    pe = params['equiv']
    inp = jnp.concatenate([h[row], h[col], edge_attr], axis=1)
    m = _silu(inp @ pe['wc1'] + pe['bc1'])
    m = _silu(m @ pe['wc2'] + pe['bc2'])
    phi = m @ pe['wc3']
    trans = coord_diff * phi * edge_mask
    agg = jnp.zeros((N, 3), jnp.float32).at[row].add(trans) / NORM_FACTOR
    agg = agg * rgroup_mask
    x_new = (x + agg) * node_mask
    h_out = h * node_mask
    return h_out, x_new


if __name__ == "__main__":
    key = jax.random.PRNGKey(0)
    kh, kx, ke, kp = jax.random.split(key, 4)

    N, H = 16, HIDDEN_NF
    # fully-connected graph without self loops -> E = 240 edges
    rows, cols = [], []
    for i in range(N):
        for j in range(N):
            if i != j:
                rows.append(i)
                cols.append(j)
    row = jnp.asarray(rows, jnp.int32)
    col = jnp.asarray(cols, jnp.int32)
    E = int(row.shape[0])

    h = jax.random.normal(kh, (N, H), jnp.float32)
    x = jax.random.normal(kx, (N, 3), jnp.float32)
    edge_attr_in = jax.random.normal(ke, (E, 1), jnp.float32)
    node_mask = jnp.ones((N, 1), jnp.float32).at[N - 1].set(0.0)
    edge_mask = node_mask[row] * node_mask[col]          # (E, 1)
    rgroup_mask = jnp.ones((N, 1), jnp.float32).at[0].set(0.0)

    params = init_params(kp)

    # tile_e=128 -> 2 edge tiles with a zero-masked padded tail, exercising the
    # cross-tile accumulator segment sum and the phase-0 geometry cache.
    h_out, x_out = equivariant_block_forward(
        h, x, row, col, edge_attr_in, node_mask, rgroup_mask, edge_mask, params,
        tile_e=128)
    jax.block_until_ready((h_out, x_out))

    h_ref, x_ref = reference_forward(
        h, x, row, col, edge_attr_in, node_mask, rgroup_mask, edge_mask, params)

    np.testing.assert_allclose(np.asarray(h_out), np.asarray(h_ref), rtol=1e-2, atol=1e-2)
    np.testing.assert_allclose(np.asarray(x_out), np.asarray(x_ref), rtol=1e-2, atol=1e-2)
    print("KERNEL_OK")
</pallas_src>

<mosaic_0001>
module attributes {stable_mosaic.version = 11 : i64} {
  func.func @fused_block_kernel(%arg0: i32, %arg1: i32, %arg2: memref<128x2xi32, #tpu.memory_space<vmem>>, %arg3: memref<1x128xi32, #tpu.memory_space<vmem>>, %arg4: memref<128x2xf32, #tpu.memory_space<vmem>>, %arg5: memref<16x32xf32, #tpu.memory_space<vmem>>, %arg6: memref<16x8xf32, #tpu.memory_space<vmem>>, %arg7: memref<16x1xf32, #tpu.memory_space<vmem>>, %arg8: memref<16x1xf32, #tpu.memory_space<vmem>>, %arg9: memref<1x32x32xf32, #tpu.memory_space<vmem>>, %arg10: memref<1x32x32xf32, #tpu.memory_space<vmem>>, %arg11: memref<1x2x32xf32, #tpu.memory_space<vmem>>, %arg12: memref<1x1x32xf32, #tpu.memory_space<vmem>>, %arg13: memref<1x32x32xf32, #tpu.memory_space<vmem>>, %arg14: memref<1x1x32xf32, #tpu.memory_space<vmem>>, %arg15: memref<1x1x32xf32, #tpu.memory_space<vmem>>, %arg16: memref<1x1x1xf32, #tpu.memory_space<vmem>>, %arg17: memref<1x64x32xf32, #tpu.memory_space<vmem>>, %arg18: memref<1x1x32xf32, #tpu.memory_space<vmem>>, %arg19: memref<1x32x32xf32, #tpu.memory_space<vmem>>, %arg20: memref<1x1x32xf32, #tpu.memory_space<vmem>>, %arg21: memref<32x32xf32, #tpu.memory_space<vmem>>, %arg22: memref<32x32xf32, #tpu.memory_space<vmem>>, %arg23: memref<2x32xf32, #tpu.memory_space<vmem>>, %arg24: memref<1x32xf32, #tpu.memory_space<vmem>>, %arg25: memref<32x32xf32, #tpu.memory_space<vmem>>, %arg26: memref<1x32xf32, #tpu.memory_space<vmem>>, %arg27: memref<1x32xf32, #tpu.memory_space<vmem>>, %arg28: memref<16x32xf32, #tpu.memory_space<vmem>>, %arg29: memref<16x8xf32, #tpu.memory_space<vmem>>, %arg30: memref<16x32xf32, #tpu.memory_space<vmem>>, %arg31: memref<32x32xbf16, #tpu.memory_space<vmem>>, %arg32: memref<16x32xf32, #tpu.memory_space<vmem>>, %arg33: memref<16x8xf32, #tpu.memory_space<vmem>>, %arg34: memref<2x128x1xf32, #tpu.memory_space<vmem>>, %arg35: memref<2x128x8xf32, #tpu.memory_space<vmem>>) attributes {dimension_semantics = [#tpu.dimension_semantics<arbitrary>, #tpu.dimension_semantics<arbitrary>], iteration_bounds = array<i64: 3, 2>, scalar_prefetch = 0 : i64, scratch_operands = 6 : i64, tpu.core_type = #tpu.core_type<tc>, window_params = [{transform_indices = @transform_0, window_bounds = array<i64: 128, 2>}, {transform_indices = @transform_1, window_bounds = array<i64: 1, 128>}, {transform_indices = @transform_2, window_bounds = array<i64: 128, 2>}, {pipeline_mode = #tpu.pipeline_mode<synchronous>, transform_indices = @transform_3, window_bounds = array<i64: 16, 32>}, {pipeline_mode = #tpu.pipeline_mode<synchronous>, transform_indices = @transform_4, window_bounds = array<i64: 16, 8>}, {pipeline_mode = #tpu.pipeline_mode<synchronous>, transform_indices = @transform_5, window_bounds = array<i64: 16, 1>}, {pipeline_mode = #tpu.pipeline_mode<synchronous>, transform_indices = @transform_6, window_bounds = array<i64: 16, 1>}, {transform_indices = @transform_7, window_bounds = array<i64: 1, 32, 32>}, {transform_indices = @transform_8, window_bounds = array<i64: 1, 32, 32>}, {transform_indices = @transform_9, window_bounds = array<i64: 1, 2, 32>}, {transform_indices = @transform_10, window_bounds = array<i64: 1, 1, 32>}, {transform_indices = @transform_11, window_bounds = array<i64: 1, 32, 32>}, {transform_indices = @transform_12, window_bounds = array<i64: 1, 1, 32>}, {transform_indices = @transform_13, window_bounds = array<i64: 1, 1, 32>}, {transform_indices = @transform_14, window_bounds = array<i64: 1, 1, 1>}, {transform_indices = @transform_15, window_bounds = array<i64: 1, 64, 32>}, {transform_indices = @transform_16, window_bounds = array<i64: 1, 1, 32>}, {transform_indices = @transform_17, window_bounds = array<i64: 1, 32, 32>}, {transform_indices = @transform_18, window_bounds = array<i64: 1, 1, 32>}, {pipeline_mode = #tpu.pipeline_mode<synchronous>, transform_indices = @transform_19, window_bounds = array<i64: 32, 32>}, {pipeline_mode = #tpu.pipeline_mode<synchronous>, transform_indices = @transform_20, window_bounds = array<i64: 32, 32>}, {pipeline_mode = #tpu.pipeline_mode<synchronous>, transform_indices = @transform_21, window_bounds = array<i64: 2, 32>}, {pipeline_mode = #tpu.pipeline_mode<synchronous>, transform_indices = @transform_22, window_bounds = array<i64: 1, 32>}, {pipeline_mode = #tpu.pipeline_mode<synchronous>, transform_indices = @transform_23, window_bounds = array<i64: 32, 32>}, {pipeline_mode = #tpu.pipeline_mode<synchronous>, transform_indices = @transform_24, window_bounds = array<i64: 1, 32>}, {pipeline_mode = #tpu.pipeline_mode<synchronous>, transform_indices = @transform_25, window_bounds = array<i64: 1, 32>}, {pipeline_mode = #tpu.pipeline_mode<synchronous>, transform_indices = @transform_26, window_bounds = array<i64: 16, 32>}, {pipeline_mode = #tpu.pipeline_mode<synchronous>, transform_indices = @transform_27, window_bounds = array<i64: 16, 8>}]} {
    %c2_i32 = arith.constant 2 : i32
    %0 = arith.cmpi slt, %arg0, %c2_i32 : i32
    %c2_i32_0 = arith.constant 2 : i32
    %1 = arith.cmpi eq, %arg0, %c2_i32_0 : i32
    %c0_i32 = arith.constant 0 : i32
    %2 = arith.cmpi eq, %arg0, %c0_i32 : i32
    %c0_i32_1 = arith.constant 0 : i32
    %3 = arith.cmpi eq, %arg1, %c0_i32_1 : i32
    %4 = arith.andi %2, %3 : i1
    %5 = arith.extui %4 : i1 to i32
    %c0_i32_2 = arith.constant 0 : i32
    %6 = arith.cmpi ne, %5, %c0_i32_2 : i32
    scf.if %6 {
      %c0_17 = arith.constant 0 : index
      %c0_18 = arith.constant 0 : index
      %45 = vector.load %arg5[%c0_17, %c0_18] : memref<16x32xf32, #tpu.memory_space<vmem>>, vector<16x32xf32>
      %c0_19 = arith.constant 0 : index
      %c0_20 = arith.constant 0 : index
      %46 = vector.load %arg30[%c0_19, %c0_20] : memref<16x32xf32, #tpu.memory_space<vmem>>, vector<16x32xf32>
      tpu.vector_store %arg30[%c0_19, %c0_20], %45 {strides = array<i32>} : memref<16x32xf32, #tpu.memory_space<vmem>>, vector<16x32xf32>,
    } else {
    }
    %c0_i32_3 = arith.constant 0 : i32
    %7 = arith.cmpi eq, %arg1, %c0_i32_3 : i32
    %8 = arith.extui %7 : i1 to i32
    %c0_i32_4 = arith.constant 0 : i32
    %9 = arith.cmpi ne, %8, %c0_i32_4 : i32
    scf.if %9 {
      %c0_17 = arith.constant 0 : index
      %c0_18 = arith.constant 0 : index
      %45 = vector.load %arg30[%c0_17, %c0_18] : memref<16x32xf32, #tpu.memory_space<vmem>>, vector<16x32xf32>
      %46 = arith.extui %0 : i1 to i32
      %c0_i32_19 = arith.constant 0 : i32
      %47 = arith.cmpi ne, %46, %c0_i32_19 : i32
      scf.if %47 {
        %cst_21 = arith.constant 0.000000e+00 : f32
        %50 = vector.broadcast %cst_21 : f32 to vector<16x32xf32>
        %c0_22 = arith.constant 0 : index
        %c0_23 = arith.constant 0 : index
        %51 = vector.load %arg32[%c0_22, %c0_23] : memref<16x32xf32, #tpu.memory_space<vmem>>, vector<16x32xf32>
        tpu.vector_store %arg32[%c0_22, %c0_23], %50 {strides = array<i32>} : memref<16x32xf32, #tpu.memory_space<vmem>>, vector<16x32xf32>,
        %c0_24 = arith.constant 0 : index
        %c0_25 = arith.constant 0 : index
        %c0_26 = arith.constant 0 : index
        %52 = vector.load %arg9[%c0_24, %c0_25, %c0_26] : memref<1x32x32xf32, #tpu.memory_space<vmem>>, vector<1x32x32xf32>
        %53 = vector.shape_cast %52 : vector<1x32x32xf32> to vector<32x32xf32>
        %cst_27 = arith.constant dense<0.000000e+00> : vector<16x32xf32>
        %54 = tpu.matmul %45, %53, %cst_27 {dimension_numbers = #tpu.dot_dimension_numbers<[1], [0], [0], [1], [0, 0, 1, 1], [], []>} : vector<16x32xf32>, vector<32x32xf32>, vector<16x32xf32> -> vector<16x32xf32>
        %55 = arith.truncf %54 : vector<16x32xf32> to vector<16x32xbf16>
        %c0_28 = arith.constant 0 : index
        %c0_29 = arith.constant 0 : index
        %56 = vector.load %arg31[%c0_28, %c0_29] : memref<32x32xbf16, #tpu.memory_space<vmem>>, vector<16x32xbf16>
        tpu.vector_store %arg31[%c0_28, %c0_29], %55 {strides = array<i32>} : memref<32x32xbf16, #tpu.memory_space<vmem>>, vector<16x32xbf16>,
        %c0_30 = arith.constant 0 : index
        %c0_31 = arith.constant 0 : index
        %c0_32 = arith.constant 0 : index
        %57 = vector.load %arg10[%c0_30, %c0_31, %c0_32] : memref<1x32x32xf32, #tpu.memory_space<vmem>>, vector<1x32x32xf32>
        %58 = vector.shape_cast %57 : vector<1x32x32xf32> to vector<32x32xf32>
        %cst_33 = arith.constant dense<0.000000e+00> : vector<16x32xf32>
        %59 = tpu.matmul %45, %58, %cst_33 {dimension_numbers = #tpu.dot_dimension_numbers<[1], [0], [0], [1], [0, 0, 1, 1], [], []>} : vector<16x32xf32>, vector<32x32xf32>, vector<16x32xf32> -> vector<16x32xf32>
        %60 = arith.truncf %59 : vector<16x32xf32> to vector<16x32xbf16>
        %c16 = arith.constant 16 : index
        %c0_34 = arith.constant 0 : index
        %61 = vector.load %arg31[%c16, %c0_34] : memref<32x32xbf16, #tpu.memory_space<vmem>>, vector<16x32xbf16>
        tpu.vector_store %arg31[%c16, %c0_34], %60 {strides = array<i32>} : memref<32x32xbf16, #tpu.memory_space<vmem>>, vector<16x32xbf16>,
      } else {
      }
      %48 = arith.extui %1 : i1 to i32
      %c0_i32_20 = arith.constant 0 : i32
      %49 = arith.cmpi ne, %48, %c0_i32_20 : i32
      scf.if %49 {
        %cst_21 = arith.constant 0.000000e+00 : f32
        %50 = vector.broadcast %cst_21 : f32 to vector<16x8xf32>
        %c0_22 = arith.constant 0 : index
        %c0_23 = arith.constant 0 : index
        %51 = vector.load %arg33[%c0_22, %c0_23] : memref<16x8xf32, #tpu.memory_space<vmem>>, vector<16x8xf32>
        tpu.vector_store %arg33[%c0_22, %c0_23], %50 {strides = array<i32>} : memref<16x8xf32, #tpu.memory_space<vmem>>, vector<16x8xf32>,
        %c0_24 = arith.constant 0 : index
        %c0_25 = arith.constant 0 : index
        %52 = vector.load %arg21[%c0_24, %c0_25] : memref<32x32xf32, #tpu.memory_space<vmem>>, vector<32x32xf32>
        %cst_26 = arith.constant dense<0.000000e+00> : vector<16x32xf32>
        %53 = tpu.matmul %45, %52, %cst_26 {dimension_numbers = #tpu.dot_dimension_numbers<[1], [0], [0], [1], [0, 0, 1, 1], [], []>} : vector<16x32xf32>, vector<32x32xf32>, vector<16x32xf32> -> vector<16x32xf32>
        %54 = arith.truncf %53 : vector<16x32xf32> to vector<16x32xbf16>
        %c0_27 = arith.constant 0 : index
        %c0_28 = arith.constant 0 : index
        %55 = vector.load %arg31[%c0_27, %c0_28] : memref<32x32xbf16, #tpu.memory_space<vmem>>, vector<16x32xbf16>
        tpu.vector_store %arg31[%c0_27, %c0_28], %54 {strides = array<i32>} : memref<32x32xbf16, #tpu.memory_space<vmem>>, vector<16x32xbf16>,
        %c0_29 = arith.constant 0 : index
        %c0_30 = arith.constant 0 : index
        %56 = vector.load %arg22[%c0_29, %c0_30] : memref<32x32xf32, #tpu.memory_space<vmem>>, vector<32x32xf32>
        %cst_31 = arith.constant dense<0.000000e+00> : vector<16x32xf32>
        %57 = tpu.matmul %45, %56, %cst_31 {dimension_numbers = #tpu.dot_dimension_numbers<[1], [0], [0], [1], [0, 0, 1, 1], [], []>} : vector<16x32xf32>, vector<32x32xf32>, vector<16x32xf32> -> vector<16x32xf32>
        %58 = arith.truncf %57 : vector<16x32xf32> to vector<16x32xbf16>
        %c16 = arith.constant 16 : index
        %c0_32 = arith.constant 0 : index
        %59 = vector.load %arg31[%c16, %c0_32] : memref<32x32xbf16, #tpu.memory_space<vmem>>, vector<16x32xbf16>
        tpu.vector_store %arg31[%c16, %c0_32], %58 {strides = array<i32>} : memref<32x32xbf16, #tpu.memory_space<vmem>>, vector<16x32xbf16>,
      } else {
      }
    } else {
    }
    %c0 = arith.constant 0 : index
    %c0_5 = arith.constant 0 : index
    %10 = vector.load %arg2[%c0, %c0_5] : memref<128x2xi32, #tpu.memory_space<vmem>>, vector<128x2xi32>
    %11 = vector.extract_strided_slice %10 {offsets = [0, 0], sizes = [128, 1], strides = [1, 1]} : vector<128x2xi32> to vector<128x1xi32>
    %12 = vector.extract_strided_slice %10 {offsets = [0, 1], sizes = [128, 1], strides = [1, 1]} : vector<128x2xi32> to vector<128x1xi32>
    %c0_6 = arith.constant 0 : index
    %c0_7 = arith.constant 0 : index
    %13 = vector.load %arg4[%c0_6, %c0_7] : memref<128x2xf32, #tpu.memory_space<vmem>>, vector<128x2xf32>
    %14 = vector.extract_strided_slice %13 {offsets = [0, 0], sizes = [128, 1], strides = [1, 1]} : vector<128x2xf32> to vector<128x1xf32>
    %15 = vector.extract_strided_slice %13 {offsets = [0, 1], sizes = [128, 1], strides = [1, 1]} : vector<128x2xf32> to vector<128x1xf32>
    %16 = tpu.iota {dimensions = array<i32: 1>} : vector<128x32xi32>
    %17 = vector.broadcast %11 : vector<128x1xi32> to vector<128x32xi32>
    %18 = arith.cmpi eq, %16, %17 : vector<128x32xi32>
    %c16_i32 = arith.constant 16 : i32
    %19 = vector.broadcast %c16_i32 : i32 to vector<128x1xi32>
    %20 = arith.addi %12, %19 : vector<128x1xi32>
    %21 = vector.broadcast %20 : vector<128x1xi32> to vector<128x32xi32>
    %22 = arith.cmpi eq, %16, %21 : vector<128x32xi32>
    %23 = arith.ori %18, %22 : vector<128x32xi1>
    %24 = arith.extui %23 : vector<128x32xi1> to vector<128x32xi32>
    %25 = arith.sitofp %24 : vector<128x32xi32> to vector<128x32xf32>
    %26 = arith.truncf %25 : vector<128x32xf32> to vector<128x32xbf16>
    %c0_8 = arith.constant 0 : index
    %c0_9 = arith.constant 0 : index
    %27 = vector.load %arg31[%c0_8, %c0_9] : memref<32x32xbf16, #tpu.memory_space<vmem>>, vector<32x32xbf16>
    %cst = arith.constant dense<0.000000e+00> : vector<128x32xf32>
    %28 = tpu.matmul %26, %27, %cst {dimension_numbers = #tpu.dot_dimension_numbers<[1], [0], [0], [1], [0, 0, 1, 1], [], []>} : vector<128x32xbf16>, vector<32x32xbf16>, vector<128x32xf32> -> vector<128x32xf32>
    %29 = tpu.iota {dimensions = array<i32: 0>} : vector<16x128xi32>
    %c0_10 = arith.constant 0 : index
    %c0_11 = arith.constant 0 : index
    %30 = vector.load %arg3[%c0_10, %c0_11] : memref<1x128xi32, #tpu.memory_space<vmem>>, vector<1x128xi32>
    %31 = vector.broadcast %30 : vector<1x128xi32> to vector<16x128xi32>
    %32 = arith.cmpi eq, %29, %31 : vector<16x128xi32>
    %33 = arith.extui %32 : vector<16x128xi1> to vector<16x128xi32>
    %34 = arith.sitofp %33 : vector<16x128xi32> to vector<16x128xf32>
    %35 = arith.truncf %34 : vector<16x128xf32> to vector<16x128xbf16>
    %36 = arith.extui %2 : i1 to i32
    %c0_i32_12 = arith.constant 0 : i32
    %37 = arith.cmpi ne, %36, %c0_i32_12 : i32
    scf.if %37 {
      %45 = tpu.iota {dimensions = array<i32: 1>} : vector<128x16xi32>
      %46 = vector.broadcast %11 : vector<128x1xi32> to vector<128x16xi32>
      %47 = arith.cmpi eq, %45, %46 : vector<128x16xi32>
      %48 = arith.extui %47 : vector<128x16xi1> to vector<128x16xi32>
      %49 = arith.sitofp %48 : vector<128x16xi32> to vector<128x16xf32>
      %50 = vector.broadcast %12 : vector<128x1xi32> to vector<128x16xi32>
      %51 = arith.cmpi eq, %45, %50 : vector<128x16xi32>
      %52 = arith.extui %51 : vector<128x16xi1> to vector<128x16xi32>
      %53 = arith.sitofp %52 : vector<128x16xi32> to vector<128x16xf32>
      %54 = arith.subf %49, %53 : vector<128x16xf32>
      %c0_17 = arith.constant 0 : index
      %c0_18 = arith.constant 0 : index
      %55 = vector.load %arg6[%c0_17, %c0_18] : memref<16x8xf32, #tpu.memory_space<vmem>>, vector<16x8xf32>
      %cst_19 = arith.constant dense<0.000000e+00> : vector<128x8xf32>
      %56 = tpu.matmul %54, %55, %cst_19 {dimension_numbers = #tpu.dot_dimension_numbers<[1], [0], [0], [1], [0, 0, 1, 1], [], []>} : vector<128x16xf32>, vector<16x8xf32>, vector<128x8xf32> -> vector<128x8xf32>
      %57 = arith.mulf %56, %56 : vector<128x8xf32>
      %cst_20 = arith.constant dense<0.000000e+00> : vector<128xf32>
      %58 = vector.multi_reduction <add>, %57, %cst_20 [1] : vector<128x8xf32> to vector<128xf32>
      %59 = vector.shape_cast %58 : vector<128xf32> to vector<128x1xf32>
      %cst_21 = arith.constant 9.99999993E-9 : f32
      %60 = vector.broadcast %cst_21 : f32 to vector<128x1xf32>
      %61 = arith.addf %59, %60 : vector<128x1xf32>
      %62 = math.sqrt %61 : vector<128x1xf32>
      %cst_22 = arith.constant 1.000000e+00 : f32
      %63 = vector.broadcast %cst_22 : f32 to vector<128x1xf32>
      %64 = arith.addf %62, %63 : vector<128x1xf32>
      %65 = vector.broadcast %64 : vector<128x1xf32> to vector<128x8xf32>
      %66 = arith.divf %56, %65 : vector<128x8xf32>
      %67 = arith.index_cast %arg1 : i32 to index
      %c0_23 = arith.constant 0 : index
      %c0_24 = arith.constant 0 : index
      %68 = vector.load %arg34[%67, %c0_23, %c0_24] : memref<2x128x1xf32, #tpu.memory_space<vmem>>, vector<1x128x1xf32>
      %69 = vector.shape_cast %68 : vector<1x128x1xf32> to vector<128x1xf32>
      %70 = vector.shape_cast %59 : vector<128x1xf32> to vector<1x128x1xf32>
      tpu.vector_store %arg34[%67, %c0_23, %c0_24], %70 {strides = array<i32>} : memref<2x128x1xf32, #tpu.memory_space<vmem>>, vector<1x128x1xf32>,
      %71 = arith.index_cast %arg1 : i32 to index
      %c0_25 = arith.constant 0 : index
      %c0_26 = arith.constant 0 : index
      %72 = vector.load %arg35[%71, %c0_25, %c0_26] : memref<2x128x8xf32, #tpu.memory_space<vmem>>, vector<1x128x8xf32>
      %73 = vector.shape_cast %72 : vector<1x128x8xf32> to vector<128x8xf32>
      %74 = vector.shape_cast %66 : vector<128x8xf32> to vector<1x128x8xf32>
      tpu.vector_store %arg35[%71, %c0_25, %c0_26], %74 {strides = array<i32>} : memref<2x128x8xf32, #tpu.memory_space<vmem>>, vector<1x128x8xf32>,
    } else {
    }
    %38 = arith.index_cast %arg1 : i32 to index
    %c0_13 = arith.constant 0 : index
    %c0_14 = arith.constant 0 : index
    %39 = vector.load %arg34[%38, %c0_13, %c0_14] : memref<2x128x1xf32, #tpu.memory_space<vmem>>, vector<1x128x1xf32>
    %40 = vector.shape_cast %39 : vector<1x128x1xf32> to vector<128x1xf32>
    %41 = arith.extui %0 : i1 to i32
    %c0_i32_15 = arith.constant 0 : i32
    %42 = arith.cmpi ne, %41, %c0_i32_15 : i32
    scf.if %42 {
      %c0_17 = arith.constant 0 : index
      %c0_18 = arith.constant 0 : index
      %c0_19 = arith.constant 0 : index
      %45 = vector.load %arg11[%c0_17, %c0_18, %c0_19] : memref<1x2x32xf32, #tpu.memory_space<vmem>>, vector<1x2x32xf32>
      %46 = vector.shape_cast %45 : vector<1x2x32xf32> to vector<2x32xf32>
      %c0_20 = arith.constant 0 : index
      %c0_21 = arith.constant 0 : index
      %c0_22 = arith.constant 0 : index
      %47 = vector.load %arg12[%c0_20, %c0_21, %c0_22] : memref<1x1x32xf32, #tpu.memory_space<vmem>>, vector<1x1x32xf32>
      %48 = vector.shape_cast %47 : vector<1x1x32xf32> to vector<1x32xf32>
      %49 = vector.broadcast %48 : vector<1x32xf32> to vector<128x32xf32>
      %50 = arith.addf %28, %49 : vector<128x32xf32>
      %51 = vector.extract_strided_slice %46 {offsets = [0, 0], sizes = [1, 32], strides = [1, 1]} : vector<2x32xf32> to vector<1x32xf32>
      %52 = vector.broadcast %40 : vector<128x1xf32> to vector<128x32xf32>
      %53 = vector.broadcast %51 : vector<1x32xf32> to vector<128x32xf32>
      %54 = arith.mulf %52, %53 : vector<128x32xf32>
      %55 = arith.addf %50, %54 : vector<128x32xf32>
      %56 = vector.extract_strided_slice %46 {offsets = [1, 0], sizes = [1, 32], strides = [1, 1]} : vector<2x32xf32> to vector<1x32xf32>
      %57 = vector.broadcast %14 : vector<128x1xf32> to vector<128x32xf32>
      %58 = vector.broadcast %56 : vector<1x32xf32> to vector<128x32xf32>
      %59 = arith.mulf %57, %58 : vector<128x32xf32>
      %60 = arith.addf %55, %59 : vector<128x32xf32>
      %61 = arith.negf %60 : vector<128x32xf32>
      %62 = math.exp %61 : vector<128x32xf32>
      %cst_23 = arith.constant 1.000000e+00 : f32
      %63 = vector.broadcast %cst_23 : f32 to vector<128x32xf32>
      %64 = arith.addf %63, %62 : vector<128x32xf32>
      %65 = arith.divf %63, %64 : vector<128x32xf32>
      %66 = arith.mulf %60, %65 : vector<128x32xf32>
      %c0_24 = arith.constant 0 : index
      %c0_25 = arith.constant 0 : index
      %c0_26 = arith.constant 0 : index
      %67 = vector.load %arg13[%c0_24, %c0_25, %c0_26] : memref<1x32x32xf32, #tpu.memory_space<vmem>>, vector<1x32x32xf32>
      %68 = vector.shape_cast %67 : vector<1x32x32xf32> to vector<32x32xf32>
      %cst_27 = arith.constant dense<0.000000e+00> : vector<128x32xf32>
      %69 = tpu.matmul %66, %68, %cst_27 {dimension_numbers = #tpu.dot_dimension_numbers<[1], [0], [0], [1], [0, 0, 1, 1], [], []>} : vector<128x32xf32>, vector<32x32xf32>, vector<128x32xf32> -> vector<128x32xf32>
      %c0_28 = arith.constant 0 : index
      %c0_29 = arith.constant 0 : index
      %c0_30 = arith.constant 0 : index
      %70 = vector.load %arg14[%c0_28, %c0_29, %c0_30] : memref<1x1x32xf32, #tpu.memory_space<vmem>>, vector<1x1x32xf32>
      %71 = vector.shape_cast %70 : vector<1x1x32xf32> to vector<1x32xf32>
      %72 = vector.broadcast %71 : vector<1x32xf32> to vector<128x32xf32>
      %73 = arith.addf %69, %72 : vector<128x32xf32>
      %74 = arith.negf %73 : vector<128x32xf32>
      %75 = math.exp %74 : vector<128x32xf32>
      %cst_31 = arith.constant 1.000000e+00 : f32
      %76 = vector.broadcast %cst_31 : f32 to vector<128x32xf32>
      %77 = arith.addf %76, %75 : vector<128x32xf32>
      %78 = arith.divf %76, %77 : vector<128x32xf32>
      %79 = arith.mulf %73, %78 : vector<128x32xf32>
      %c0_32 = arith.constant 0 : index
      %c0_33 = arith.constant 0 : index
      %c0_34 = arith.constant 0 : index
      %80 = vector.load %arg15[%c0_32, %c0_33, %c0_34] : memref<1x1x32xf32, #tpu.memory_space<vmem>>, vector<1x1x32xf32>
      %81 = vector.shape_cast %80 : vector<1x1x32xf32> to vector<1x32xf32>
      %82 = vector.broadcast %81 : vector<1x32xf32> to vector<128x32xf32>
      %83 = arith.mulf %79, %82 : vector<128x32xf32>
      %cst_35 = arith.constant dense<0.000000e+00> : vector<128xf32>
      %84 = vector.multi_reduction <add>, %83, %cst_35 [1] : vector<128x32xf32> to vector<128xf32>
      %85 = vector.shape_cast %84 : vector<128xf32> to vector<128x1xf32>
      %c0_36 = arith.constant 0 : index
      %c0_37 = arith.constant 0 : index
      %c0_38 = arith.constant 0 : index
      %86 = vector.load %arg16[%c0_36, %c0_37, %c0_38] : memref<1x1x1xf32, #tpu.memory_space<vmem>>, vector<1x1x1xf32>
      %87 = vector.shape_cast %86 : vector<1x1x1xf32> to vector<1x1xf32>
      %88 = vector.broadcast %87 : vector<1x1xf32> to vector<128x1xf32>
      %89 = arith.addf %85, %88 : vector<128x1xf32>
      %90 = arith.negf %89 : vector<128x1xf32>
      %91 = math.exp %90 : vector<128x1xf32>
      %cst_39 = arith.constant 1.000000e+00 : f32
      %92 = vector.broadcast %cst_39 : f32 to vector<128x1xf32>
      %93 = arith.addf %92, %91 : vector<128x1xf32>
      %94 = arith.divf %92, %93 : vector<128x1xf32>
      %95 = vector.broadcast %94 : vector<128x1xf32> to vector<128x32xf32>
      %96 = arith.mulf %79, %95 : vector<128x32xf32>
      %97 = vector.broadcast %15 : vector<128x1xf32> to vector<128x32xf32>
      %98 = arith.mulf %96, %97 : vector<128x32xf32>
      %99 = arith.truncf %98 : vector<128x32xf32> to vector<128x32xbf16>
      %c0_40 = arith.constant 0 : index
      %c0_41 = arith.constant 0 : index
      %100 = vector.load %arg32[%c0_40, %c0_41] : memref<16x32xf32, #tpu.memory_space<vmem>>, vector<16x32xf32>
      %cst_42 = arith.constant dense<0.000000e+00> : vector<16x32xf32>
      %101 = tpu.matmul %35, %99, %cst_42 {dimension_numbers = #tpu.dot_dimension_numbers<[1], [0], [0], [1], [0, 0, 1, 1], [], []>} : vector<16x128xbf16>, vector<128x32xbf16>, vector<16x32xf32> -> vector<16x32xf32>
      %102 = arith.addf %100, %101 : vector<16x32xf32>
      %c0_43 = arith.constant 0 : index
      %c0_44 = arith.constant 0 : index
      %103 = vector.load %arg32[%c0_43, %c0_44] : memref<16x32xf32, #tpu.memory_space<vmem>>, vector<16x32xf32>
      tpu.vector_store %arg32[%c0_43, %c0_44], %102 {strides = array<i32>} : memref<16x32xf32, #tpu.memory_space<vmem>>, vector<16x32xf32>,
      %c1_i32 = arith.constant 1 : i32
      %104 = arith.cmpi eq, %arg1, %c1_i32 : i32
      %105 = arith.extui %104 : i1 to i32
      %c0_i32_45 = arith.constant 0 : i32
      %106 = arith.cmpi ne, %105, %c0_i32_45 : i32
      scf.if %106 {
        %c0_46 = arith.constant 0 : index
        %c0_47 = arith.constant 0 : index
        %107 = vector.load %arg30[%c0_46, %c0_47] : memref<16x32xf32, #tpu.memory_space<vmem>>, vector<16x32xf32>
        %c0_48 = arith.constant 0 : index
        %c0_49 = arith.constant 0 : index
        %108 = vector.load %arg32[%c0_48, %c0_49] : memref<16x32xf32, #tpu.memory_space<vmem>>, vector<16x32xf32>
        %cst_50 = arith.constant 0.00999999977 : f32
        %109 = vector.broadcast %cst_50 : f32 to vector<16x32xf32>
        %110 = arith.mulf %108, %109 : vector<16x32xf32>
        %111 = tpu.concatenate %107, %110 in 1 : vector<16x32xf32>, vector<16x32xf32> -> vector<16x64xf32>
        %c0_51 = arith.constant 0 : index
        %c0_52 = arith.constant 0 : index
        %c0_53 = arith.constant 0 : index
        %112 = vector.load %arg17[%c0_51, %c0_52, %c0_53] : memref<1x64x32xf32, #tpu.memory_space<vmem>>, vector<1x64x32xf32>
        %113 = vector.shape_cast %112 : vector<1x64x32xf32> to vector<64x32xf32>
        %cst_54 = arith.constant dense<0.000000e+00> : vector<16x32xf32>
        %114 = tpu.matmul %111, %113, %cst_54 {dimension_numbers = #tpu.dot_dimension_numbers<[1], [0], [0], [1], [0, 0, 1, 1], [], []>} : vector<16x64xf32>, vector<64x32xf32>, vector<16x32xf32> -> vector<16x32xf32>
        %c0_55 = arith.constant 0 : index
        %c0_56 = arith.constant 0 : index
        %c0_57 = arith.constant 0 : index
        %115 = vector.load %arg18[%c0_55, %c0_56, %c0_57] : memref<1x1x32xf32, #tpu.memory_space<vmem>>, vector<1x1x32xf32>
        %116 = vector.shape_cast %115 : vector<1x1x32xf32> to vector<1x32xf32>
        %117 = vector.broadcast %116 : vector<1x32xf32> to vector<16x32xf32>
        %118 = arith.addf %114, %117 : vector<16x32xf32>
        %119 = arith.negf %118 : vector<16x32xf32>
        %120 = math.exp %119 : vector<16x32xf32>
        %cst_58 = arith.constant 1.000000e+00 : f32
        %121 = vector.broadcast %cst_58 : f32 to vector<16x32xf32>
        %122 = arith.addf %121, %120 : vector<16x32xf32>
        %123 = arith.divf %121, %122 : vector<16x32xf32>
        %124 = arith.mulf %118, %123 : vector<16x32xf32>
        %c0_59 = arith.constant 0 : index
        %c0_60 = arith.constant 0 : index
        %c0_61 = arith.constant 0 : index
        %125 = vector.load %arg19[%c0_59, %c0_60, %c0_61] : memref<1x32x32xf32, #tpu.memory_space<vmem>>, vector<1x32x32xf32>
        %126 = vector.shape_cast %125 : vector<1x32x32xf32> to vector<32x32xf32>
        %cst_62 = arith.constant dense<0.000000e+00> : vector<16x32xf32>
        %127 = tpu.matmul %124, %126, %cst_62 {dimension_numbers = #tpu.dot_dimension_numbers<[1], [0], [0], [1], [0, 0, 1, 1], [], []>} : vector<16x32xf32>, vector<32x32xf32>, vector<16x32xf32> -> vector<16x32xf32>
        %c0_63 = arith.constant 0 : index
        %c0_64 = arith.constant 0 : index
        %c0_65 = arith.constant 0 : index
        %128 = vector.load %arg20[%c0_63, %c0_64, %c0_65] : memref<1x1x32xf32, #tpu.memory_space<vmem>>, vector<1x1x32xf32>
        %129 = vector.shape_cast %128 : vector<1x1x32xf32> to vector<1x32xf32>
        %130 = vector.broadcast %129 : vector<1x32xf32> to vector<16x32xf32>
        %131 = arith.addf %127, %130 : vector<16x32xf32>
        %132 = arith.addf %107, %131 : vector<16x32xf32>
        %c0_66 = arith.constant 0 : index
        %c0_67 = arith.constant 0 : index
        %133 = vector.load %arg7[%c0_66, %c0_67] : memref<16x1xf32, #tpu.memory_space<vmem>>, vector<16x1xf32>
        %134 = vector.broadcast %133 : vector<16x1xf32> to vector<16x32xf32>
        %135 = arith.mulf %132, %134 : vector<16x32xf32>
        %c0_68 = arith.constant 0 : index
        %c0_69 = arith.constant 0 : index
        %136 = vector.load %arg30[%c0_68, %c0_69] : memref<16x32xf32, #tpu.memory_space<vmem>>, vector<16x32xf32>
        tpu.vector_store %arg30[%c0_68, %c0_69], %135 {strides = array<i32>} : memref<16x32xf32, #tpu.memory_space<vmem>>, vector<16x32xf32>,
      } else {
      }
    } else {
    }
    %43 = arith.extui %1 : i1 to i32
    %c0_i32_16 = arith.constant 0 : i32
    %44 = arith.cmpi ne, %43, %c0_i32_16 : i32
    scf.if %44 {
      %c0_17 = arith.constant 0 : index
      %c0_18 = arith.constant 0 : index
      %45 = vector.load %arg23[%c0_17, %c0_18] : memref<2x32xf32, #tpu.memory_space<vmem>>, vector<2x32xf32>
      %c0_19 = arith.constant 0 : index
      %c0_20 = arith.constant 0 : index
      %46 = vector.load %arg24[%c0_19, %c0_20] : memref<1x32xf32, #tpu.memory_space<vmem>>, vector<1x32xf32>
      %47 = vector.broadcast %46 : vector<1x32xf32> to vector<128x32xf32>
      %48 = arith.addf %28, %47 : vector<128x32xf32>
      %49 = vector.extract_strided_slice %45 {offsets = [0, 0], sizes = [1, 32], strides = [1, 1]} : vector<2x32xf32> to vector<1x32xf32>
      %50 = vector.broadcast %40 : vector<128x1xf32> to vector<128x32xf32>
      %51 = vector.broadcast %49 : vector<1x32xf32> to vector<128x32xf32>
      %52 = arith.mulf %50, %51 : vector<128x32xf32>
      %53 = arith.addf %48, %52 : vector<128x32xf32>
      %54 = vector.extract_strided_slice %45 {offsets = [1, 0], sizes = [1, 32], strides = [1, 1]} : vector<2x32xf32> to vector<1x32xf32>
      %55 = vector.broadcast %14 : vector<128x1xf32> to vector<128x32xf32>
      %56 = vector.broadcast %54 : vector<1x32xf32> to vector<128x32xf32>
      %57 = arith.mulf %55, %56 : vector<128x32xf32>
      %58 = arith.addf %53, %57 : vector<128x32xf32>
      %59 = arith.negf %58 : vector<128x32xf32>
      %60 = math.exp %59 : vector<128x32xf32>
      %cst_21 = arith.constant 1.000000e+00 : f32
      %61 = vector.broadcast %cst_21 : f32 to vector<128x32xf32>
      %62 = arith.addf %61, %60 : vector<128x32xf32>
      %63 = arith.divf %61, %62 : vector<128x32xf32>
      %64 = arith.mulf %58, %63 : vector<128x32xf32>
      %c0_22 = arith.constant 0 : index
      %c0_23 = arith.constant 0 : index
      %65 = vector.load %arg25[%c0_22, %c0_23] : memref<32x32xf32, #tpu.memory_space<vmem>>, vector<32x32xf32>
      %cst_24 = arith.constant dense<0.000000e+00> : vector<128x32xf32>
      %66 = tpu.matmul %64, %65, %cst_24 {dimension_numbers = #tpu.dot_dimension_numbers<[1], [0], [0], [1], [0, 0, 1, 1], [], []>} : vector<128x32xf32>, vector<32x32xf32>, vector<128x32xf32> -> vector<128x32xf32>
      %c0_25 = arith.constant 0 : index
      %c0_26 = arith.constant 0 : index
      %67 = vector.load %arg26[%c0_25, %c0_26] : memref<1x32xf32, #tpu.memory_space<vmem>>, vector<1x32xf32>
      %68 = vector.broadcast %67 : vector<1x32xf32> to vector<128x32xf32>
      %69 = arith.addf %66, %68 : vector<128x32xf32>
      %70 = arith.negf %69 : vector<128x32xf32>
      %71 = math.exp %70 : vector<128x32xf32>
      %cst_27 = arith.constant 1.000000e+00 : f32
      %72 = vector.broadcast %cst_27 : f32 to vector<128x32xf32>
      %73 = arith.addf %72, %71 : vector<128x32xf32>
      %74 = arith.divf %72, %73 : vector<128x32xf32>
      %75 = arith.mulf %69, %74 : vector<128x32xf32>
      %c0_28 = arith.constant 0 : index
      %c0_29 = arith.constant 0 : index
      %76 = vector.load %arg27[%c0_28, %c0_29] : memref<1x32xf32, #tpu.memory_space<vmem>>, vector<1x32xf32>
      %77 = vector.broadcast %76 : vector<1x32xf32> to vector<128x32xf32>
      %78 = arith.mulf %75, %77 : vector<128x32xf32>
      %cst_30 = arith.constant dense<0.000000e+00> : vector<128xf32>
      %79 = vector.multi_reduction <add>, %78, %cst_30 [1] : vector<128x32xf32> to vector<128xf32>
      %80 = vector.shape_cast %79 : vector<128xf32> to vector<128x1xf32>
      %81 = arith.index_cast %arg1 : i32 to index
      %c0_31 = arith.constant 0 : index
      %c0_32 = arith.constant 0 : index
      %82 = vector.load %arg35[%81, %c0_31, %c0_32] : memref<2x128x8xf32, #tpu.memory_space<vmem>>, vector<1x128x8xf32>
      %83 = vector.shape_cast %82 : vector<1x128x8xf32> to vector<128x8xf32>
      %84 = vector.broadcast %80 : vector<128x1xf32> to vector<128x8xf32>
      %85 = arith.mulf %83, %84 : vector<128x8xf32>
      %86 = vector.broadcast %15 : vector<128x1xf32> to vector<128x8xf32>
      %87 = arith.mulf %85, %86 : vector<128x8xf32>
      %88 = arith.truncf %87 : vector<128x8xf32> to vector<128x8xbf16>
      %c0_33 = arith.constant 0 : index
      %c0_34 = arith.constant 0 : index
      %89 = vector.load %arg33[%c0_33, %c0_34] : memref<16x8xf32, #tpu.memory_space<vmem>>, vector<16x8xf32>
      %cst_35 = arith.constant dense<0.000000e+00> : vector<16x8xf32>
      %90 = tpu.matmul %35, %88, %cst_35 {dimension_numbers = #tpu.dot_dimension_numbers<[1], [0], [0], [1], [0, 0, 1, 1], [], []>} : vector<16x128xbf16>, vector<128x8xbf16>, vector<16x8xf32> -> vector<16x8xf32>
      %91 = arith.addf %89, %90 : vector<16x8xf32>
      %c0_36 = arith.constant 0 : index
      %c0_37 = arith.constant 0 : index
      %92 = vector.load %arg33[%c0_36, %c0_37] : memref<16x8xf32, #tpu.memory_space<vmem>>, vector<16x8xf32>
      tpu.vector_store %arg33[%c0_36, %c0_37], %91 {strides = array<i32>} : memref<16x8xf32, #tpu.memory_space<vmem>>, vector<16x8xf32>,
      %c1_i32 = arith.constant 1 : i32
      %93 = arith.cmpi eq, %arg1, %c1_i32 : i32
      %94 = arith.extui %93 : i1 to i32
      %c0_i32_38 = arith.constant 0 : i32
      %95 = arith.cmpi ne, %94, %c0_i32_38 : i32
      scf.if %95 {
        %c0_39 = arith.constant 0 : index
        %c0_40 = arith.constant 0 : index
        %96 = vector.load %arg33[%c0_39, %c0_40] : memref<16x8xf32, #tpu.memory_space<vmem>>, vector<16x8xf32>
        %cst_41 = arith.constant 0.00999999977 : f32
        %97 = vector.broadcast %cst_41 : f32 to vector<16x8xf32>
        %98 = arith.mulf %96, %97 : vector<16x8xf32>
        %c0_42 = arith.constant 0 : index
        %c0_43 = arith.constant 0 : index
        %99 = vector.load %arg8[%c0_42, %c0_43] : memref<16x1xf32, #tpu.memory_space<vmem>>, vector<16x1xf32>
        %100 = vector.broadcast %99 : vector<16x1xf32> to vector<16x8xf32>
        %101 = arith.mulf %98, %100 : vector<16x8xf32>
        %c0_44 = arith.constant 0 : index
        %c0_45 = arith.constant 0 : index
        %102 = vector.load %arg6[%c0_44, %c0_45] : memref<16x8xf32, #tpu.memory_space<vmem>>, vector<16x8xf32>
        %103 = arith.addf %102, %101 : vector<16x8xf32>
        %c0_46 = arith.constant 0 : index
        %c0_47 = arith.constant 0 : index
        %104 = vector.load %arg7[%c0_46, %c0_47] : memref<16x1xf32, #tpu.memory_space<vmem>>, vector<16x1xf32>
        %105 = vector.broadcast %104 : vector<16x1xf32> to vector<16x8xf32>
        %106 = arith.mulf %103, %105 : vector<16x8xf32>
        %c0_48 = arith.constant 0 : index
        %c0_49 = arith.constant 0 : index
        %107 = vector.load %arg29[%c0_48, %c0_49] : memref<16x8xf32, #tpu.memory_space<vmem>>, vector<16x8xf32>
        tpu.vector_store %arg29[%c0_48, %c0_49], %106 {strides = array<i32>} : memref<16x8xf32, #tpu.memory_space<vmem>>, vector<16x8xf32>,
        %c0_50 = arith.constant 0 : index
        %c0_51 = arith.constant 0 : index
        %108 = vector.load %arg30[%c0_50, %c0_51] : memref<16x32xf32, #tpu.memory_space<vmem>>, vector<16x32xf32>
        %c0_52 = arith.constant 0 : index
        %c0_53 = arith.constant 0 : index
        %109 = vector.load %arg7[%c0_52, %c0_53] : memref<16x1xf32, #tpu.memory_space<vmem>>, vector<16x1xf32>
        %110 = vector.broadcast %109 : vector<16x1xf32> to vector<16x32xf32>
        %111 = arith.mulf %108, %110 : vector<16x32xf32>
        %c0_54 = arith.constant 0 : index
        %c0_55 = arith.constant 0 : index
        %112 = vector.load %arg28[%c0_54, %c0_55] : memref<16x32xf32, #tpu.memory_space<vmem>>, vector<16x32xf32>
        tpu.vector_store %arg28[%c0_54, %c0_55], %111 {strides = array<i32>} : memref<16x32xf32, #tpu.memory_space<vmem>>, vector<16x32xf32>,
      } else {
      }
    } else {
    }
    return
  }
  func.func @transform_0(%arg0: i32, %arg1: i32) -> (i32, i32) {
    %c0_i32 = arith.constant 0 : i32
    %c0_i32_0 = arith.constant 0 : i32
    return %arg1, %c0_i32 : i32, i32
  }
  func.func @transform_1(%arg0: i32, %arg1: i32) -> (i32, i32) {
    %c0_i32 = arith.constant 0 : i32
    %c0_i32_0 = arith.constant 0 : i32
    return %c0_i32, %arg1 : i32, i32
  }
  func.func @transform_2(%arg0: i32, %arg1: i32) -> (i32, i32) {
    %c0_i32 = arith.constant 0 : i32
    %c0_i32_0 = arith.constant 0 : i32
    return %arg1, %c0_i32 : i32, i32
  }
  func.func @transform_3(%arg0: i32, %arg1: i32) -> (i32, i32) {
    %c0_i32 = arith.constant 0 : i32
    %c0_i32_0 = arith.constant 0 : i32
    %c0_i32_1 = arith.constant 0 : i32
    return %c0_i32, %c0_i32_0 : i32, i32
  }
  func.func @transform_4(%arg0: i32, %arg1: i32) -> (i32, i32) {
    %c0_i32 = arith.constant 0 : i32
    %c0_i32_0 = arith.constant 0 : i32
    %c0_i32_1 = arith.constant 0 : i32
    return %c0_i32, %c0_i32_0 : i32, i32
  }
  func.func @transform_5(%arg0: i32, %arg1: i32) -> (i32, i32) {
    %c0_i32 = arith.constant 0 : i32
    %c0_i32_0 = arith.constant 0 : i32
    %c0_i32_1 = arith.constant 0 : i32
    return %c0_i32, %c0_i32_0 : i32, i32
  }
  func.func @transform_6(%arg0: i32, %arg1: i32) -> (i32, i32) {
    %c0_i32 = arith.constant 0 : i32
    %c0_i32_0 = arith.constant 0 : i32
    %c0_i32_1 = arith.constant 0 : i32
    return %c0_i32, %c0_i32_0 : i32, i32
  }
  func.func @transform_7(%arg0: i32, %arg1: i32) -> (i32, i32, i32) {
    %c0_i32 = arith.constant 0 : i32
    %c0_i32_0 = arith.constant 0 : i32
    %c0_i32_1 = arith.constant 0 : i32
    return %arg0, %c0_i32, %c0_i32_0 : i32, i32, i32
  }
  func.func @transform_8(%arg0: i32, %arg1: i32) -> (i32, i32, i32) {
    %c0_i32 = arith.constant 0 : i32
    %c0_i32_0 = arith.constant 0 : i32
    %c0_i32_1 = arith.constant 0 : i32
    return %arg0, %c0_i32, %c0_i32_0 : i32, i32, i32
  }
  func.func @transform_9(%arg0: i32, %arg1: i32) -> (i32, i32, i32) {
    %c0_i32 = arith.constant 0 : i32
    %c0_i32_0 = arith.constant 0 : i32
    %c0_i32_1 = arith.constant 0 : i32
    return %arg0, %c0_i32, %c0_i32_0 : i32, i32, i32
  }
  func.func @transform_10(%arg0: i32, %arg1: i32) -> (i32, i32, i32) {
    %c0_i32 = arith.constant 0 : i32
    %c0_i32_0 = arith.constant 0 : i32
    %c0_i32_1 = arith.constant 0 : i32
    return %arg0, %c0_i32, %c0_i32_0 : i32, i32, i32
  }
  func.func @transform_11(%arg0: i32, %arg1: i32) -> (i32, i32, i32) {
    %c0_i32 = arith.constant 0 : i32
    %c0_i32_0 = arith.constant 0 : i32
    %c0_i32_1 = arith.constant 0 : i32
    return %arg0, %c0_i32, %c0_i32_0 : i32, i32, i32
  }
  func.func @transform_12(%arg0: i32, %arg1: i32) -> (i32, i32, i32) {
    %c0_i32 = arith.constant 0 : i32
    %c0_i32_0 = arith.constant 0 : i32
    %c0_i32_1 = arith.constant 0 : i32
    return %arg0, %c0_i32, %c0_i32_0 : i32, i32, i32
  }
  func.func @transform_13(%arg0: i32, %arg1: i32) -> (i32, i32, i32) {
    %c0_i32 = arith.constant 0 : i32
    %c0_i32_0 = arith.constant 0 : i32
    %c0_i32_1 = arith.constant 0 : i32
    return %arg0, %c0_i32, %c0_i32_0 : i32, i32, i32
  }
  func.func @transform_14(%arg0: i32, %arg1: i32) -> (i32, i32, i32) {
    %c0_i32 = arith.constant 0 : i32
    %c0_i32_0 = arith.constant 0 : i32
    %c0_i32_1 = arith.constant 0 : i32
    return %arg0, %c0_i32, %c0_i32_0 : i32, i32, i32
  }
  func.func @transform_15(%arg0: i32, %arg1: i32) -> (i32, i32, i32) {
    %c0_i32 = arith.constant 0 : i32
    %c0_i32_0 = arith.constant 0 : i32
    %c0_i32_1 = arith.constant 0 : i32
    return %arg0, %c0_i32, %c0_i32_0 : i32, i32, i32
  }
  func.func @transform_16(%arg0: i32, %arg1: i32) -> (i32, i32, i32) {
    %c0_i32 = arith.constant 0 : i32
    %c0_i32_0 = arith.constant 0 : i32
    %c0_i32_1 = arith.constant 0 : i32
    return %arg0, %c0_i32, %c0_i32_0 : i32, i32, i32
  }
  func.func @transform_17(%arg0: i32, %arg1: i32) -> (i32, i32, i32) {
    %c0_i32 = arith.constant 0 : i32
    %c0_i32_0 = arith.constant 0 : i32
    %c0_i32_1 = arith.constant 0 : i32
    return %arg0, %c0_i32, %c0_i32_0 : i32, i32, i32
  }
  func.func @transform_18(%arg0: i32, %arg1: i32) -> (i32, i32, i32) {
    %c0_i32 = arith.constant 0 : i32
    %c0_i32_0 = arith.constant 0 : i32
    %c0_i32_1 = arith.constant 0 : i32
    return %arg0, %c0_i32, %c0_i32_0 : i32, i32, i32
  }
  func.func @transform_19(%arg0: i32, %arg1: i32) -> (i32, i32) {
    %c0_i32 = arith.constant 0 : i32
    %c0_i32_0 = arith.constant 0 : i32
    %c0_i32_1 = arith.constant 0 : i32
    return %c0_i32, %c0_i32_0 : i32, i32
  }
  func.func @transform_20(%arg0: i32, %arg1: i32) -> (i32, i32) {
    %c0_i32 = arith.constant 0 : i32
    %c0_i32_0 = arith.constant 0 : i32
    %c0_i32_1 = arith.constant 0 : i32
    return %c0_i32, %c0_i32_0 : i32, i32
  }
  func.func @transform_21(%arg0: i32, %arg1: i32) -> (i32, i32) {
    %c0_i32 = arith.constant 0 : i32
    %c0_i32_0 = arith.constant 0 : i32
    %c0_i32_1 = arith.constant 0 : i32
    return %c0_i32, %c0_i32_0 : i32, i32
  }
  func.func @transform_22(%arg0: i32, %arg1: i32) -> (i32, i32) {
    %c0_i32 = arith.constant 0 : i32
    %c0_i32_0 = arith.constant 0 : i32
    %c0_i32_1 = arith.constant 0 : i32
    return %c0_i32, %c0_i32_0 : i32, i32
  }
  func.func @transform_23(%arg0: i32, %arg1: i32) -> (i32, i32) {
    %c0_i32 = arith.constant 0 : i32
    %c0_i32_0 = arith.constant 0 : i32
    %c0_i32_1 = arith.constant 0 : i32
    return %c0_i32, %c0_i32_0 : i32, i32
  }
  func.func @transform_24(%arg0: i32, %arg1: i32) -> (i32, i32) {
    %c0_i32 = arith.constant 0 : i32
    %c0_i32_0 = arith.constant 0 : i32
    %c0_i32_1 = arith.constant 0 : i32
    return %c0_i32, %c0_i32_0 : i32, i32
  }
  func.func @transform_25(%arg0: i32, %arg1: i32) -> (i32, i32) {
    %c0_i32 = arith.constant 0 : i32
    %c0_i32_0 = arith.constant 0 : i32
    %c0_i32_1 = arith.constant 0 : i32
    return %c0_i32, %c0_i32_0 : i32, i32
  }
  func.func @transform_26(%arg0: i32, %arg1: i32) -> (i32, i32) {
    %c0_i32 = arith.constant 0 : i32
    %c0_i32_0 = arith.constant 0 : i32
    %c0_i32_1 = arith.constant 0 : i32
    return %c0_i32, %c0_i32_0 : i32, i32
  }
  func.func @transform_27(%arg0: i32, %arg1: i32) -> (i32, i32) {
    %c0_i32 = arith.constant 0 : i32
    %c0_i32_0 = arith.constant 0 : i32
    %c0_i32_1 = arith.constant 0 : i32
    return %c0_i32, %c0_i32_0 : i32, i32
  }
}

</mosaic_0001>

<llo_original>
// kernel: equivariant_block_forward.1
$region0: #{equivariant_block_forward.1}
  #allocation0 [shape = 'u32[]', space=smem, size = 0x4, offset = 0x4, fixed_abs, tag = 'smem constant byte address 0x4 - core index']
  #allocation1 [shape = 'u32[72,128]{1,0:T(1,128)}', space=vmem, size = 0x9000, scoped, tag = 'internal scratch']
  #allocation2 [shape = 'f32[16,32]{1,0:T(8,128)}', space=vmem, size = 0x2000, scoped, tag = 'scratch operand']
  #allocation3 [shape = 'bf16[32,32]{1,0:T(8,128)(2,1)}', space=vmem, size = 0x2000, scoped, tag = 'scratch operand']
  #allocation4 [shape = 'f32[16,32]{1,0:T(8,128)}', space=vmem, size = 0x2000, scoped, tag = 'scratch operand']
  #allocation5 [shape = 'f32[16,8]{1,0:T(8,128)}', space=vmem, size = 0x2000, scoped, tag = 'scratch operand']
  #allocation6 [shape = 'f32[2,128,1]{2,1,0:T(8,128)}', space=vmem, size = 0x20000, scoped, tag = 'scratch operand']
  #allocation7 [shape = 'f32[2,128,8]{2,1,0:T(8,128)}', space=vmem, size = 0x20000, scoped, tag = 'scratch operand']
  %s0 = inlined_call_operand.vmem [shape: s32[256,2], index: 0, kind: input, shape index: {}]
  %s1 = inlined_call_operand.vmem [shape: s32[1,256], index: 1, kind: input, shape index: {}]
  %s2 = inlined_call_operand.vmem [shape: f32[256,2], index: 2, kind: input, shape index: {}]
  %s3 = inlined_call_operand.vmem [shape: f32[16,32], index: 3, kind: input, shape index: {}]
  %s4 = inlined_call_operand.vmem [shape: f32[16,8], index: 4, kind: input, shape index: {}]
  %s5 = inlined_call_operand.vmem [shape: f32[16,1], index: 5, kind: input, shape index: {}]
  %s6 = inlined_call_operand.vmem [shape: f32[16,1], index: 6, kind: input, shape index: {}]
  %s7 = inlined_call_operand.vmem [shape: f32[3,32,32], index: 7, kind: input, shape index: {}]
  %s8 = inlined_call_operand.vmem [shape: f32[3,32,32], index: 8, kind: input, shape index: {}]
  %s9 = inlined_call_operand.vmem [shape: f32[3,2,32], index: 9, kind: input, shape index: {}]
  %s10 = inlined_call_operand.vmem [shape: f32[3,1,32], index: 10, kind: input, shape index: {}]
  %s11 = inlined_call_operand.vmem [shape: f32[3,32,32], index: 11, kind: input, shape index: {}]
  %s12 = inlined_call_operand.vmem [shape: f32[3,1,32], index: 12, kind: input, shape index: {}]
  %s13 = inlined_call_operand.vmem [shape: f32[3,1,32], index: 13, kind: input, shape index: {}]
  %s14 = inlined_call_operand.vmem [shape: f32[3,1,1], index: 14, kind: input, shape index: {}]
  %s15 = inlined_call_operand.vmem [shape: f32[3,64,32], index: 15, kind: input, shape index: {}]
  %s16 = inlined_call_operand.vmem [shape: f32[3,1,32], index: 16, kind: input, shape index: {}]
  %s17 = inlined_call_operand.vmem [shape: f32[3,32,32], index: 17, kind: input, shape index: {}]
  %s18 = inlined_call_operand.vmem [shape: f32[3,1,32], index: 18, kind: input, shape index: {}]
  %s19 = inlined_call_operand.vmem [shape: f32[32,32], index: 19, kind: input, shape index: {}]
  %s20 = inlined_call_operand.vmem [shape: f32[32,32], index: 20, kind: input, shape index: {}]
  %s21 = inlined_call_operand.vmem [shape: f32[2,32], index: 21, kind: input, shape index: {}]
  %s22 = inlined_call_operand.vmem [shape: f32[1,32], index: 22, kind: input, shape index: {}]
  %s23 = inlined_call_operand.vmem [shape: f32[32,32], index: 23, kind: input, shape index: {}]
  %s24 = inlined_call_operand.vmem [shape: f32[1,32], index: 24, kind: input, shape index: {}]
  %s25 = inlined_call_operand.vmem [shape: f32[1,32], index: 25, kind: input, shape index: {}]
  %s26 = inlined_call_operand.hbm [shape: f32[16,32], index: 26, kind: output, shape index: {0}]
  %s27 = inlined_call_operand.vmem [shape: f32[16,8], index: 27, kind: output, shape index: {1}]
  %28 = xla_tuple %s26, %s27
  %s29 = sld [smem:[#allocation0]]
  $region181: #{equivariant_block_forward.1} parent=0
    _
  %s31 = ssub.s32 1, %s29
  %s32 = scalar_select 0, %s31, %s29
  $region1: #{equivariant_block_forward.1} parent=0
    #allocation8 [shape = 'u8[8192]{0}', space=vmem, size = 0x2000, scoped, tag = 'output window, operand 0, single buffered']
    #allocation9 [shape = 's32[2]{0}', space=sflag, size = 0x8, scoped, tag = 'scoped memory for equivariant_block_forward.1']
    %33 = vsyncpa [#allocation9], 0
    loop: start=0, step=1, limit=8
    $region2: #{equivariant_block_forward.1} parent=1 // loop_pre_header
      _
    $region3: #{equivariant_block_forward.1} parent=1 // loop_header
      %s35 = sphi 0, %s39
      %p36 = scmp.ge.s32.totalorder %s35, 8
      %s42 = sphi 0, %s54
      %s43 = sphi 0, %s50
      %s44 = sphi 0, %s42
      %s45 = sphi 0, %s43
      %s46 = sphi 0, %s44
      %s47 = sphi 0, %s45
      %s57 = sphi 0, %s59
      %s60 = sphi 0, %s57
      %s61 = sphi 0, %s60
      %s77 = sphi 0, %s61
      %s83 = sphi 0, %s85
      %s86 = sphi 0, %s83
      %s87 = sphi 0, %s86
      %s103 = sphi 0, %s87
      %s109 = sphi 0, %s111
      %s112 = sphi 0, %s109
      %s113 = sphi 0, %s112
      %s129 = sphi 0, %s113
      %s133 = sphi 0, %s133
      %s135 = sphi 0, %s133
      %s136 = sphi 0, %s135
      %s150 = sphi 0, %s136
      %s154 = sphi 0, %s154
      %s156 = sphi 0, %s154
      %s157 = sphi 0, %s156
      %s171 = sphi 0, %s157
      %s175 = sphi 0, %s175
      %s177 = sphi 0, %s175
      %s178 = sphi 0, %s177
      %s192 = sphi 0, %s178
      %s196 = sphi 0, %s196
      %s198 = sphi 0, %s196
      %s199 = sphi 0, %s198
      %s213 = sphi 0, %s199
      %s219 = sphi 0, %s221
      %s222 = sphi 0, %s219
      %s223 = sphi 0, %s222
      %s239 = sphi 0, %s223
      %s245 = sphi 0, %s247
      %s248 = sphi 0, %s245
      %s249 = sphi 0, %s248
      %s265 = sphi 0, %s249
      %s271 = sphi 0, %s273
      %s274 = sphi 0, %s271
      %s275 = sphi 0, %s274
      %s291 = sphi 0, %s275
      %s297 = sphi 0, %s299
      %s300 = sphi 0, %s297
      %s301 = sphi 0, %s300
      %s317 = sphi 0, %s301
      %s323 = sphi 0, %s325
      %s326 = sphi 0, %s323
      %s327 = sphi 0, %s326
      %s343 = sphi 0, %s327
      %s349 = sphi 0, %s351
      %s352 = sphi 0, %s349
      %s353 = sphi 0, %s352
      %s369 = sphi 0, %s353
      %s375 = sphi 0, %s377
      %s378 = sphi 0, %s375
      %s379 = sphi 0, %s378
      %s395 = sphi 0, %s379
      %s401 = sphi 0, %s403
      %s404 = sphi 0, %s401
      %s405 = sphi 0, %s404
      %s421 = sphi 0, %s405
      %s427 = sphi 0, %s429
      %s430 = sphi 0, %s427
      %s431 = sphi 0, %s430
      %s447 = sphi 0, %s431
      %s453 = sphi 0, %s455
      %s456 = sphi 0, %s453
      %s457 = sphi 0, %s456
      %s473 = sphi 0, %s457
      %s479 = sphi 0, %s481
      %s482 = sphi 0, %s479
      %s483 = sphi 0, %s482
      %s499 = sphi 0, %s483
      %s505 = sphi 0, %s507
      %s508 = sphi 0, %s505
      %s509 = sphi 0, %s508
      %s525 = sphi 0, %s509
      %s529 = sphi 0, %s529
      %s531 = sphi 0, %s529
      %s532 = sphi 0, %s531
      %s546 = sphi 0, %s532
      %s550 = sphi 0, %s550
      %s552 = sphi 0, %s550
      %s553 = sphi 0, %s552
      %s567 = sphi 0, %s553
      %s571 = sphi 0, %s571
      %s573 = sphi 0, %s571
      %s574 = sphi 0, %s573
      %s588 = sphi 0, %s574
      %s592 = sphi 0, %s592
      %s594 = sphi 0, %s592
      %s595 = sphi 0, %s594
      %s609 = sphi 0, %s595
      %s613 = sphi 0, %s613
      %s615 = sphi 0, %s613
      %s616 = sphi 0, %s615
      %s630 = sphi 0, %s616
      %s634 = sphi 0, %s634
      %s636 = sphi 0, %s634
      %s637 = sphi 0, %s636
      %s651 = sphi 0, %s637
      %s655 = sphi 0, %s655
      %s657 = sphi 0, %s655
      %s658 = sphi 0, %s657
      %s672 = sphi 0, %s658
      %s676 = sphi 0, %s676
      %s678 = sphi 0, %s676
      %s679 = sphi 0, %s678
      %s693 = sphi 0, %s679
      %s697 = sphi 0, %s697
      %s699 = sphi 0, %s697
      %s700 = sphi 0, %s699
      %s714 = sphi 0, %s700
    $region4: #{equivariant_block_forward.1} parent=1 // loop_header_branch
      %38 = sbr.rel (%p36) target = $region8
    $region5: #{equivariant_block_forward.1} parent=1 // loop_body
      %s40 = ssub.s32 %s35, 1
      %s41 = ssub.s32 %s35, 2
      %s48 = sadd.s32 1, %s43
      %p49 = scmp.ge.s32.totalorder %s48, 2
      %s50 = scalar_select %p49, 0, %s48
      %s51 = sadd.s32 1, %s42
      %s52 = scalar_select %p49, %s51, %s42
      %p53 = scmp.ge.s32.totalorder %s52, 3
      %s54 = scalar_select %p53, 0, %s52
      %s55 = ssub.s32 %s43, %s50
      %p56 = scmp.eq.s32.totalorder %s55, 0
      %s58 = sadd.s32 %s57, 1
      %s59 = scalar_select %p56, %s57, %s58
      %p62 = pneg %p56
      %p63 = scmp.eq.s32.totalorder %s35, 5
      %p64 = por %p62, %p63
      %p65 = scmp.ne.s32.totalorder %s57, %s60
      %p66 = scmp.eq.s32.totalorder %s35, 0
      %p67 = por %p65, %p66
      %p68 = scmp.ne.s32.totalorder %s57, %s60
      %p69 = scmp.eq.s32.totalorder %s40, 5
      %p70 = por %p68, %p69
      %p71 = scmp.ne.s32.totalorder %s60, %s61
      %p72 = scmp.eq.s32.totalorder %s40, 0
      %p73 = por %p71, %p72
      %p74 = scmp.ne.s32.totalorder %s60, %s61
      %p75 = scmp.eq.s32.totalorder %s41, 5
      %p76 = por %p74, %p75
      %p78 = scmp.ne.s32.totalorder %s61, %s77
      %p79 = scmp.eq.s32.totalorder %s41, 0
      %p80 = por %p78, %p79
      %s81 = ssub.s32 %s43, %s50
      %p82 = scmp.eq.s32.totalorder %s81, 0
      %s84 = sadd.s32 %s83, 1
      %s85 = scalar_select %p82, %s83, %s84
      %p88 = pneg %p82
      %p89 = scmp.eq.s32.totalorder %s35, 5
      %p90 = por %p88, %p89
      %p91 = scmp.ne.s32.totalorder %s83, %s86
      %p92 = scmp.eq.s32.totalorder %s35, 0
      %p93 = por %p91, %p92
      %p94 = scmp.ne.s32.totalorder %s83, %s86
      %p95 = scmp.eq.s32.totalorder %s40, 5
      %p96 = por %p94, %p95
      %p97 = scmp.ne.s32.totalorder %s86, %s87
      %p98 = scmp.eq.s32.totalorder %s40, 0
      %p99 = por %p97, %p98
      %p100 = scmp.ne.s32.totalorder %s86, %s87
      %p101 = scmp.eq.s32.totalorder %s41, 5
      %p102 = por %p100, %p101
      %p104 = scmp.ne.s32.totalorder %s87, %s103
      %p105 = scmp.eq.s32.totalorder %s41, 0
      %p106 = por %p104, %p105
      %s107 = ssub.s32 %s43, %s50
      %p108 = scmp.eq.s32.totalorder %s107, 0
      %s110 = sadd.s32 %s109, 1
      %s111 = scalar_select %p108, %s109, %s110
      %p114 = pneg %p108
      %p115 = scmp.eq.s32.totalorder %s35, 5
      %p116 = por %p114, %p115
      %p117 = scmp.ne.s32.totalorder %s109, %s112
      %p118 = scmp.eq.s32.totalorder %s35, 0
      %p119 = por %p117, %p118
      %p120 = scmp.ne.s32.totalorder %s109, %s112
      %p121 = scmp.eq.s32.totalorder %s40, 5
      %p122 = por %p120, %p121
      %p123 = scmp.ne.s32.totalorder %s112, %s113
      %p124 = scmp.eq.s32.totalorder %s40, 0
      %p125 = por %p123, %p124
      %p126 = scmp.ne.s32.totalorder %s112, %s113
      %p127 = scmp.eq.s32.totalorder %s41, 5
      %p128 = por %p126, %p127
      %p130 = scmp.ne.s32.totalorder %s113, %s129
      %p131 = scmp.eq.s32.totalorder %s41, 0
      %p132 = por %p130, %p131
      %s134 = sadd.s32 %s133, 1
      %p137 = scmp.eq.s32.totalorder %s35, 5
      %p138 = scmp.ne.s32.totalorder %s133, %s135
      %p139 = scmp.eq.s32.totalorder %s35, 0
      %p140 = por %p138, %p139
      %p141 = scmp.ne.s32.totalorder %s133, %s135
      %p142 = scmp.eq.s32.totalorder %s40, 5
      %p143 = por %p141, %p142
      %p144 = scmp.ne.s32.totalorder %s135, %s136
      %p145 = scmp.eq.s32.totalorder %s40, 0
      %p146 = por %p144, %p145
      %p147 = scmp.ne.s32.totalorder %s135, %s136
      %p148 = scmp.eq.s32.totalorder %s41, 5
      %p149 = por %p147, %p148
      %p151 = scmp.ne.s32.totalorder %s136, %s150
      %p152 = scmp.eq.s32.totalorder %s41, 0
      %p153 = por %p151, %p152
      %s155 = sadd.s32 %s154, 1
      %p158 = scmp.eq.s32.totalorder %s35, 5
      %p159 = scmp.ne.s32.totalorder %s154, %s156
      %p160 = scmp.eq.s32.totalorder %s35, 0
      %p161 = por %p159, %p160
      %p162 = scmp.ne.s32.totalorder %s154, %s156
      %p163 = scmp.eq.s32.totalorder %s40, 5
      %p164 = por %p162, %p163
      %p165 = scmp.ne.s32.totalorder %s156, %s157
      %p166 = scmp.eq.s32.totalorder %s40, 0
      %p167 = por %p165, %p166
      %p168 = scmp.ne.s32.totalorder %s156, %s157
      %p169 = scmp.eq.s32.totalorder %s41, 5
      %p170 = por %p168, %p169
      %p172 = scmp.ne.s32.totalorder %s157, %s171
      %p173 = scmp.eq.s32.totalorder %s41, 0
      %p174 = por %p172, %p173
      %s176 = sadd.s32 %s175, 1
      %p179 = scmp.eq.s32.totalorder %s35, 5
      %p180 = scmp.ne.s32.totalorder %s175, %s177
      %p181 = scmp.eq.s32.totalorder %s35, 0
      %p182 = por %p180, %p181
      %p183 = scmp.ne.s32.totalorder %s175, %s177
      %p184 = scmp.eq.s32.totalorder %s40, 5
      %p185 = por %p183, %p184
      %p186 = scmp.ne.s32.totalorder %s177, %s178
      %p187 = scmp.eq.s32.totalorder %s40, 0
      %p188 = por %p186, %p187
      %p189 = scmp.ne.s32.totalorder %s177, %s178
      %p190 = scmp.eq.s32.totalorder %s41, 5
      %p191 = por %p189, %p190
      %p193 = scmp.ne.s32.totalorder %s178, %s192
      %p194 = scmp.eq.s32.totalorder %s41, 0
      %p195 = por %p193, %p194
      %s197 = sadd.s32 %s196, 1
      %p200 = scmp.eq.s32.totalorder %s35, 5
      %p201 = scmp.ne.s32.totalorder %s196, %s198
      %p202 = scmp.eq.s32.totalorder %s35, 0
      %p203 = por %p201, %p202
      %p204 = scmp.ne.s32.totalorder %s196, %s198
      %p205 = scmp.eq.s32.totalorder %s40, 5
      %p206 = por %p204, %p205
      %p207 = scmp.ne.s32.totalorder %s198, %s199
      %p208 = scmp.eq.s32.totalorder %s40, 0
      %p209 = por %p207, %p208
      %p210 = scmp.ne.s32.totalorder %s198, %s199
      %p211 = scmp.eq.s32.totalorder %s41, 5
      %p212 = por %p210, %p211
      %p214 = scmp.ne.s32.totalorder %s199, %s213
      %p215 = scmp.eq.s32.totalorder %s41, 0
      %p216 = por %p214, %p215
      %s217 = ssub.s32 %s42, %s54
      %p218 = scmp.eq.s32.totalorder %s217, 0
      %s220 = sadd.s32 %s219, 1
      %s221 = scalar_select %p218, %s219, %s220
      %p224 = pneg %p218
      %p225 = scmp.eq.s32.totalorder %s35, 5
      %p226 = por %p224, %p225
      %p227 = scmp.ne.s32.totalorder %s219, %s222
      %p228 = scmp.eq.s32.totalorder %s35, 0
      %p229 = por %p227, %p228
      %p230 = scmp.ne.s32.totalorder %s219, %s222
      %p231 = scmp.eq.s32.totalorder %s40, 5
      %p232 = por %p230, %p231
      %p233 = scmp.ne.s32.totalorder %s222, %s223
      %p234 = scmp.eq.s32.totalorder %s40, 0
      %p235 = por %p233, %p234
      %p236 = scmp.ne.s32.totalorder %s222, %s223
      %p237 = scmp.eq.s32.totalorder %s41, 5
      %p238 = por %p236, %p237
      %p240 = scmp.ne.s32.totalorder %s223, %s239
      %p241 = scmp.eq.s32.totalorder %s41, 0
      %p242 = por %p240, %p241
      %s243 = ssub.s32 %s42, %s54
      %p244 = scmp.eq.s32.totalorder %s243, 0
      %s246 = sadd.s32 %s245, 1
      %s247 = scalar_select %p244, %s245, %s246
      %p250 = pneg %p244
      %p251 = scmp.eq.s32.totalorder %s35, 5
      %p252 = por %p250, %p251
      %p253 = scmp.ne.s32.totalorder %s245, %s248
      %p254 = scmp.eq.s32.totalorder %s35, 0
      %p255 = por %p253, %p254
      %p256 = scmp.ne.s32.totalorder %s245, %s248
      %p257 = scmp.eq.s32.totalorder %s40, 5
      %p258 = por %p256, %p257
      %p259 = scmp.ne.s32.totalorder %s248, %s249
      %p260 = scmp.eq.s32.totalorder %s40, 0
      %p261 = por %p259, %p260
      %p262 = scmp.ne.s32.totalorder %s248, %s249
      %p263 = scmp.eq.s32.totalorder %s41, 5
      %p264 = por %p262, %p263
      %p266 = scmp.ne.s32.totalorder %s249, %s265
      %p267 = scmp.eq.s32.totalorder %s41, 0
      %p268 = por %p266, %p267
      %s269 = ssub.s32 %s42, %s54
      %p270 = scmp.eq.s32.totalorder %s269, 0
      %s272 = sadd.s32 %s271, 1
      %s273 = scalar_select %p270, %s271, %s272
      %p276 = pneg %p270
      %p277 = scmp.eq.s32.totalorder %s35, 5
      %p278 = por %p276, %p277
      %p279 = scmp.ne.s32.totalorder %s271, %s274
      %p280 = scmp.eq.s32.totalorder %s35, 0
      %p281 = por %p279, %p280
      %p282 = scmp.ne.s32.totalorder %s271, %s274
      %p283 = scmp.eq.s32.totalorder %s40, 5
      %p284 = por %p282, %p283
      %p285 = scmp.ne.s32.totalorder %s274, %s275
      %p286 = scmp.eq.s32.totalorder %s40, 0
      %p287 = por %p285, %p286
      %p288 = scmp.ne.s32.totalorder %s274, %s275
      %p289 = scmp.eq.s32.totalorder %s41, 5
      %p290 = por %p288, %p289
      %p292 = scmp.ne.s32.totalorder %s275, %s291
      %p293 = scmp.eq.s32.totalorder %s41, 0
      %p294 = por %p292, %p293
      %s295 = ssub.s32 %s42, %s54
      %p296 = scmp.eq.s32.totalorder %s295, 0
      %s298 = sadd.s32 %s297, 1
      %s299 = scalar_select %p296, %s297, %s298
      %p302 = pneg %p296
      %p303 = scmp.eq.s32.totalorder %s35, 5
      %p304 = por %p302, %p303
      %p305 = scmp.ne.s32.totalorder %s297, %s300
      %p306 = scmp.eq.s32.totalorder %s35, 0
      %p307 = por %p305, %p306
      %p308 = scmp.ne.s32.totalorder %s297, %s300
      %p309 = scmp.eq.s32.totalorder %s40, 5
      %p310 = por %p308, %p309
      %p311 = scmp.ne.s32.totalorder %s300, %s301
      %p312 = scmp.eq.s32.totalorder %s40, 0
      %p313 = por %p311, %p312
      %p314 = scmp.ne.s32.totalorder %s300, %s301
      %p315 = scmp.eq.s32.totalorder %s41, 5
      %p316 = por %p314, %p315
      %p318 = scmp.ne.s32.totalorder %s301, %s317
      %p319 = scmp.eq.s32.totalorder %s41, 0
      %p320 = por %p318, %p319
      %s321 = ssub.s32 %s42, %s54
      %p322 = scmp.eq.s32.totalorder %s321, 0
      %s324 = sadd.s32 %s323, 1
      %s325 = scalar_select %p322, %s323, %s324
      %p328 = pneg %p322
      %p329 = scmp.eq.s32.totalorder %s35, 5
      %p330 = por %p328, %p329
      %p331 = scmp.ne.s32.totalorder %s323, %s326
      %p332 = scmp.eq.s32.totalorder %s35, 0
      %p333 = por %p331, %p332
      %p334 = scmp.ne.s32.totalorder %s323, %s326
      %p335 = scmp.eq.s32.totalorder %s40, 5
      %p336 = por %p334, %p335
      %p337 = scmp.ne.s32.totalorder %s326, %s327
      %p338 = scmp.eq.s32.totalorder %s40, 0
      %p339 = por %p337, %p338
      %p340 = scmp.ne.s32.totalorder %s326, %s327
      %p341 = scmp.eq.s32.totalorder %s41, 5
      %p342 = por %p340, %p341
      %p344 = scmp.ne.s32.totalorder %s327, %s343
      %p345 = scmp.eq.s32.totalorder %s41, 0
      %p346 = por %p344, %p345
      %s347 = ssub.s32 %s42, %s54
      %p348 = scmp.eq.s32.totalorder %s347, 0
      %s350 = sadd.s32 %s349, 1
      %s351 = scalar_select %p348, %s349, %s350
      %p354 = pneg %p348
      %p355 = scmp.eq.s32.totalorder %s35, 5
      %p356 = por %p354, %p355
      %p357 = scmp.ne.s32.totalorder %s349, %s352
      %p358 = scmp.eq.s32.totalorder %s35, 0
      %p359 = por %p357, %p358
      %p360 = scmp.ne.s32.totalorder %s349, %s352
      %p361 = scmp.eq.s32.totalorder %s40, 5
      %p362 = por %p360, %p361
      %p363 = scmp.ne.s32.totalorder %s352, %s353
      %p364 = scmp.eq.s32.totalorder %s40, 0
      %p365 = por %p363, %p364
      %p366 = scmp.ne.s32.totalorder %s352, %s353
      %p367 = scmp.eq.s32.totalorder %s41, 5
      %p368 = por %p366, %p367
      %p370 = scmp.ne.s32.totalorder %s353, %s369
      %p371 = scmp.eq.s32.totalorder %s41, 0
      %p372 = por %p370, %p371
      %s373 = ssub.s32 %s42, %s54
      %p374 = scmp.eq.s32.totalorder %s373, 0
      %s376 = sadd.s32 %s375, 1
      %s377 = scalar_select %p374, %s375, %s376
      %p380 = pneg %p374
      %p381 = scmp.eq.s32.totalorder %s35, 5
      %p382 = por %p380, %p381
      %p383 = scmp.ne.s32.totalorder %s375, %s378
      %p384 = scmp.eq.s32.totalorder %s35, 0
      %p385 = por %p383, %p384
      %p386 = scmp.ne.s32.totalorder %s375, %s378
      %p387 = scmp.eq.s32.totalorder %s40, 5
      %p388 = por %p386, %p387
      %p389 = scmp.ne.s32.totalorder %s378, %s379
      %p390 = scmp.eq.s32.totalorder %s40, 0
      %p391 = por %p389, %p390
      %p392 = scmp.ne.s32.totalorder %s378, %s379
      %p393 = scmp.eq.s32.totalorder %s41, 5
      %p394 = por %p392, %p393
      %p396 = scmp.ne.s32.totalorder %s379, %s395
      %p397 = scmp.eq.s32.totalorder %s41, 0
      %p398 = por %p396, %p397
      %s399 = ssub.s32 %s42, %s54
      %p400 = scmp.eq.s32.totalorder %s399, 0
      %s402 = sadd.s32 %s401, 1
      %s403 = scalar_select %p400, %s401, %s402
      %p406 = pneg %p400
      %p407 = scmp.eq.s32.totalorder %s35, 5
      %p408 = por %p406, %p407
      %p409 = scmp.ne.s32.totalorder %s401, %s404
      %p410 = scmp.eq.s32.totalorder %s35, 0
      %p411 = por %p409, %p410
      %p412 = scmp.ne.s32.totalorder %s401, %s404
      %p413 = scmp.eq.s32.totalorder %s40, 5
      %p414 = por %p412, %p413
      %p415 = scmp.ne.s32.totalorder %s404, %s405
      %p416 = scmp.eq.s32.totalorder %s40, 0
      %p417 = por %p415, %p416
      %p418 = scmp.ne.s32.totalorder %s404, %s405
      %p419 = scmp.eq.s32.totalorder %s41, 5
      %p420 = por %p418, %p419
      %p422 = scmp.ne.s32.totalorder %s405, %s421
      %p423 = scmp.eq.s32.totalorder %s41, 0
      %p424 = por %p422, %p423
      %s425 = ssub.s32 %s42, %s54
      %p426 = scmp.eq.s32.totalorder %s425, 0
      %s428 = sadd.s32 %s427, 1
      %s429 = scalar_select %p426, %s427, %s428
      %p432 = pneg %p426
      %p433 = scmp.eq.s32.totalorder %s35, 5
      %p434 = por %p432, %p433
      %p435 = scmp.ne.s32.totalorder %s427, %s430
      %p436 = scmp.eq.s32.totalorder %s35, 0
      %p437 = por %p435, %p436
      %p438 = scmp.ne.s32.totalorder %s427, %s430
      %p439 = scmp.eq.s32.totalorder %s40, 5
      %p440 = por %p438, %p439
      %p441 = scmp.ne.s32.totalorder %s430, %s431
      %p442 = scmp.eq.s32.totalorder %s40, 0
      %p443 = por %p441, %p442
      %p444 = scmp.ne.s32.totalorder %s430, %s431
      %p445 = scmp.eq.s32.totalorder %s41, 5
      %p446 = por %p444, %p445
      %p448 = scmp.ne.s32.totalorder %s431, %s447
      %p449 = scmp.eq.s32.totalorder %s41, 0
      %p450 = por %p448, %p449
      %s451 = ssub.s32 %s42, %s54
      %p452 = scmp.eq.s32.totalorder %s451, 0
      %s454 = sadd.s32 %s453, 1
      %s455 = scalar_select %p452, %s453, %s454
      %p458 = pneg %p452
      %p459 = scmp.eq.s32.totalorder %s35, 5
      %p460 = por %p458, %p459
      %p461 = scmp.ne.s32.totalorder %s453, %s456
      %p462 = scmp.eq.s32.totalorder %s35, 0
      %p463 = por %p461, %p462
      %p464 = scmp.ne.s32.totalorder %s453, %s456
      %p465 = scmp.eq.s32.totalorder %s40, 5
      %p466 = por %p464, %p465
      %p467 = scmp.ne.s32.totalorder %s456, %s457
      %p468 = scmp.eq.s32.totalorder %s40, 0
      %p469 = por %p467, %p468
      %p470 = scmp.ne.s32.totalorder %s456, %s457
      %p471 = scmp.eq.s32.totalorder %s41, 5
      %p472 = por %p470, %p471
      %p474 = scmp.ne.s32.totalorder %s457, %s473
      %p475 = scmp.eq.s32.totalorder %s41, 0
      %p476 = por %p474, %p475
      %s477 = ssub.s32 %s42, %s54
      %p478 = scmp.eq.s32.totalorder %s477, 0
      %s480 = sadd.s32 %s479, 1
      %s481 = scalar_select %p478, %s479, %s480
      %p484 = pneg %p478
      %p485 = scmp.eq.s32.totalorder %s35, 5
      %p486 = por %p484, %p485
      %p487 = scmp.ne.s32.totalorder %s479, %s482
      %p488 = scmp.eq.s32.totalorder %s35, 0
      %p489 = por %p487, %p488
      %p490 = scmp.ne.s32.totalorder %s479, %s482
      %p491 = scmp.eq.s32.totalorder %s40, 5
      %p492 = por %p490, %p491
      %p493 = scmp.ne.s32.totalorder %s482, %s483
      %p494 = scmp.eq.s32.totalorder %s40, 0
      %p495 = por %p493, %p494
      %p496 = scmp.ne.s32.totalorder %s482, %s483
      %p497 = scmp.eq.s32.totalorder %s41, 5
      %p498 = por %p496, %p497
      %p500 = scmp.ne.s32.totalorder %s483, %s499
      %p501 = scmp.eq.s32.totalorder %s41, 0
      %p502 = por %p500, %p501
      %s503 = ssub.s32 %s42, %s54
      %p504 = scmp.eq.s32.totalorder %s503, 0
      %s506 = sadd.s32 %s505, 1
      %s507 = scalar_select %p504, %s505, %s506
      %p510 = pneg %p504
      %p511 = scmp.eq.s32.totalorder %s35, 5
      %p512 = por %p510, %p511
      %p513 = scmp.ne.s32.totalorder %s505, %s508
      %p514 = scmp.eq.s32.totalorder %s35, 0
      %p515 = por %p513, %p514
      %p516 = scmp.ne.s32.totalorder %s505, %s508
      %p517 = scmp.eq.s32.totalorder %s40, 5
      %p518 = por %p516, %p517
      %p519 = scmp.ne.s32.totalorder %s508, %s509
      %p520 = scmp.eq.s32.totalorder %s40, 0
      %p521 = por %p519, %p520
      %p522 = scmp.ne.s32.totalorder %s508, %s509
      %p523 = scmp.eq.s32.totalorder %s41, 5
      %p524 = por %p522, %p523
      %p526 = scmp.ne.s32.totalorder %s509, %s525
      %p527 = scmp.eq.s32.totalorder %s41, 0
      %p528 = por %p526, %p527
      %s530 = sadd.s32 %s529, 1
      %p533 = scmp.eq.s32.totalorder %s35, 5
      %p534 = scmp.ne.s32.totalorder %s529, %s531
      %p535 = scmp.eq.s32.totalorder %s35, 0
      %p536 = por %p534, %p535
      %p537 = scmp.ne.s32.totalorder %s529, %s531
      %p538 = scmp.eq.s32.totalorder %s40, 5
      %p539 = por %p537, %p538
      %p540 = scmp.ne.s32.totalorder %s531, %s532
      %p541 = scmp.eq.s32.totalorder %s40, 0
      %p542 = por %p540, %p541
      %p543 = scmp.ne.s32.totalorder %s531, %s532
      %p544 = scmp.eq.s32.totalorder %s41, 5
      %p545 = por %p543, %p544
      %p547 = scmp.ne.s32.totalorder %s532, %s546
      %p548 = scmp.eq.s32.totalorder %s41, 0
      %p549 = por %p547, %p548
      %s551 = sadd.s32 %s550, 1
      %p554 = scmp.eq.s32.totalorder %s35, 5
      %p555 = scmp.ne.s32.totalorder %s550, %s552
      %p556 = scmp.eq.s32.totalorder %s35, 0
      %p557 = por %p555, %p556
      %p558 = scmp.ne.s32.totalorder %s550, %s552
      %p559 = scmp.eq.s32.totalorder %s40, 5
      %p560 = por %p558, %p559
      %p561 = scmp.ne.s32.totalorder %s552, %s553
      %p562 = scmp.eq.s32.totalorder %s40, 0
      %p563 = por %p561, %p562
      %p564 = scmp.ne.s32.totalorder %s552, %s553
      %p565 = scmp.eq.s32.totalorder %s41, 5
      %p566 = por %p564, %p565
      %p568 = scmp.ne.s32.totalorder %s553, %s567
      %p569 = scmp.eq.s32.totalorder %s41, 0
      %p570 = por %p568, %p569
      %s572 = sadd.s32 %s571, 1
      %p575 = scmp.eq.s32.totalorder %s35, 5
      %p576 = scmp.ne.s32.totalorder %s571, %s573
      %p577 = scmp.eq.s32.totalorder %s35, 0
      %p578 = por %p576, %p577
      %p579 = scmp.ne.s32.totalorder %s571, %s573
      %p580 = scmp.eq.s32.totalorder %s40, 5
      %p581 = por %p579, %p580
      %p582 = scmp.ne.s32.totalorder %s573, %s574
      %p583 = scmp.eq.s32.totalorder %s40, 0
      %p584 = por %p582, %p583
      %p585 = scmp.ne.s32.totalorder %s573, %s574
      %p586 = scmp.eq.s32.totalorder %s41, 5
      %p587 = por %p585, %p586
      %p589 = scmp.ne.s32.totalorder %s574, %s588
      %p590 = scmp.eq.s32.totalorder %s41, 0
      %p591 = por %p589, %p590
      %s593 = sadd.s32 %s592, 1
      %p596 = scmp.eq.s32.totalorder %s35, 5
      %p597 = scmp.ne.s32.totalorder %s592, %s594
      %p598 = scmp.eq.s32.totalorder %s35, 0
      %p599 = por %p597, %p598
      %p600 = scmp.ne.s32.totalorder %s592, %s594
      %p601 = scmp.eq.s32.totalorder %s40, 5
      %p602 = por %p600, %p601
      %p603 = scmp.ne.s32.totalorder %s594, %s595
      %p604 = scmp.eq.s32.totalorder %s40, 0
      %p605 = por %p603, %p604
      %p606 = scmp.ne.s32.totalorder %s594, %s595
      %p607 = scmp.eq.s32.totalorder %s41, 5
      %p608 = por %p606, %p607
      %p610 = scmp.ne.s32.totalorder %s595, %s609
      %p611 = scmp.eq.s32.totalorder %s41, 0
      %p612 = por %p610, %p611
      %s614 = sadd.s32 %s613, 1
      %p617 = scmp.eq.s32.totalorder %s35, 5
      %p618 = scmp.ne.s32.totalorder %s613, %s615
      %p619 = scmp.eq.s32.totalorder %s35, 0
      %p620 = por %p618, %p619
      %p621 = scmp.ne.s32.totalorder %s613, %s615
      %p622 = scmp.eq.s32.totalorder %s40, 5
      %p623 = por %p621, %p622
      %p624 = scmp.ne.s32.totalorder %s615, %s616
      %p625 = scmp.eq.s32.totalorder %s40, 0
      %p626 = por %p624, %p625
      %p627 = scmp.ne.s32.totalorder %s615, %s616
      %p628 = scmp.eq.s32.totalorder %s41, 5
      %p629 = por %p627, %p628
      %p631 = scmp.ne.s32.totalorder %s616, %s630
      %p632 = scmp.eq.s32.totalorder %s41, 0
      %p633 = por %p631, %p632
      %s635 = sadd.s32 %s634, 1
      %p638 = scmp.eq.s32.totalorder %s35, 5
      %p639 = scmp.ne.s32.totalorder %s634, %s636
      %p640 = scmp.eq.s32.totalorder %s35, 0
      %p641 = por %p639, %p640
      %p642 = scmp.ne.s32.totalorder %s634, %s636
      %p643 = scmp.eq.s32.totalorder %s40, 5
      %p644 = por %p642, %p643
      %p645 = scmp.ne.s32.totalorder %s636, %s637
      %p646 = scmp.eq.s32.totalorder %s40, 0
      %p647 = por %p645, %p646
      %p648 = scmp.ne.s32.totalorder %s636, %s637
      %p649 = scmp.eq.s32.totalorder %s41, 5
      %p650 = por %p648, %p649
      %p652 = scmp.ne.s32.totalorder %s637, %s651
      %p653 = scmp.eq.s32.totalorder %s41, 0
      %p654 = por %p652, %p653
      %s656 = sadd.s32 %s655, 1
      %p659 = scmp.eq.s32.totalorder %s35, 5
      %p660 = scmp.ne.s32.totalorder %s655, %s657
      %p661 = scmp.eq.s32.totalorder %s35, 0
      %p662 = por %p660, %p661
      %p663 = scmp.ne.s32.totalorder %s655, %s657
      %p664 = scmp.eq.s32.totalorder %s40, 5
      %p665 = por %p663, %p664
      %p666 = scmp.ne.s32.totalorder %s657, %s658
      %p667 = scmp.eq.s32.totalorder %s40, 0
      %p668 = por %p666, %p667
      %p669 = scmp.ne.s32.totalorder %s657, %s658
      %p670 = scmp.eq.s32.totalorder %s41, 5
      %p671 = por %p669, %p670
      %p673 = scmp.ne.s32.totalorder %s658, %s672
      %p674 = scmp.eq.s32.totalorder %s41, 0
      %p675 = por %p673, %p674
      %s677 = sadd.s32 %s676, 1
      %p680 = scmp.eq.s32.totalorder %s35, 5
      %p681 = scmp.ne.s32.totalorder %s676, %s678
      %p682 = scmp.eq.s32.totalorder %s35, 0
      %p683 = por %p681, %p682
      %p684 = scmp.ne.s32.totalorder %s676, %s678
      %p685 = scmp.eq.s32.totalorder %s40, 5
      %p686 = por %p684, %p685
      %p687 = scmp.ne.s32.totalorder %s678, %s679
      %p688 = scmp.eq.s32.totalorder %s40, 0
      %p689 = por %p687, %p688
      %p690 = scmp.ne.s32.totalorder %s678, %s679
      %p691 = scmp.eq.s32.totalorder %s41, 5
      %p692 = por %p690, %p691
      %p694 = scmp.ne.s32.totalorder %s679, %s693
      %p695 = scmp.eq.s32.totalorder %s41, 0
      %p696 = por %p694, %p695
      %s698 = sadd.s32 %s697, 1
      %p701 = scmp.eq.s32.totalorder %s35, 5
      %p702 = scmp.ne.s32.totalorder %s697, %s699
      %p703 = scmp.eq.s32.totalorder %s35, 0
      %p704 = por %p702, %p703
      %p705 = scmp.ne.s32.totalorder %s697, %s699
      %p706 = scmp.eq.s32.totalorder %s40, 5
      %p707 = por %p705, %p706
      %p708 = scmp.ne.s32.totalorder %s699, %s700
      %p709 = scmp.eq.s32.totalorder %s40, 0
      %p710 = por %p708, %p709
      %p711 = scmp.ne.s32.totalorder %s699, %s700
      %p712 = scmp.eq.s32.totalorder %s41, 5
      %p713 = por %p711, %p712
      %p715 = scmp.ne.s32.totalorder %s700, %s714
      %p716 = scmp.eq.s32.totalorder %s41, 0
      %p717 = por %p715, %p716
      %p718 = scmp.le.s32.totalorder 1, %s35
      %p719 = scmp.lt.s32.totalorder %s35, 7
      %p720 = pnand %p718, %p719
      %p721 = pneg %p720
      // Predicated region
      $region9: #{equivariant_block_forward.1} parent=5 // pred_check
        _
      $region10: #{equivariant_block_forward.1} parent=5 // pred_check_branch
        %723 = sbr.rel (%p720) target = $region12
      $region11: #{equivariant_block_forward.1} parent=5 // pred_region
        %s724 = ssub.s32 %s35, 1
        // Predicated region
        $region13: #{equivariant_block_forward.1} parent=11 // pred_check
          %p725 = pneg %p146
        $region14: #{equivariant_block_forward.1} parent=11 // pred_check_branch
          %727 = sbr.rel (%p725) target = $region16
        $region15: #{equivariant_block_forward.1} parent=11 // pred_region
          _
        $region16: #{equivariant_block_forward.1} parent=11 // pred_fallthru
          _
        // Predicated region
        $region17: #{equivariant_block_forward.1} parent=11 // pred_check
          %p728 = pneg %p167
        $region18: #{equivariant_block_forward.1} parent=11 // pred_check_branch
          %730 = sbr.rel (%p728) target = $region20
        $region19: #{equivariant_block_forward.1} parent=11 // pred_region
          _
        $region20: #{equivariant_block_forward.1} parent=11 // pred_fallthru
          _
        // Predicated region
        $region21: #{equivariant_block_forward.1} parent=11 // pred_check
          %p731 = pneg %p188
        $region22: #{equivariant_block_forward.1} parent=11 // pred_check_branch
          %733 = sbr.rel (%p731) target = $region24
        $region23: #{equivariant_block_forward.1} parent=11 // pred_region
          _
        $region24: #{equivariant_block_forward.1} parent=11 // pred_fallthru
          _
        // Predicated region
        $region25: #{equivariant_block_forward.1} parent=11 // pred_check
          %p734 = pneg %p209
        $region26: #{equivariant_block_forward.1} parent=11 // pred_check_branch
          %736 = sbr.rel (%p734) target = $region28
        $region27: #{equivariant_block_forward.1} parent=11 // pred_region
          _
        $region28: #{equivariant_block_forward.1} parent=11 // pred_fallthru
          _
        // Predicated region
        $region29: #{equivariant_block_forward.1} parent=11 // pred_check
          %p737 = pneg %p542
        $region30: #{equivariant_block_forward.1} parent=11 // pred_check_branch
          %739 = sbr.rel (%p737) target = $region32
        $region31: #{equivariant_block_forward.1} parent=11 // pred_region
          _
        $region32: #{equivariant_block_forward.1} parent=11 // pred_fallthru
          _
        // Predicated region
        $region33: #{equivariant_block_forward.1} parent=11 // pred_check
          %p740 = pneg %p563
        $region34: #{equivariant_block_forward.1} parent=11 // pred_check_branch
          %742 = sbr.rel (%p740) target = $region36
        $region35: #{equivariant_block_forward.1} parent=11 // pred_region
          _
        $region36: #{equivariant_block_forward.1} parent=11 // pred_fallthru
          _
        // Predicated region
        $region37: #{equivariant_block_forward.1} parent=11 // pred_check
          %p743 = pneg %p584
        $region38: #{equivariant_block_forward.1} parent=11 // pred_check_branch
          %745 = sbr.rel (%p743) target = $region40
        $region39: #{equivariant_block_forward.1} parent=11 // pred_region
          _
        $region40: #{equivariant_block_forward.1} parent=11 // pred_fallthru
          _
        // Predicated region
        $region41: #{equivariant_block_forward.1} parent=11 // pred_check
          %p746 = pneg %p605
        $region42: #{equivariant_block_forward.1} parent=11 // pred_check_branch
          %748 = sbr.rel (%p746) target = $region44
        $region43: #{equivariant_block_forward.1} parent=11 // pred_region
          _
        $region44: #{equivariant_block_forward.1} parent=11 // pred_fallthru
          _
        // Predicated region
        $region45: #{equivariant_block_forward.1} parent=11 // pred_check
          %p749 = pneg %p626
        $region46: #{equivariant_block_forward.1} parent=11 // pred_check_branch
          %751 = sbr.rel (%p749) target = $region48
        $region47: #{equivariant_block_forward.1} parent=11 // pred_region
          _
        $region48: #{equivariant_block_forward.1} parent=11 // pred_fallthru
          _
        // Predicated region
        $region49: #{equivariant_block_forward.1} parent=11 // pred_check
          %p752 = pneg %p647
        $region50: #{equivariant_block_forward.1} parent=11 // pred_check_branch
          %754 = sbr.rel (%p752) target = $region52
        $region51: #{equivariant_block_forward.1} parent=11 // pred_region
          _
        $region52: #{equivariant_block_forward.1} parent=11 // pred_fallthru
          _
        // Predicated region
        $region53: #{equivariant_block_forward.1} parent=11 // pred_check
          %p755 = pneg %p668
        $region54: #{equivariant_block_forward.1} parent=11 // pred_check_branch
          %757 = sbr.rel (%p755) target = $region56
        $region55: #{equivariant_block_forward.1} parent=11 // pred_region
          _
        $region56: #{equivariant_block_forward.1} parent=11 // pred_fallthru
          _
      $region12: #{equivariant_block_forward.1} parent=5 // pred_fallthru
        _
      %p758 = scmp.lt.s32.totalorder %s35, 6
      // Predicated region
      $region57: #{equivariant_block_forward.1} parent=5 // pred_check
        %p759 = pneg %p758
      $region58: #{equivariant_block_forward.1} parent=5 // pred_check_branch
        %761 = sbr.rel (%p759) target = $region60
      $region59: #{equivariant_block_forward.1} parent=5 // pred_region
        // Predicated region
        $region61: #{equivariant_block_forward.1} parent=59 // pred_check
          %p762 = pneg %p67
        $region62: #{equivariant_block_forward.1} parent=59 // pred_check_branch
          %764 = sbr.rel (%p762) target = $region64
        $region63: #{equivariant_block_forward.1} parent=59 // pred_region
          %s765 = smul.u32 16, %s43
          %p766 = scmp.lt.s32.totalorder %s765, 31
          %s767 = scalar_select %p766, %s765, 31
          %s768 = smul.addr %s767, 8
          %s769 = scalar_lea.vmem %s0, %s768
          %s770 = smul.u32 16, %s43
        $region64: #{equivariant_block_forward.1} parent=59 // pred_fallthru
          _
        // Predicated region
        $region65: #{equivariant_block_forward.1} parent=59 // pred_check
          %p771 = pneg %p93
        $region66: #{equivariant_block_forward.1} parent=59 // pred_check_branch
          %773 = sbr.rel (%p771) target = $region68
        $region67: #{equivariant_block_forward.1} parent=59 // pred_region
          %p774 = scmp.lt.s32.totalorder %s43, 1
          %s775 = scalar_select %p774, %s43, 1
          %s776 = scalar_lea.vmem %s1, %s775
        $region68: #{equivariant_block_forward.1} parent=59 // pred_fallthru
          _
        // Predicated region
        $region69: #{equivariant_block_forward.1} parent=59 // pred_check
          %p777 = pneg %p119
        $region70: #{equivariant_block_forward.1} parent=59 // pred_check_branch
          %779 = sbr.rel (%p777) target = $region72
        $region71: #{equivariant_block_forward.1} parent=59 // pred_region
          %s780 = smul.u32 16, %s43
          %p781 = scmp.lt.s32.totalorder %s780, 31
          %s782 = scalar_select %p781, %s780, 31
          %s783 = smul.addr %s782, 8
          %s784 = scalar_lea.vmem %s2, %s783
          %s785 = smul.u32 16, %s43
        $region72: #{equivariant_block_forward.1} parent=59 // pred_fallthru
          _
        // Predicated region
        $region73: #{equivariant_block_forward.1} parent=59 // pred_check
          %p786 = pneg %p229
        $region74: #{equivariant_block_forward.1} parent=59 // pred_check_branch
          %788 = sbr.rel (%p786) target = $region76
        $region75: #{equivariant_block_forward.1} parent=59 // pred_region
          %p789 = scmp.lt.s32.totalorder %s42, 2
          %s790 = scalar_select %p789, %s42, 2
          %s791 = smul.addr %s790, 4
          %s792 = smul.addr %s791, 8
          %s793 = scalar_lea.vmem %s7, %s792
        $region76: #{equivariant_block_forward.1} parent=59 // pred_fallthru
          _
        // Predicated region
        $region77: #{equivariant_block_forward.1} parent=59 // pred_check
          %p794 = pneg %p255
        $region78: #{equivariant_block_forward.1} parent=59 // pred_check_branch
          %796 = sbr.rel (%p794) target = $region80
        $region79: #{equivariant_block_forward.1} parent=59 // pred_region
          %p797 = scmp.lt.s32.totalorder %s42, 2
          %s798 = scalar_select %p797, %s42, 2
          %s799 = smul.addr %s798, 4
          %s800 = smul.addr %s799, 8
          %s801 = scalar_lea.vmem %s8, %s800
        $region80: #{equivariant_block_forward.1} parent=59 // pred_fallthru
          _
        // Predicated region
        $region81: #{equivariant_block_forward.1} parent=59 // pred_check
          %p802 = pneg %p281
        $region82: #{equivariant_block_forward.1} parent=59 // pred_check_branch
          %804 = sbr.rel (%p802) target = $region84
        $region83: #{equivariant_block_forward.1} parent=59 // pred_region
          %p805 = scmp.lt.s32.totalorder %s42, 2
          %s806 = scalar_select %p805, %s42, 2
          %s807 = smul.addr %s806, 2
          %s808 = scalar_lea.vmem %s9, %s807
        $region84: #{equivariant_block_forward.1} parent=59 // pred_fallthru
          _
        // Predicated region
        $region85: #{equivariant_block_forward.1} parent=59 // pred_check
          %p809 = pneg %p307
        $region86: #{equivariant_block_forward.1} parent=59 // pred_check_branch
          %811 = sbr.rel (%p809) target = $region88
        $region87: #{equivariant_block_forward.1} parent=59 // pred_region
          %p812 = scmp.lt.s32.totalorder %s42, 2
          %s813 = scalar_select %p812, %s42, 2
          %s814 = scalar_lea.vmem %s10, %s813
        $region88: #{equivariant_block_forward.1} parent=59 // pred_fallthru
          _
        // Predicated region
        $region89: #{equivariant_block_forward.1} parent=59 // pred_check
          %p815 = pneg %p333
        $region90: #{equivariant_block_forward.1} parent=59 // pred_check_branch
          %817 = sbr.rel (%p815) target = $region92
        $region91: #{equivariant_block_forward.1} parent=59 // pred_region
          %p818 = scmp.lt.s32.totalorder %s42, 2
          %s819 = scalar_select %p818, %s42, 2
          %s820 = smul.addr %s819, 4
          %s821 = smul.addr %s820, 8
          %s822 = scalar_lea.vmem %s11, %s821
        $region92: #{equivariant_block_forward.1} parent=59 // pred_fallthru
          _
        // Predicated region
        $region93: #{equivariant_block_forward.1} parent=59 // pred_check
          %p823 = pneg %p359
        $region94: #{equivariant_block_forward.1} parent=59 // pred_check_branch
          %825 = sbr.rel (%p823) target = $region96
        $region95: #{equivariant_block_forward.1} parent=59 // pred_region
          %p826 = scmp.lt.s32.totalorder %s42, 2
          %s827 = scalar_select %p826, %s42, 2
          %s828 = scalar_lea.vmem %s12, %s827
        $region96: #{equivariant_block_forward.1} parent=59 // pred_fallthru
          _
        // Predicated region
        $region97: #{equivariant_block_forward.1} parent=59 // pred_check
          %p829 = pneg %p385
        $region98: #{equivariant_block_forward.1} parent=59 // pred_check_branch
          %831 = sbr.rel (%p829) target = $region100
        $region99: #{equivariant_block_forward.1} parent=59 // pred_region
          %p832 = scmp.lt.s32.totalorder %s42, 2
          %s833 = scalar_select %p832, %s42, 2
          %s834 = scalar_lea.vmem %s13, %s833
        $region100: #{equivariant_block_forward.1} parent=59 // pred_fallthru
          _
        // Predicated region
        $region101: #{equivariant_block_forward.1} parent=59 // pred_check
          %p835 = pneg %p411
        $region102: #{equivariant_block_forward.1} parent=59 // pred_check_branch
          %837 = sbr.rel (%p835) target = $region104
        $region103: #{equivariant_block_forward.1} parent=59 // pred_region
          %p838 = scmp.lt.s32.totalorder %s42, 2
          %s839 = scalar_select %p838, %s42, 2
          %s840 = scalar_lea.vmem %s14, %s839
        $region104: #{equivariant_block_forward.1} parent=59 // pred_fallthru
          _
        // Predicated region
        $region105: #{equivariant_block_forward.1} parent=59 // pred_check
          %p841 = pneg %p437
        $region106: #{equivariant_block_forward.1} parent=59 // pred_check_branch
          %843 = sbr.rel (%p841) target = $region108
        $region107: #{equivariant_block_forward.1} parent=59 // pred_region
          %p844 = scmp.lt.s32.totalorder %s42, 2
          %s845 = scalar_select %p844, %s42, 2
          %s846 = smul.addr %s845, 8
          %s847 = smul.addr %s846, 8
          %s848 = scalar_lea.vmem %s15, %s847
        $region108: #{equivariant_block_forward.1} parent=59 // pred_fallthru
          _
        // Predicated region
        $region109: #{equivariant_block_forward.1} parent=59 // pred_check
          %p849 = pneg %p463
        $region110: #{equivariant_block_forward.1} parent=59 // pred_check_branch
          %851 = sbr.rel (%p849) target = $region112
        $region111: #{equivariant_block_forward.1} parent=59 // pred_region
          %p852 = scmp.lt.s32.totalorder %s42, 2
          %s853 = scalar_select %p852, %s42, 2
          %s854 = scalar_lea.vmem %s16, %s853
        $region112: #{equivariant_block_forward.1} parent=59 // pred_fallthru
          _
        // Predicated region
        $region113: #{equivariant_block_forward.1} parent=59 // pred_check
          %p855 = pneg %p489
        $region114: #{equivariant_block_forward.1} parent=59 // pred_check_branch
          %857 = sbr.rel (%p855) target = $region116
        $region115: #{equivariant_block_forward.1} parent=59 // pred_region
          %p858 = scmp.lt.s32.totalorder %s42, 2
          %s859 = scalar_select %p858, %s42, 2
          %s860 = smul.addr %s859, 4
          %s861 = smul.addr %s860, 8
          %s862 = scalar_lea.vmem %s17, %s861
        $region116: #{equivariant_block_forward.1} parent=59 // pred_fallthru
          _
        // Predicated region
        $region117: #{equivariant_block_forward.1} parent=59 // pred_check
          %p863 = pneg %p515
        $region118: #{equivariant_block_forward.1} parent=59 // pred_check_branch
          %865 = sbr.rel (%p863) target = $region120
        $region119: #{equivariant_block_forward.1} parent=59 // pred_region
          %p866 = scmp.lt.s32.totalorder %s42, 2
          %s867 = scalar_select %p866, %s42, 2
          %s868 = scalar_lea.vmem %s18, %s867
        $region120: #{equivariant_block_forward.1} parent=59 // pred_fallthru
          _
      $region60: #{equivariant_block_forward.1} parent=5 // pred_fallthru
        _
      %p869 = scmp.le.s32.totalorder 1, %s35
      %p870 = scmp.lt.s32.totalorder %s35, 7
      %p871 = pnand %p869, %p870
      %p872 = pneg %p871
      // Predicated region
      $region121: #{equivariant_block_forward.1} parent=5 // pred_check
        _
      $region122: #{equivariant_block_forward.1} parent=5 // pred_check_branch
        %874 = sbr.rel (%p871) target = $region124
      $region123: #{equivariant_block_forward.1} parent=5 // pred_region
        %s875 = ssub.s32 %s35, 1
        %s876 = smul.u32 16, %s45
        %p877 = scmp.lt.s32.totalorder %s876, 31
        %s878 = scalar_select %p877, %s876, 31
        %s879 = smul.addr %s878, 8
        %s880 = scalar_lea.vmem %s0, %s879
        %p881 = pneg %p73
        %p882 = pneg %p70
        %p883 = scmp.lt.s32.totalorder %s45, 1
        %s884 = scalar_select %p883, %s45, 1
        %s885 = scalar_lea.vmem %s1, %s884
        %p886 = pneg %p99
        %p887 = pneg %p96
        %s888 = smul.u32 16, %s45
        %p889 = scmp.lt.s32.totalorder %s888, 31
        %s890 = scalar_select %p889, %s888, 31
        %s891 = smul.addr %s890, 8
        %s892 = scalar_lea.vmem %s2, %s891
        %p893 = pneg %p125
        %p894 = pneg %p122
        %p895 = pneg %p146
        %p896 = pneg %p143
        %p897 = pneg %p167
        %p898 = pneg %p164
        %p899 = pneg %p188
        %p900 = pneg %p185
        %p901 = pneg %p209
        %p902 = pneg %p206
        %p903 = scmp.lt.s32.totalorder %s44, 2
        %s904 = scalar_select %p903, %s44, 2
        %s905 = smul.addr %s904, 4
        %s906 = smul.addr %s905, 8
        %s907 = scalar_lea.vmem %s7, %s906
        %p908 = pneg %p235
        %p909 = pneg %p232
        %p910 = scmp.lt.s32.totalorder %s44, 2
        %s911 = scalar_select %p910, %s44, 2
        %s912 = smul.addr %s911, 4
        %s913 = smul.addr %s912, 8
        %s914 = scalar_lea.vmem %s8, %s913
        %p915 = pneg %p261
        %p916 = pneg %p258
        %p917 = scmp.lt.s32.totalorder %s44, 2
        %s918 = scalar_select %p917, %s44, 2
        %s919 = smul.addr %s918, 2
        %s920 = scalar_lea.vmem %s9, %s919
        %p921 = pneg %p287
        %p922 = pneg %p284
        %p923 = scmp.lt.s32.totalorder %s44, 2
        %s924 = scalar_select %p923, %s44, 2
        %s925 = scalar_lea.vmem %s10, %s924
        %p926 = pneg %p313
        %p927 = pneg %p310
        %p928 = scmp.lt.s32.totalorder %s44, 2
        %s929 = scalar_select %p928, %s44, 2
        %s930 = smul.addr %s929, 4
        %s931 = smul.addr %s930, 8
        %s932 = scalar_lea.vmem %s11, %s931
        %p933 = pneg %p339
        %p934 = pneg %p336
        %p935 = scmp.lt.s32.totalorder %s44, 2
        %s936 = scalar_select %p935, %s44, 2
        %s937 = scalar_lea.vmem %s12, %s936
        %p938 = pneg %p365
        %p939 = pneg %p362
        %p940 = scmp.lt.s32.totalorder %s44, 2
        %s941 = scalar_select %p940, %s44, 2
        %s942 = scalar_lea.vmem %s13, %s941
        %p943 = pneg %p391
        %p944 = pneg %p388
        %p945 = scmp.lt.s32.totalorder %s44, 2
        %s946 = scalar_select %p945, %s44, 2
        %s947 = scalar_lea.vmem %s14, %s946
        %p948 = pneg %p417
        %p949 = pneg %p414
        %p950 = scmp.lt.s32.totalorder %s44, 2
        %s951 = scalar_select %p950, %s44, 2
        %s952 = smul.addr %s951, 8
        %s953 = smul.addr %s952, 8
        %s954 = scalar_lea.vmem %s15, %s953
        %p955 = pneg %p443
        %p956 = pneg %p440
        %p957 = scmp.lt.s32.totalorder %s44, 2
        %s958 = scalar_select %p957, %s44, 2
        %s959 = scalar_lea.vmem %s16, %s958
        %p960 = pneg %p469
        %p961 = pneg %p466
        %p962 = scmp.lt.s32.totalorder %s44, 2
        %s963 = scalar_select %p962, %s44, 2
        %s964 = smul.addr %s963, 4
        %s965 = smul.addr %s964, 8
        %s966 = scalar_lea.vmem %s17, %s965
        %p967 = pneg %p495
        %p968 = pneg %p492
        %p969 = scmp.lt.s32.totalorder %s44, 2
        %s970 = scalar_select %p969, %s44, 2
        %s971 = scalar_lea.vmem %s18, %s970
        %p972 = pneg %p521
        %p973 = pneg %p518
        %p974 = pneg %p542
        %p975 = pneg %p539
        %p976 = pneg %p563
        %p977 = pneg %p560
        %p978 = pneg %p584
        %p979 = pneg %p581
        %p980 = pneg %p605
        %p981 = pneg %p602
        %p982 = pneg %p626
        %p983 = pneg %p623
        %p984 = pneg %p647
        %p985 = pneg %p644
        %p986 = pneg %p668
        %p987 = pneg %p665
        %p988 = pneg %p689
        %p989 = pneg %p686
        %p990 = pneg %p710
        %p991 = pneg %p707
        %s992 = smul.u32 16, %s45
        %p993 = scmp.lt.s32.totalorder %s992, 31
        %s994 = scalar_select %p993, %s992, 31
        %s995 = smul.addr %s994, 8
        %s996 = scalar_lea.vmem %s0, %s995
        %s997 = smul.u32 16, %s45
        %p998 = scmp.lt.s32.totalorder %s45, 1
        %s999 = scalar_select %p998, %s45, 1
        %s1000 = scalar_lea.vmem %s1, %s999
        %s1001 = smul.u32 16, %s45
        %p1002 = scmp.lt.s32.totalorder %s1001, 31
        %s1003 = scalar_select %p1002, %s1001, 31
        %s1004 = smul.addr %s1003, 8
        %s1005 = scalar_lea.vmem %s2, %s1004
        %s1006 = smul.u32 16, %s45
        %p1007 = scmp.lt.s32.totalorder %s44, 2
        %s1008 = scalar_select %p1007, %s44, 2
        %s1009 = smul.addr %s1008, 4
        %s1010 = smul.addr %s1009, 8
        %s1011 = scalar_lea.vmem %s7, %s1010
        %p1012 = scmp.lt.s32.totalorder %s44, 2
        %s1013 = scalar_select %p1012, %s44, 2
        %s1014 = smul.addr %s1013, 4
        %s1015 = smul.addr %s1014, 8
        %s1016 = scalar_lea.vmem %s8, %s1015
        %p1017 = scmp.lt.s32.totalorder %s44, 2
        %s1018 = scalar_select %p1017, %s44, 2
        %s1019 = smul.addr %s1018, 2
        %s1020 = scalar_lea.vmem %s9, %s1019
        %p1021 = scmp.lt.s32.totalorder %s44, 2
        %s1022 = scalar_select %p1021, %s44, 2
        %s1023 = scalar_lea.vmem %s10, %s1022
        %p1024 = scmp.lt.s32.totalorder %s44, 2
        %s1025 = scalar_select %p1024, %s44, 2
        %s1026 = smul.addr %s1025, 4
        %s1027 = smul.addr %s1026, 8
        %s1028 = scalar_lea.vmem %s11, %s1027
        %p1029 = scmp.lt.s32.totalorder %s44, 2
        %s1030 = scalar_select %p1029, %s44, 2
        %s1031 = scalar_lea.vmem %s12, %s1030
        %p1032 = scmp.lt.s32.totalorder %s44, 2
        %s1033 = scalar_select %p1032, %s44, 2
        %s1034 = scalar_lea.vmem %s13, %s1033
        %p1035 = scmp.lt.s32.totalorder %s44, 2
        %s1036 = scalar_select %p1035, %s44, 2
        %s1037 = scalar_lea.vmem %s14, %s1036
        %p1038 = scmp.lt.s32.totalorder %s44, 2
        %s1039 = scalar_select %p1038, %s44, 2
        %s1040 = smul.addr %s1039, 8
        %s1041 = smul.addr %s1040, 8
        %s1042 = scalar_lea.vmem %s15, %s1041
        %p1043 = scmp.lt.s32.totalorder %s44, 2
        %s1044 = scalar_select %p1043, %s44, 2
        %s1045 = scalar_lea.vmem %s16, %s1044
        %p1046 = scmp.lt.s32.totalorder %s44, 2
        %s1047 = scalar_select %p1046, %s44, 2
        %s1048 = smul.addr %s1047, 4
        %s1049 = smul.addr %s1048, 8
        %s1050 = scalar_lea.vmem %s17, %s1049
        %p1051 = scmp.lt.s32.totalorder %s44, 2
        %s1052 = scalar_select %p1051, %s44, 2
        %s1053 = scalar_lea.vmem %s18, %s1052
        %p1055 = scmp.lt.s32.totalorder %s44, 2
        %p1056 = scmp.eq.s32.totalorder %s44, 2
        %p1057 = scmp.eq.s32.totalorder %s44, 0
        %p1058 = scmp.eq.s32.totalorder %s45, 0
        %p1059 = pnand %p1057, %p1058
        %p1060 = pneg %p1059
        // Predicated region
        $region125: #{equivariant_block_forward.1} parent=123 // pred_check
          _
        $region126: #{equivariant_block_forward.1} parent=123 // pred_check_branch
          %1062 = sbr.rel (%p1059) target = $region128
        $region127: #{equivariant_block_forward.1} parent=123 // pred_region
          %v1063 = vld [vmem:[%s3] sm:$0xff]
          %v1064 = vld [vmem:[%s3 + $0x8] sm:$0xff]
          %vm1065 = vcmask 261120
          %1066 = vst.msk [vmem:[#allocation2] sm:$0xff] %vm1065, %v1063
          %1067 = vst.msk [vmem:[#allocation2 + $0x8] sm:$0xff] %vm1065, %v1064
        $region128: #{equivariant_block_forward.1} parent=123 // pred_fallthru
          _
        // Predicated region
        $region129: #{equivariant_block_forward.1} parent=123 // pred_check
          %p1068 = pneg %p1058
        $region130: #{equivariant_block_forward.1} parent=123 // pred_check_branch
          %1070 = sbr.rel (%p1068) target = $region132
        $region131: #{equivariant_block_forward.1} parent=123 // pred_region
          %v1071 = vld [vmem:[#allocation2] sm:$0xff]
          %v1072 = vld [vmem:[#allocation2 + $0x8] sm:$0xff]
          // Predicated region
          $region133: #{equivariant_block_forward.1} parent=131 // pred_check
            %p1073 = pneg %p1055
          $region134: #{equivariant_block_forward.1} parent=131 // pred_check_branch
            %1075 = sbr.rel (%p1073) target = $region136
          $region135: #{equivariant_block_forward.1} parent=131 // pred_region
            %vm1076 = vcmask 261120
            %1077 = vst.msk [vmem:[#allocation4] sm:$0xff] %vm1076, 0.0
            %1078 = vst.msk [vmem:[#allocation4 + $0x8] sm:$0xff] %vm1076, 0.0
            %v1079 = vld [vmem:[%s1011] sm:$0xff]
            %v1080 = vld [vmem:[%s1011 + $0x8] sm:$0xff]
            %v1081 = vld [vmem:[%s1011 + $0x10] sm:$0xff]
            %v1082 = vld [vmem:[%s1011 + $0x18] sm:$0xff]
            %v1084 = vsel %vm1076, %v1071, 0
            %v1087 = vsel %vm1076, %v1072, 0
            %1089 = vmatpush.msra.mxu0 0.0
            %1090 = vmatpush.msra.mxu0 0.0
            %1091 = vmatpush.msra.mxu0 0.0
            %1092 = vmatpush.msra.mxu0 0.0
            %1093 = vmatpush.msra.mxu0 0.0
            %1094 = vmatpush.msra.mxu0 0.0
            %1095 = vmatpush.msra.mxu0 0.0
            %1096 = vmatpush.msra.mxu0 0.0
            %1097 = vmatpush.msra.mxu0 0.0
            %1098 = vmatpush.msra.mxu0 0.0
            %1099 = vmatpush.msra.mxu0 0.0
            %1100 = vmatpush.msra.mxu0 0.0
            %1101 = vmatpush.msra.mxu0 %v1082
            %1102 = vmatpush.msra.mxu0 %v1081
            %1103 = vmatpush.msra.mxu0 %v1080
            %1104 = vmatpush.msra.mxu0 %v1079
            %1105 = vmatmul.f32.gmra.mxu0 %v1084
            %v1106 = vpop.f32.mrf.mxu0
            %v1107 = vadd.f32 0.0, %v1106
            %1108 = vmatmul.f32.gmra.mxu0 %v1087
            %v1109 = vpop.f32.mrf.mxu0
            %v1110 = vadd.f32 0.0, %v1109
            %1111 = vdwg.mxu0
            %v1112 = vpack.c.bf16 %v1107, %v1107
            %v1113 = vpack.c.bf16 %v1110, %v1110
            %vm1114 = vcmask 257024
            %1115 = vst.msk [vmem:[#allocation3] sm:$0xf] %vm1114, %v1112
            %1116 = vst.msk [vmem:[#allocation3 + $0x4] sm:$0xf] %vm1114, %v1113
            %v1117 = vld [vmem:[%s1016] sm:$0xff]
            %v1118 = vld [vmem:[%s1016 + $0x8] sm:$0xff]
            %v1119 = vld [vmem:[%s1016 + $0x10] sm:$0xff]
            %v1120 = vld [vmem:[%s1016 + $0x18] sm:$0xff]
            %1121 = vmatpush.msra.mxu0 0.0
            %1122 = vmatpush.msra.mxu0 0.0
            %1123 = vmatpush.msra.mxu0 0.0
            %1124 = vmatpush.msra.mxu0 0.0
            %1125 = vmatpush.msra.mxu0 0.0
            %1126 = vmatpush.msra.mxu0 0.0
            %1127 = vmatpush.msra.mxu0 0.0
            %1128 = vmatpush.msra.mxu0 0.0
            %1129 = vmatpush.msra.mxu0 0.0
            %1130 = vmatpush.msra.mxu0 0.0
            %1131 = vmatpush.msra.mxu0 0.0
            %1132 = vmatpush.msra.mxu0 0.0
            %1133 = vmatpush.msra.mxu0 %v1120
            %1134 = vmatpush.msra.mxu0 %v1119
            %1135 = vmatpush.msra.mxu0 %v1118
            %1136 = vmatpush.msra.mxu0 %v1117
            %1137 = vmatmul.f32.gmra.mxu0 %v1084
            %v1138 = vpop.f32.mrf.mxu0
            %v1139 = vadd.f32 0.0, %v1138
            %1140 = vmatmul.f32.gmra.mxu0 %v1087
            %v1141 = vpop.f32.mrf.mxu0
            %v1142 = vadd.f32 0.0, %v1141
            %1143 = vdwg.mxu0
            %v1144 = vpack.c.bf16 %v1139, %v1139
            %v1145 = vpack.c.bf16 %v1142, %v1142
            %1146 = vst.msk [vmem:[#allocation3 + $0x8] sm:$0xf] %vm1114, %v1144
            %1147 = vst.msk [vmem:[#allocation3 + $0xc] sm:$0xf] %vm1114, %v1145
          $region136: #{equivariant_block_forward.1} parent=131 // pred_fallthru
            _
          // Predicated region
          $region137: #{equivariant_block_forward.1} parent=131 // pred_check
            %p1148 = pneg %p1056
          $region138: #{equivariant_block_forward.1} parent=131 // pred_check_branch
            %1150 = sbr.rel (%p1148) target = $region140
          $region139: #{equivariant_block_forward.1} parent=131 // pred_region
            %vm1151 = vcmask 64512
            %1152 = vst.msk [vmem:[#allocation5] sm:$0xff] %vm1151, 0.0
            %1153 = vst.msk [vmem:[#allocation5 + $0x8] sm:$0xff] %vm1151, 0.0
            %v1154 = vld [vmem:[%s19] sm:$0xff]
            %v1155 = vld [vmem:[%s19 + $0x8] sm:$0xff]
            %v1156 = vld [vmem:[%s19 + $0x10] sm:$0xff]
            %v1157 = vld [vmem:[%s19 + $0x18] sm:$0xff]
            %vm1158 = vcmask 261120
            %v1160 = vsel %vm1158, %v1071, 0
            %v1163 = vsel %vm1158, %v1072, 0
            %1165 = vmatpush.msra.mxu0 0.0
            %1166 = vmatpush.msra.mxu0 0.0
            %1167 = vmatpush.msra.mxu0 0.0
            %1168 = vmatpush.msra.mxu0 0.0
            %1169 = vmatpush.msra.mxu0 0.0
            %1170 = vmatpush.msra.mxu0 0.0
            %1171 = vmatpush.msra.mxu0 0.0
            %1172 = vmatpush.msra.mxu0 0.0
            %1173 = vmatpush.msra.mxu0 0.0
            %1174 = vmatpush.msra.mxu0 0.0
            %1175 = vmatpush.msra.mxu0 0.0
            %1176 = vmatpush.msra.mxu0 0.0
            %1177 = vmatpush.msra.mxu0 %v1157
            %1178 = vmatpush.msra.mxu0 %v1156
            %1179 = vmatpush.msra.mxu0 %v1155
            %1180 = vmatpush.msra.mxu0 %v1154
            %1181 = vmatmul.f32.gmra.mxu0 %v1160
            %v1182 = vpop.f32.mrf.mxu0
            %v1183 = vadd.f32 0.0, %v1182
            %1184 = vmatmul.f32.gmra.mxu0 %v1163
            %v1185 = vpop.f32.mrf.mxu0
            %v1186 = vadd.f32 0.0, %v1185
            %1187 = vdwg.mxu0
            %v1188 = vpack.c.bf16 %v1183, %v1183
            %v1189 = vpack.c.bf16 %v1186, %v1186
            %vm1190 = vcmask 257024
            %1191 = vst.msk [vmem:[#allocation3] sm:$0xf] %vm1190, %v1188
            %1192 = vst.msk [vmem:[#allocation3 + $0x4] sm:$0xf] %vm1190, %v1189
            %v1193 = vld [vmem:[%s20] sm:$0xff]
            %v1194 = vld [vmem:[%s20 + $0x8] sm:$0xff]
            %v1195 = vld [vmem:[%s20 + $0x10] sm:$0xff]
            %v1196 = vld [vmem:[%s20 + $0x18] sm:$0xff]
            %1197 = vmatpush.msra.mxu0 0.0
            %1198 = vmatpush.msra.mxu0 0.0
            %1199 = vmatpush.msra.mxu0 0.0
            %1200 = vmatpush.msra.mxu0 0.0
            %1201 = vmatpush.msra.mxu0 0.0
            %1202 = vmatpush.msra.mxu0 0.0
            %1203 = vmatpush.msra.mxu0 0.0
            %1204 = vmatpush.msra.mxu0 0.0
            %1205 = vmatpush.msra.mxu0 0.0
            %1206 = vmatpush.msra.mxu0 0.0
            %1207 = vmatpush.msra.mxu0 0.0
            %1208 = vmatpush.msra.mxu0 0.0
            %1209 = vmatpush.msra.mxu0 %v1196
            %1210 = vmatpush.msra.mxu0 %v1195
            %1211 = vmatpush.msra.mxu0 %v1194
            %1212 = vmatpush.msra.mxu0 %v1193
            %1213 = vmatmul.f32.gmra.mxu0 %v1160
            %v1214 = vpop.f32.mrf.mxu0
            %v1215 = vadd.f32 0.0, %v1214
            %1216 = vmatmul.f32.gmra.mxu0 %v1163
            %v1217 = vpop.f32.mrf.mxu0
            %v1218 = vadd.f32 0.0, %v1217
            %1219 = vdwg.mxu0
            %v1220 = vpack.c.bf16 %v1215, %v1215
            %v1221 = vpack.c.bf16 %v1218, %v1218
            %1222 = vst.msk [vmem:[#allocation3 + $0x8] sm:$0xf] %vm1190, %v1220
            %1223 = vst.msk [vmem:[#allocation3 + $0xc] sm:$0xf] %vm1190, %v1221
          $region140: #{equivariant_block_forward.1} parent=131 // pred_fallthru
            _
        $region132: #{equivariant_block_forward.1} parent=123 // pred_fallthru
          _
        %v1224 = vld [vmem:[%s996] sm:$0xff]
        %v1225 = vld [vmem:[%s996 + $0x8] sm:$0xff]
        %v1226 = vld [vmem:[%s996 + $0x10] sm:$0xff]
        %v1227 = vld [vmem:[%s996 + $0x18] sm:$0xff]
        %v1228 = vld [vmem:[%s996 + $0x20] sm:$0xff]
        %v1229 = vld [vmem:[%s996 + $0x28] sm:$0xff]
        %v1230 = vld [vmem:[%s996 + $0x30] sm:$0xff]
        %v1231 = vld [vmem:[%s996 + $0x38] sm:$0xff]
        %v1232 = vld [vmem:[%s996 + $0x40] sm:$0xff]
        %v1233 = vld [vmem:[%s996 + $0x48] sm:$0xff]
        %v1234 = vld [vmem:[%s996 + $0x50] sm:$0xff]
        %v1235 = vld [vmem:[%s996 + $0x58] sm:$0xff]
        %v1236 = vld [vmem:[%s996 + $0x60] sm:$0xff]
        %v1237 = vld [vmem:[%s996 + $0x68] sm:$0xff]
        %v1238 = vld [vmem:[%s996 + $0x70] sm:$0xff]
        %v1239 = vld [vmem:[%s996 + $0x78] sm:$0xff]
        %v1240 = vld [vmem:[%s1005] sm:$0xff]
        %v1241 = vld [vmem:[%s1005 + $0x8] sm:$0xff]
        %v1242 = vld [vmem:[%s1005 + $0x10] sm:$0xff]
        %v1243 = vld [vmem:[%s1005 + $0x18] sm:$0xff]
        %v1244 = vld [vmem:[%s1005 + $0x20] sm:$0xff]
        %v1245 = vld [vmem:[%s1005 + $0x28] sm:$0xff]
        %v1246 = vld [vmem:[%s1005 + $0x30] sm:$0xff]
        %v1247 = vld [vmem:[%s1005 + $0x38] sm:$0xff]
        %v1248 = vld [vmem:[%s1005 + $0x40] sm:$0xff]
        %v1249 = vld [vmem:[%s1005 + $0x48] sm:$0xff]
        %v1250 = vld [vmem:[%s1005 + $0x50] sm:$0xff]
        %v1251 = vld [vmem:[%s1005 + $0x58] sm:$0xff]
        %v1252 = vld [vmem:[%s1005 + $0x60] sm:$0xff]
        %v1253 = vld [vmem:[%s1005 + $0x68] sm:$0xff]
        %v1254 = vld [vmem:[%s1005 + $0x70] sm:$0xff]
        %v1255 = vld [vmem:[%s1005 + $0x78] sm:$0xff]
        %v1256 = vlaneseq
        %v1257 = vand.u32 %v1256, 127
        %1258 = vset.pattern.permute.xlu0 0
        %1259 = vperm.xlu0 %1258, %v1224
        %v1260 = vpop.permute.xlu0 %1259
        %1261 = vset.pattern.permute.xlu0 0
        %1262 = vperm.xlu0 %1261, %v1225
        %v1263 = vpop.permute.xlu0 %1262
        %1264 = vset.pattern.permute.xlu0 0
        %1265 = vperm.xlu0 %1264, %v1226
        %v1266 = vpop.permute.xlu0 %1265
        %1267 = vset.pattern.permute.xlu0 0
        %1268 = vperm.xlu0 %1267, %v1227
        %v1269 = vpop.permute.xlu0 %1268
        %1270 = vset.pattern.permute.xlu0 0
        %1271 = vperm.xlu0 %1270, %v1228
        %v1272 = vpop.permute.xlu0 %1271
        %1273 = vset.pattern.permute.xlu0 0
        %1274 = vperm.xlu0 %1273, %v1229
        %v1275 = vpop.permute.xlu0 %1274
        %1276 = vset.pattern.permute.xlu0 0
        %1277 = vperm.xlu0 %1276, %v1230
        %v1278 = vpop.permute.xlu0 %1277
        %1279 = vset.pattern.permute.xlu0 0
        %1280 = vperm.xlu0 %1279, %v1231
        %v1281 = vpop.permute.xlu0 %1280
        %1282 = vset.pattern.permute.xlu0 0
        %1283 = vperm.xlu0 %1282, %v1232
        %v1284 = vpop.permute.xlu0 %1283
        %1285 = vset.pattern.permute.xlu0 0
        %1286 = vperm.xlu0 %1285, %v1233
        %v1287 = vpop.permute.xlu0 %1286
        %1288 = vset.pattern.permute.xlu0 0
        %1289 = vperm.xlu0 %1288, %v1234
        %v1290 = vpop.permute.xlu0 %1289
        %1291 = vset.pattern.permute.xlu0 0
        %1292 = vperm.xlu0 %1291, %v1235
        %v1293 = vpop.permute.xlu0 %1292
        %1294 = vset.pattern.permute.xlu0 0
        %1295 = vperm.xlu0 %1294, %v1236
        %v1296 = vpop.permute.xlu0 %1295
        %1297 = vset.pattern.permute.xlu0 0
        %1298 = vperm.xlu0 %1297, %v1237
        %v1299 = vpop.permute.xlu0 %1298
        %1300 = vset.pattern.permute.xlu0 0
        %1301 = vperm.xlu0 %1300, %v1238
        %v1302 = vpop.permute.xlu0 %1301
        %1303 = vset.pattern.permute.xlu0 0
        %1304 = vperm.xlu0 %1303, %v1239
        %v1305 = vpop.permute.xlu0 %1304
        %vm1306 = vcmp.eq.s32.totalorder %v1257, %v1260
        %vm1307 = vcmp.eq.s32.totalorder %v1257, %v1263
        %vm1308 = vcmp.eq.s32.totalorder %v1257, %v1266
        %vm1309 = vcmp.eq.s32.totalorder %v1257, %v1269
        %vm1310 = vcmp.eq.s32.totalorder %v1257, %v1272
        %vm1311 = vcmp.eq.s32.totalorder %v1257, %v1275
        %vm1312 = vcmp.eq.s32.totalorder %v1257, %v1278
        %vm1313 = vcmp.eq.s32.totalorder %v1257, %v1281
        %vm1314 = vcmp.eq.s32.totalorder %v1257, %v1284
        %vm1315 = vcmp.eq.s32.totalorder %v1257, %v1287
        %vm1316 = vcmp.eq.s32.totalorder %v1257, %v1290
        %vm1317 = vcmp.eq.s32.totalorder %v1257, %v1293
        %vm1318 = vcmp.eq.s32.totalorder %v1257, %v1296
        %vm1319 = vcmp.eq.s32.totalorder %v1257, %v1299
        %vm1320 = vcmp.eq.s32.totalorder %v1257, %v1302
        %vm1321 = vcmp.eq.s32.totalorder %v1257, %v1305
        %v1322 = vadd.s32 %v1224, 16
        %v1323 = vadd.s32 %v1225, 16
        %v1324 = vadd.s32 %v1226, 16
        %v1325 = vadd.s32 %v1227, 16
        %v1326 = vadd.s32 %v1228, 16
        %v1327 = vadd.s32 %v1229, 16
        %v1328 = vadd.s32 %v1230, 16
        %v1329 = vadd.s32 %v1231, 16
        %v1330 = vadd.s32 %v1232, 16
        %v1331 = vadd.s32 %v1233, 16
        %v1332 = vadd.s32 %v1234, 16
        %v1333 = vadd.s32 %v1235, 16
        %v1334 = vadd.s32 %v1236, 16
        %v1335 = vadd.s32 %v1237, 16
        %v1336 = vadd.s32 %v1238, 16
        %v1337 = vadd.s32 %v1239, 16
        %1338 = vset.pattern.permute.xlu0 1
        %1339 = vperm.xlu0 %1338, %v1322
        %v1340 = vpop.permute.xlu0 %1339
        %1341 = vset.pattern.permute.xlu0 1
        %1342 = vperm.xlu0 %1341, %v1323
        %v1343 = vpop.permute.xlu0 %1342
        %1344 = vset.pattern.permute.xlu0 1
        %1345 = vperm.xlu0 %1344, %v1324
        %v1346 = vpop.permute.xlu0 %1345
        %1347 = vset.pattern.permute.xlu0 1
        %1348 = vperm.xlu0 %1347, %v1325
        %v1349 = vpop.permute.xlu0 %1348
        %1350 = vset.pattern.permute.xlu0 1
        %1351 = vperm.xlu0 %1350, %v1326
        %v1352 = vpop.permute.xlu0 %1351
        %1353 = vset.pattern.permute.xlu0 1
        %1354 = vperm.xlu0 %1353, %v1327
        %v1355 = vpop.permute.xlu0 %1354
        %1356 = vset.pattern.permute.xlu0 1
        %1357 = vperm.xlu0 %1356, %v1328
        %v1358 = vpop.permute.xlu0 %1357
        %1359 = vset.pattern.permute.xlu0 1
        %1360 = vperm.xlu0 %1359, %v1329
        %v1361 = vpop.permute.xlu0 %1360
        %1362 = vset.pattern.permute.xlu0 1
        %1363 = vperm.xlu0 %1362, %v1330
        %v1364 = vpop.permute.xlu0 %1363
        %1365 = vset.pattern.permute.xlu0 1
        %1366 = vperm.xlu0 %1365, %v1331
        %v1367 = vpop.permute.xlu0 %1366
        %1368 = vset.pattern.permute.xlu0 1
        %1369 = vperm.xlu0 %1368, %v1332
        %v1370 = vpop.permute.xlu0 %1369
        %1371 = vset.pattern.permute.xlu0 1
        %1372 = vperm.xlu0 %1371, %v1333
        %v1373 = vpop.permute.xlu0 %1372
        %1374 = vset.pattern.permute.xlu0 1
        %1375 = vperm.xlu0 %1374, %v1334
        %v1376 = vpop.permute.xlu0 %1375
        %1377 = vset.pattern.permute.xlu0 1
        %1378 = vperm.xlu0 %1377, %v1335
        %v1379 = vpop.permute.xlu0 %1378
        %1380 = vset.pattern.permute.xlu0 1
        %1381 = vperm.xlu0 %1380, %v1336
        %v1382 = vpop.permute.xlu0 %1381
        %1383 = vset.pattern.permute.xlu0 1
        %1384 = vperm.xlu0 %1383, %v1337
        %v1385 = vpop.permute.xlu0 %1384
        %vm1386 = vcmp.eq.s32.totalorder %v1257, %v1340
        %vm1387 = vcmp.eq.s32.totalorder %v1257, %v1343
        %vm1388 = vcmp.eq.s32.totalorder %v1257, %v1346
        %vm1389 = vcmp.eq.s32.totalorder %v1257, %v1349
        %vm1390 = vcmp.eq.s32.totalorder %v1257, %v1352
        %vm1391 = vcmp.eq.s32.totalorder %v1257, %v1355
        %vm1392 = vcmp.eq.s32.totalorder %v1257, %v1358
        %vm1393 = vcmp.eq.s32.totalorder %v1257, %v1361
        %vm1394 = vcmp.eq.s32.totalorder %v1257, %v1364
        %vm1395 = vcmp.eq.s32.totalorder %v1257, %v1367
        %vm1396 = vcmp.eq.s32.totalorder %v1257, %v1370
        %vm1397 = vcmp.eq.s32.totalorder %v1257, %v1373
        %vm1398 = vcmp.eq.s32.totalorder %v1257, %v1376
        %vm1399 = vcmp.eq.s32.totalorder %v1257, %v1379
        %vm1400 = vcmp.eq.s32.totalorder %v1257, %v1382
        %vm1401 = vcmp.eq.s32.totalorder %v1257, %v1385
        %vm1402 = vmor %vm1306, %vm1386
        %vm1403 = vmor %vm1307, %vm1387
        %vm1404 = vmor %vm1308, %vm1388
        %vm1405 = vmor %vm1309, %vm1389
        %vm1406 = vmor %vm1310, %vm1390
        %vm1407 = vmor %vm1311, %vm1391
        %vm1408 = vmor %vm1312, %vm1392
        %vm1409 = vmor %vm1313, %vm1393
        %vm1410 = vmor %vm1314, %vm1394
        %vm1411 = vmor %vm1315, %vm1395
        %vm1412 = vmor %vm1316, %vm1396
        %vm1413 = vmor %vm1317, %vm1397
        %vm1414 = vmor %vm1318, %vm1398
        %vm1415 = vmor %vm1319, %vm1399
        %vm1416 = vmor %vm1320, %vm1400
        %vm1417 = vmor %vm1321, %vm1401
        %v1418 = vsel %vm1402, 1, 0
        %v1419 = vsel %vm1403, 1, 0
        %v1420 = vsel %vm1404, 1, 0
        %v1421 = vsel %vm1405, 1, 0
        %v1422 = vsel %vm1406, 1, 0
        %v1423 = vsel %vm1407, 1, 0
        %v1424 = vsel %vm1408, 1, 0
        %v1425 = vsel %vm1409, 1, 0
        %v1426 = vsel %vm1410, 1, 0
        %v1427 = vsel %vm1411, 1, 0
        %v1428 = vsel %vm1412, 1, 0
        %v1429 = vsel %vm1413, 1, 0
        %v1430 = vsel %vm1414, 1, 0
        %v1431 = vsel %vm1415, 1, 0
        %v1432 = vsel %vm1416, 1, 0
        %v1433 = vsel %vm1417, 1, 0
        %v1434 = vcvt.s32.f32 %v1418
        %v1435 = vcvt.s32.f32 %v1419
        %v1436 = vcvt.s32.f32 %v1420
        %v1437 = vcvt.s32.f32 %v1421
        %v1438 = vcvt.s32.f32 %v1422
        %v1439 = vcvt.s32.f32 %v1423
        %v1440 = vcvt.s32.f32 %v1424
        %v1441 = vcvt.s32.f32 %v1425
        %v1442 = vcvt.s32.f32 %v1426
        %v1443 = vcvt.s32.f32 %v1427
        %v1444 = vcvt.s32.f32 %v1428
        %v1445 = vcvt.s32.f32 %v1429
        %v1446 = vcvt.s32.f32 %v1430
        %v1447 = vcvt.s32.f32 %v1431
        %v1448 = vcvt.s32.f32 %v1432
        %v1449 = vcvt.s32.f32 %v1433
        %v1450 = vpack.c.bf16 %v1435, %v1434
        %v1451 = vpack.c.bf16 %v1437, %v1436
        %v1452 = vpack.c.bf16 %v1439, %v1438
        %v1453 = vpack.c.bf16 %v1441, %v1440
        %v1454 = vpack.c.bf16 %v1443, %v1442
        %v1455 = vpack.c.bf16 %v1445, %v1444
        %v1456 = vpack.c.bf16 %v1447, %v1446
        %v1457 = vpack.c.bf16 %v1449, %v1448
        %v1458 = vld [vmem:[#allocation3] sm:$0xf]
        %v1459 = vld [vmem:[#allocation3 + $0x4] sm:$0xf]
        %v1460 = vld [vmem:[#allocation3 + $0x8] sm:$0xf]
        %v1461 = vld [vmem:[#allocation3 + $0xc] sm:$0xf]
        %v1466 = vunpack.c.l.b16 %v1458
        %v1467 = vunpack.c.l.b16 %v1459
        %v1468 = vunpack.c.l.b16 %v1460
        %v1469 = vunpack.c.l.b16 %v1461
        %v1470 = vpack.c.b16 %v1467, %v1466
        %v1471 = vpack.c.b16 %v1469, %v1468
        %vm1474 = vcmask 261120
        %v1476 = vsel %vm1474, %v1450, 0
        %v1479 = vsel %vm1474, %v1451, 0
        %v1482 = vsel %vm1474, %v1452, 0
        %v1485 = vsel %vm1474, %v1453, 0
        %v1488 = vsel %vm1474, %v1454, 0
        %v1491 = vsel %vm1474, %v1455, 0
        %v1494 = vsel %vm1474, %v1456, 0
        %v1497 = vsel %vm1474, %v1457, 0
        %1499 = vmatpush.bf16.msra.mxu0 0
        %1500 = vmatpush.bf16.msra.mxu0 0
        %1501 = vmatpush.bf16.msra.mxu0 0
        %1502 = vmatpush.bf16.msra.mxu0 0
        %1503 = vmatpush.bf16.msra.mxu0 0
        %1504 = vmatpush.bf16.msra.mxu0 0
        %1505 = vmatpush.bf16.msra.mxu0 %v1471
        %1506 = vmatpush.bf16.msra.mxu0 %v1470
        %1507 = vmatmul.bf16.gmra.mxu0 %v1476
        %v1508 = vpop.f32.mrf.mxu0
        %v1509 = vadd.f32 0.0, %v1508
        %v1510 = vpop.f32.mrf.mxu0
        %v1511 = vadd.f32 0.0, %v1510
        %1512 = vmatmul.bf16.gmra.mxu0 %v1479
        %v1513 = vpop.f32.mrf.mxu0
        %v1514 = vadd.f32 0.0, %v1513
        %v1515 = vpop.f32.mrf.mxu0
        %v1516 = vadd.f32 0.0, %v1515
        %1517 = vmatmul.bf16.gmra.mxu0 %v1482
        %v1518 = vpop.f32.mrf.mxu0
        %v1519 = vadd.f32 0.0, %v1518
        %v1520 = vpop.f32.mrf.mxu0
        %v1521 = vadd.f32 0.0, %v1520
        %1522 = vmatmul.bf16.gmra.mxu0 %v1485
        %v1523 = vpop.f32.mrf.mxu0
        %v1524 = vadd.f32 0.0, %v1523
        %v1525 = vpop.f32.mrf.mxu0
        %v1526 = vadd.f32 0.0, %v1525
        %1527 = vmatmul.bf16.gmra.mxu0 %v1488
        %v1528 = vpop.f32.mrf.mxu0
        %v1529 = vadd.f32 0.0, %v1528
        %v1530 = vpop.f32.mrf.mxu0
        %v1531 = vadd.f32 0.0, %v1530
        %1532 = vmatmul.bf16.gmra.mxu0 %v1491
        %v1533 = vpop.f32.mrf.mxu0
        %v1534 = vadd.f32 0.0, %v1533
        %v1535 = vpop.f32.mrf.mxu0
        %v1536 = vadd.f32 0.0, %v1535
        %1537 = vmatmul.bf16.gmra.mxu0 %v1494
        %v1538 = vpop.f32.mrf.mxu0
        %v1539 = vadd.f32 0.0, %v1538
        %v1540 = vpop.f32.mrf.mxu0
        %v1541 = vadd.f32 0.0, %v1540
        %1542 = vmatmul.bf16.gmra.mxu0 %v1497
        %v1543 = vpop.f32.mrf.mxu0
        %v1544 = vadd.f32 0.0, %v1543
        %v1545 = vpop.f32.mrf.mxu0
        %v1546 = vadd.f32 0.0, %v1545
        %1547 = vdwg.mxu0
        %v1548 = vlaneseq
        %v1549 = vshrl.u32 %v1548, 7
        %v1550 = vadd.s32 %v1549, 8
        %v1551 = vld [vmem:[%s1000] sm:$0x1]
        %v1552 = vperm.slane %v1551, 0
        %vm1553 = vcmp.eq.s32.totalorder %v1549, %v1552
        %vm1554 = vcmp.eq.s32.totalorder %v1550, %v1552
        %v1555 = vsel %vm1553, 1, 0
        %v1556 = vsel %vm1554, 1, 0
        %v1557 = vcvt.s32.f32 %v1555
        %v1558 = vcvt.s32.f32 %v1556
        %v1559 = vpack.c.bf16 %v1558, %v1557
        // Predicated region
        $region141: #{equivariant_block_forward.1} parent=123 // pred_check
          %p1560 = pneg %p1057
        $region142: #{equivariant_block_forward.1} parent=123 // pred_check_branch
          %1562 = sbr.rel (%p1560) target = $region144
        $region143: #{equivariant_block_forward.1} parent=123 // pred_region
          %v1563 = vsel %vm1306, 1, 0
          %v1564 = vsel %vm1307, 1, 0
          %v1565 = vsel %vm1308, 1, 0
          %v1566 = vsel %vm1309, 1, 0
          %v1567 = vsel %vm1310, 1, 0
          %v1568 = vsel %vm1311, 1, 0
          %v1569 = vsel %vm1312, 1, 0
          %v1570 = vsel %vm1313, 1, 0
          %v1571 = vsel %vm1314, 1, 0
          %v1572 = vsel %vm1315, 1, 0
          %v1573 = vsel %vm1316, 1, 0
          %v1574 = vsel %vm1317, 1, 0
          %v1575 = vsel %vm1318, 1, 0
          %v1576 = vsel %vm1319, 1, 0
          %v1577 = vsel %vm1320, 1, 0
          %v1578 = vsel %vm1321, 1, 0
          %v1579 = vcvt.s32.f32 %v1563
          %v1580 = vcvt.s32.f32 %v1564
          %v1581 = vcvt.s32.f32 %v1565
          %v1582 = vcvt.s32.f32 %v1566
          %v1583 = vcvt.s32.f32 %v1567
          %v1584 = vcvt.s32.f32 %v1568
          %v1585 = vcvt.s32.f32 %v1569
          %v1586 = vcvt.s32.f32 %v1570
          %v1587 = vcvt.s32.f32 %v1571
          %v1588 = vcvt.s32.f32 %v1572
          %v1589 = vcvt.s32.f32 %v1573
          %v1590 = vcvt.s32.f32 %v1574
          %v1591 = vcvt.s32.f32 %v1575
          %v1592 = vcvt.s32.f32 %v1576
          %v1593 = vcvt.s32.f32 %v1577
          %v1594 = vcvt.s32.f32 %v1578
          %1595 = vset.pattern.permute.xlu0 1
          %1596 = vperm.xlu0 %1595, %v1224
          %v1597 = vpop.permute.xlu0 %1596
          %1598 = vset.pattern.permute.xlu0 1
          %1599 = vperm.xlu0 %1598, %v1225
          %v1600 = vpop.permute.xlu0 %1599
          %1601 = vset.pattern.permute.xlu0 1
          %1602 = vperm.xlu0 %1601, %v1226
          %v1603 = vpop.permute.xlu0 %1602
          %1604 = vset.pattern.permute.xlu0 1
          %1605 = vperm.xlu0 %1604, %v1227
          %v1606 = vpop.permute.xlu0 %1605
          %1607 = vset.pattern.permute.xlu0 1
          %1608 = vperm.xlu0 %1607, %v1228
          %v1609 = vpop.permute.xlu0 %1608
          %1610 = vset.pattern.permute.xlu0 1
          %1611 = vperm.xlu0 %1610, %v1229
          %v1612 = vpop.permute.xlu0 %1611
          %1613 = vset.pattern.permute.xlu0 1
          %1614 = vperm.xlu0 %1613, %v1230
          %v1615 = vpop.permute.xlu0 %1614
          %1616 = vset.pattern.permute.xlu0 1
          %1617 = vperm.xlu0 %1616, %v1231
          %v1618 = vpop.permute.xlu0 %1617
          %1619 = vset.pattern.permute.xlu0 1
          %1620 = vperm.xlu0 %1619, %v1232
          %v1621 = vpop.permute.xlu0 %1620
          %1622 = vset.pattern.permute.xlu0 1
          %1623 = vperm.xlu0 %1622, %v1233
          %v1624 = vpop.permute.xlu0 %1623
          %1625 = vset.pattern.permute.xlu0 1
          %1626 = vperm.xlu0 %1625, %v1234
          %v1627 = vpop.permute.xlu0 %1626
          %1628 = vset.pattern.permute.xlu0 1
          %1629 = vperm.xlu0 %1628, %v1235
          %v1630 = vpop.permute.xlu0 %1629
          %1631 = vset.pattern.permute.xlu0 1
          %1632 = vperm.xlu0 %1631, %v1236
          %v1633 = vpop.permute.xlu0 %1632
          %1634 = vset.pattern.permute.xlu0 1
          %1635 = vperm.xlu0 %1634, %v1237
          %v1636 = vpop.permute.xlu0 %1635
          %1637 = vset.pattern.permute.xlu0 1
          %1638 = vperm.xlu0 %1637, %v1238
          %v1639 = vpop.permute.xlu0 %1638
          %1640 = vset.pattern.permute.xlu0 1
          %1641 = vperm.xlu0 %1640, %v1239
          %v1642 = vpop.permute.xlu0 %1641
          %vm1643 = vcmp.eq.s32.totalorder %v1257, %v1597
          %vm1644 = vcmp.eq.s32.totalorder %v1257, %v1600
          %vm1645 = vcmp.eq.s32.totalorder %v1257, %v1603
          %vm1646 = vcmp.eq.s32.totalorder %v1257, %v1606
          %vm1647 = vcmp.eq.s32.totalorder %v1257, %v1609
          %vm1648 = vcmp.eq.s32.totalorder %v1257, %v1612
          %vm1649 = vcmp.eq.s32.totalorder %v1257, %v1615
          %vm1650 = vcmp.eq.s32.totalorder %v1257, %v1618
          %vm1651 = vcmp.eq.s32.totalorder %v1257, %v1621
          %vm1652 = vcmp.eq.s32.totalorder %v1257, %v1624
          %vm1653 = vcmp.eq.s32.totalorder %v1257, %v1627
          %vm1654 = vcmp.eq.s32.totalorder %v1257, %v1630
          %vm1655 = vcmp.eq.s32.totalorder %v1257, %v1633
          %vm1656 = vcmp.eq.s32.totalorder %v1257, %v1636
          %vm1657 = vcmp.eq.s32.totalorder %v1257, %v1639
          %vm1658 = vcmp.eq.s32.totalorder %v1257, %v1642
          %v1659 = vsel %vm1643, 1, 0
          %v1660 = vsel %vm1644, 1, 0
          %v1661 = vsel %vm1645, 1, 0
          %v1662 = vsel %vm1646, 1, 0
          %v1663 = vsel %vm1647, 1, 0
          %v1664 = vsel %vm1648, 1, 0
          %v1665 = vsel %vm1649, 1, 0
          %v1666 = vsel %vm1650, 1, 0
          %v1667 = vsel %vm1651, 1, 0
          %v1668 = vsel %vm1652, 1, 0
          %v1669 = vsel %vm1653, 1, 0
          %v1670 = vsel %vm1654, 1, 0
          %v1671 = vsel %vm1655, 1, 0
          %v1672 = vsel %vm1656, 1, 0
          %v1673 = vsel %vm1657, 1, 0
          %v1674 = vsel %vm1658, 1, 0
          %v1675 = vcvt.s32.f32 %v1659
          %v1676 = vcvt.s32.f32 %v1660
          %v1677 = vcvt.s32.f32 %v1661
          %v1678 = vcvt.s32.f32 %v1662
          %v1679 = vcvt.s32.f32 %v1663
          %v1680 = vcvt.s32.f32 %v1664
          %v1681 = vcvt.s32.f32 %v1665
          %v1682 = vcvt.s32.f32 %v1666
          %v1683 = vcvt.s32.f32 %v1667
          %v1684 = vcvt.s32.f32 %v1668
          %v1685 = vcvt.s32.f32 %v1669
          %v1686 = vcvt.s32.f32 %v1670
          %v1687 = vcvt.s32.f32 %v1671
          %v1688 = vcvt.s32.f32 %v1672
          %v1689 = vcvt.s32.f32 %v1673
          %v1690 = vcvt.s32.f32 %v1674
          %v1691 = vsub.f32 %v1579, %v1675
          %v1692 = vsub.f32 %v1580, %v1676
          %v1693 = vsub.f32 %v1581, %v1677
          %v1694 = vsub.f32 %v1582, %v1678
          %v1695 = vsub.f32 %v1583, %v1679
          %v1696 = vsub.f32 %v1584, %v1680
          %v1697 = vsub.f32 %v1585, %v1681
          %v1698 = vsub.f32 %v1586, %v1682
          %v1699 = vsub.f32 %v1587, %v1683
          %v1700 = vsub.f32 %v1588, %v1684
          %v1701 = vsub.f32 %v1589, %v1685
          %v1702 = vsub.f32 %v1590, %v1686
          %v1703 = vsub.f32 %v1591, %v1687
          %v1704 = vsub.f32 %v1592, %v1688
          %v1705 = vsub.f32 %v1593, %v1689
          %v1706 = vsub.f32 %v1594, %v1690
          %v1707 = vld [vmem:[%s4] sm:$0xff]
          %v1708 = vld [vmem:[%s4 + $0x8] sm:$0xff]
          %vm1709 = vcmask 130048
          %v1711 = vsel %vm1709, %v1691, 0
          %v1714 = vsel %vm1709, %v1692, 0
          %v1717 = vsel %vm1709, %v1693, 0
          %v1720 = vsel %vm1709, %v1694, 0
          %v1723 = vsel %vm1709, %v1695, 0
          %v1726 = vsel %vm1709, %v1696, 0
          %v1729 = vsel %vm1709, %v1697, 0
          %v1732 = vsel %vm1709, %v1698, 0
          %v1735 = vsel %vm1709, %v1699, 0
          %v1738 = vsel %vm1709, %v1700, 0
          %v1741 = vsel %vm1709, %v1701, 0
          %v1744 = vsel %vm1709, %v1702, 0
          %v1747 = vsel %vm1709, %v1703, 0
          %v1750 = vsel %vm1709, %v1704, 0
          %v1753 = vsel %vm1709, %v1705, 0
          %v1756 = vsel %vm1709, %v1706, 0
          %1758 = vmatpush.msra.mxu0 0.0
          %1759 = vmatpush.msra.mxu0 0.0
          %1760 = vmatpush.msra.mxu0 0.0
          %1761 = vmatpush.msra.mxu0 0.0
          %1762 = vmatpush.msra.mxu0 0.0
          %1763 = vmatpush.msra.mxu0 0.0
          %1764 = vmatpush.msra.mxu0 0.0
          %1765 = vmatpush.msra.mxu0 0.0
          %1766 = vmatpush.msra.mxu0 0.0
          %1767 = vmatpush.msra.mxu0 0.0
          %1768 = vmatpush.msra.mxu0 0.0
          %1769 = vmatpush.msra.mxu0 0.0
          %1770 = vmatpush.msra.mxu0 0.0
          %1771 = vmatpush.msra.mxu0 0.0
          %1772 = vmatpush.msra.mxu0 %v1708
          %1773 = vmatpush.msra.mxu0 %v1707
          %1774 = vmatmul.f32.gmra.mxu0 %v1711
          %v1775 = vpop.f32.mrf.mxu0
          %v1776 = vadd.f32 0.0, %v1775
          %1777 = vmatmul.f32.gmra.mxu0 %v1714
          %v1778 = vpop.f32.mrf.mxu0
          %v1779 = vadd.f32 0.0, %v1778
          %1780 = vmatmul.f32.gmra.mxu0 %v1717
          %v1781 = vpop.f32.mrf.mxu0
          %v1782 = vadd.f32 0.0, %v1781
          %1783 = vmatmul.f32.gmra.mxu0 %v1720
          %v1784 = vpop.f32.mrf.mxu0
          %v1785 = vadd.f32 0.0, %v1784
          %1786 = vmatmul.f32.gmra.mxu0 %v1723
          %v1787 = vpop.f32.mrf.mxu0
          %v1788 = vadd.f32 0.0, %v1787
          %1789 = vmatmul.f32.gmra.mxu0 %v1726
          %v1790 = vpop.f32.mrf.mxu0
          %v1791 = vadd.f32 0.0, %v1790
          %1792 = vmatmul.f32.gmra.mxu0 %v1729
          %v1793 = vpop.f32.mrf.mxu0
          %v1794 = vadd.f32 0.0, %v1793
          %1795 = vmatmul.f32.gmra.mxu0 %v1732
          %v1796 = vpop.f32.mrf.mxu0
          %v1797 = vadd.f32 0.0, %v1796
          %1798 = vmatmul.f32.gmra.mxu0 %v1735
          %v1799 = vpop.f32.mrf.mxu0
          %v1800 = vadd.f32 0.0, %v1799
          %1801 = vmatmul.f32.gmra.mxu0 %v1738
          %v1802 = vpop.f32.mrf.mxu0
          %v1803 = vadd.f32 0.0, %v1802
          %1804 = vmatmul.f32.gmra.mxu0 %v1741
          %v1805 = vpop.f32.mrf.mxu0
          %v1806 = vadd.f32 0.0, %v1805
          %1807 = vmatmul.f32.gmra.mxu0 %v1744
          %v1808 = vpop.f32.mrf.mxu0
          %v1809 = vadd.f32 0.0, %v1808
          %1810 = vmatmul.f32.gmra.mxu0 %v1747
          %v1811 = vpop.f32.mrf.mxu0
          %v1812 = vadd.f32 0.0, %v1811
          %1813 = vmatmul.f32.gmra.mxu0 %v1750
          %v1814 = vpop.f32.mrf.mxu0
          %v1815 = vadd.f32 0.0, %v1814
          %1816 = vmatmul.f32.gmra.mxu0 %v1753
          %v1817 = vpop.f32.mrf.mxu0
          %v1818 = vadd.f32 0.0, %v1817
          %1819 = vmatmul.f32.gmra.mxu0 %v1756
          %v1820 = vpop.f32.mrf.mxu0
          %v1821 = vadd.f32 0.0, %v1820
          %1822 = vdwg.mxu0
          %v1823 = vmul.f32 %v1776, %v1776
          %v1824 = vmul.f32 %v1779, %v1779
          %v1825 = vmul.f32 %v1782, %v1782
          %v1826 = vmul.f32 %v1785, %v1785
          %v1827 = vmul.f32 %v1788, %v1788
          %v1828 = vmul.f32 %v1791, %v1791
          %v1829 = vmul.f32 %v1794, %v1794
          %v1830 = vmul.f32 %v1797, %v1797
          %v1831 = vmul.f32 %v1800, %v1800
          %v1832 = vmul.f32 %v1803, %v1803
          %v1833 = vmul.f32 %v1806, %v1806
          %v1834 = vmul.f32 %v1809, %v1809
          %v1835 = vmul.f32 %v1812, %v1812
          %v1836 = vmul.f32 %v1815, %v1815
          %v1837 = vmul.f32 %v1818, %v1818
          %v1838 = vmul.f32 %v1821, %v1821
          %vm1839 = vcmask 64512
          %v1840 = vsel %vm1839, %v1823, 0.0
          %1841 = vadd.xlane.f32.xlu0 %v1840
          %v1842 = vpop.xlane.xlu0 %1841
          %v1843 = vsel %vm1839, %v1824, 0.0
          %1844 = vadd.xlane.f32.xlu0 %v1843
          %v1845 = vpop.xlane.xlu0 %1844
          %v1846 = vsel %vm1839, %v1825, 0.0
          %1847 = vadd.xlane.f32.xlu0 %v1846
          %v1848 = vpop.xlane.xlu0 %1847
          %v1849 = vsel %vm1839, %v1826, 0.0
          %1850 = vadd.xlane.f32.xlu0 %v1849
          %v1851 = vpop.xlane.xlu0 %1850
          %v1852 = vsel %vm1839, %v1827, 0.0
          %1853 = vadd.xlane.f32.xlu0 %v1852
          %v1854 = vpop.xlane.xlu0 %1853
          %v1855 = vsel %vm1839, %v1828, 0.0
          %1856 = vadd.xlane.f32.xlu0 %v1855
          %v1857 = vpop.xlane.xlu0 %1856
          %v1858 = vsel %vm1839, %v1829, 0.0
          %1859 = vadd.xlane.f32.xlu0 %v1858
          %v1860 = vpop.xlane.xlu0 %1859
          %v1861 = vsel %vm1839, %v1830, 0.0
          %1862 = vadd.xlane.f32.xlu0 %v1861
          %v1863 = vpop.xlane.xlu0 %1862
          %v1864 = vsel %vm1839, %v1831, 0.0
          %1865 = vadd.xlane.f32.xlu0 %v1864
          %v1866 = vpop.xlane.xlu0 %1865
          %v1867 = vsel %vm1839, %v1832, 0.0
          %1868 = vadd.xlane.f32.xlu0 %v1867
          %v1869 = vpop.xlane.xlu0 %1868
          %v1870 = vsel %vm1839, %v1833, 0.0
          %1871 = vadd.xlane.f32.xlu0 %v1870
          %v1872 = vpop.xlane.xlu0 %1871
          %v1873 = vsel %vm1839, %v1834, 0.0
          %1874 = vadd.xlane.f32.xlu0 %v1873
          %v1875 = vpop.xlane.xlu0 %1874
          %v1876 = vsel %vm1839, %v1835, 0.0
          %1877 = vadd.xlane.f32.xlu0 %v1876
          %v1878 = vpop.xlane.xlu0 %1877
          %v1879 = vsel %vm1839, %v1836, 0.0
          %1880 = vadd.xlane.f32.xlu0 %v1879
          %v1881 = vpop.xlane.xlu0 %1880
          %v1882 = vsel %vm1839, %v1837, 0.0
          %1883 = vadd.xlane.f32.xlu0 %v1882
          %v1884 = vpop.xlane.xlu0 %1883
          %v1885 = vsel %vm1839, %v1838, 0.0
          %1886 = vadd.xlane.f32.xlu0 %v1885
          %v1887 = vpop.xlane.xlu0 %1886
          %v1888 = vadd.f32 %v1842, 1e-08
          %v1889 = vadd.f32 %v1845, 1e-08
          %v1890 = vadd.f32 %v1848, 1e-08
          %v1891 = vadd.f32 %v1851, 1e-08
          %v1892 = vadd.f32 %v1854, 1e-08
          %v1893 = vadd.f32 %v1857, 1e-08
          %v1894 = vadd.f32 %v1860, 1e-08
          %v1895 = vadd.f32 %v1863, 1e-08
          %v1896 = vadd.f32 %v1866, 1e-08
          %v1897 = vadd.f32 %v1869, 1e-08
          %v1898 = vadd.f32 %v1872, 1e-08
          %v1899 = vadd.f32 %v1875, 1e-08
          %v1900 = vadd.f32 %v1878, 1e-08
          %v1901 = vadd.f32 %v1881, 1e-08
          %v1902 = vadd.f32 %v1884, 1e-08
          %v1903 = vadd.f32 %v1887, 1e-08
          %v1904 = vrsqrt.pop %v1888
          %v1905 = vmul.f32 %v1904, %v1888
          %v1906 = vmul.f32 %v1905, %v1904
          %v1907 = vmul.f32 0.5, %v1906
          %v1908 = vsub.f32 1.5, %v1907
          %v1909 = vmul.f32 %v1904, %v1908
          %v1910 = vmul.f32 %v1888, %v1909
          %vm1911 = vcmp.eq.f32.partialorder %v1888, inf
          %v1912 = vsel %vm1911, %v1888, %v1910
          %vm1913 = vcmp.eq.f32.partialorder %v1888, 0.0
          %v1914 = vand.u32 %v1888, 2147483648
          %v1915 = vsel %vm1913, %v1914, %v1912
          %v1916 = vrsqrt.pop %v1889
          %v1917 = vmul.f32 %v1916, %v1889
          %v1918 = vmul.f32 %v1917, %v1916
          %v1919 = vmul.f32 0.5, %v1918
          %v1920 = vsub.f32 1.5, %v1919
          %v1921 = vmul.f32 %v1916, %v1920
          %v1922 = vmul.f32 %v1889, %v1921
          %vm1923 = vcmp.eq.f32.partialorder %v1889, inf
          %v1924 = vsel %vm1923, %v1889, %v1922
          %vm1925 = vcmp.eq.f32.partialorder %v1889, 0.0
          %v1926 = vand.u32 %v1889, 2147483648
          %v1927 = vsel %vm1925, %v1926, %v1924
          %v1928 = vrsqrt.pop %v1890
          %v1929 = vmul.f32 %v1928, %v1890
          %v1930 = vmul.f32 %v1929, %v1928
          %v1931 = vmul.f32 0.5, %v1930
          %v1932 = vsub.f32 1.5, %v1931
          %v1933 = vmul.f32 %v1928, %v1932
          %v1934 = vmul.f32 %v1890, %v1933
          %vm1935 = vcmp.eq.f32.partialorder %v1890, inf
          %v1936 = vsel %vm1935, %v1890, %v1934
          %vm1937 = vcmp.eq.f32.partialorder %v1890, 0.0
          %v1938 = vand.u32 %v1890, 2147483648
          %v1939 = vsel %vm1937, %v1938, %v1936
          %v1940 = vrsqrt.pop %v1891
          %v1941 = vmul.f32 %v1940, %v1891
          %v1942 = vmul.f32 %v1941, %v1940
          %v1943 = vmul.f32 0.5, %v1942
          %v1944 = vsub.f32 1.5, %v1943
          %v1945 = vmul.f32 %v1940, %v1944
          %v1946 = vmul.f32 %v1891, %v1945
          %vm1947 = vcmp.eq.f32.partialorder %v1891, inf
          %v1948 = vsel %vm1947, %v1891, %v1946
          %vm1949 = vcmp.eq.f32.partialorder %v1891, 0.0
          %v1950 = vand.u32 %v1891, 2147483648
          %v1951 = vsel %vm1949, %v1950, %v1948
          %v1952 = vrsqrt.pop %v1892
          %v1953 = vmul.f32 %v1952, %v1892
          %v1954 = vmul.f32 %v1953, %v1952
          %v1955 = vmul.f32 0.5, %v1954
          %v1956 = vsub.f32 1.5, %v1955
          %v1957 = vmul.f32 %v1952, %v1956
          %v1958 = vmul.f32 %v1892, %v1957
          %vm1959 = vcmp.eq.f32.partialorder %v1892, inf
          %v1960 = vsel %vm1959, %v1892, %v1958
          %vm1961 = vcmp.eq.f32.partialorder %v1892, 0.0
          %v1962 = vand.u32 %v1892, 2147483648
          %v1963 = vsel %vm1961, %v1962, %v1960
          %v1964 = vrsqrt.pop %v1893
          %v1965 = vmul.f32 %v1964, %v1893
          %v1966 = vmul.f32 %v1965, %v1964
          %v1967 = vmul.f32 0.5, %v1966
          %v1968 = vsub.f32 1.5, %v1967
          %v1969 = vmul.f32 %v1964, %v1968
          %v1970 = vmul.f32 %v1893, %v1969
          %vm1971 = vcmp.eq.f32.partialorder %v1893, inf
          %v1972 = vsel %vm1971, %v1893, %v1970
          %vm1973 = vcmp.eq.f32.partialorder %v1893, 0.0
          %v1974 = vand.u32 %v1893, 2147483648
          %v1975 = vsel %vm1973, %v1974, %v1972
          %v1976 = vrsqrt.pop %v1894
          %v1977 = vmul.f32 %v1976, %v1894
          %v1978 = vmul.f32 %v1977, %v1976
          %v1979 = vmul.f32 0.5, %v1978
          %v1980 = vsub.f32 1.5, %v1979
          %v1981 = vmul.f32 %v1976, %v1980
          %v1982 = vmul.f32 %v1894, %v1981
          %vm1983 = vcmp.eq.f32.partialorder %v1894, inf
          %v1984 = vsel %vm1983, %v1894, %v1982
          %vm1985 = vcmp.eq.f32.partialorder %v1894, 0.0
          %v1986 = vand.u32 %v1894, 2147483648
          %v1987 = vsel %vm1985, %v1986, %v1984
          %v1988 = vrsqrt.pop %v1895
          %v1989 = vmul.f32 %v1988, %v1895
          %v1990 = vmul.f32 %v1989, %v1988
          %v1991 = vmul.f32 0.5, %v1990
          %v1992 = vsub.f32 1.5, %v1991
          %v1993 = vmul.f32 %v1988, %v1992
          %v1994 = vmul.f32 %v1895, %v1993
          %vm1995 = vcmp.eq.f32.partialorder %v1895, inf
          %v1996 = vsel %vm1995, %v1895, %v1994
          %vm1997 = vcmp.eq.f32.partialorder %v1895, 0.0
          %v1998 = vand.u32 %v1895, 2147483648
          %v1999 = vsel %vm1997, %v1998, %v1996
          %v2000 = vrsqrt.pop %v1896
          %v2001 = vmul.f32 %v2000, %v1896
          %v2002 = vmul.f32 %v2001, %v2000
          %v2003 = vmul.f32 0.5, %v2002
          %v2004 = vsub.f32 1.5, %v2003
          %v2005 = vmul.f32 %v2000, %v2004
          %v2006 = vmul.f32 %v1896, %v2005
          %vm2007 = vcmp.eq.f32.partialorder %v1896, inf
          %v2008 = vsel %vm2007, %v1896, %v2006
          %vm2009 = vcmp.eq.f32.partialorder %v1896, 0.0
          %v2010 = vand.u32 %v1896, 2147483648
          %v2011 = vsel %vm2009, %v2010, %v2008
          %v2012 = vrsqrt.pop %v1897
          %v2013 = vmul.f32 %v2012, %v1897
          %v2014 = vmul.f32 %v2013, %v2012
          %v2015 = vmul.f32 0.5, %v2014
          %v2016 = vsub.f32 1.5, %v2015
          %v2017 = vmul.f32 %v2012, %v2016
          %v2018 = vmul.f32 %v1897, %v2017
          %vm2019 = vcmp.eq.f32.partialorder %v1897, inf
          %v2020 = vsel %vm2019, %v1897, %v2018
          %vm2021 = vcmp.eq.f32.partialorder %v1897, 0.0
          %v2022 = vand.u32 %v1897, 2147483648
          %v2023 = vsel %vm2021, %v2022, %v2020
          %v2024 = vrsqrt.pop %v1898
          %v2025 = vmul.f32 %v2024, %v1898
          %v2026 = vmul.f32 %v2025, %v2024
          %v2027 = vmul.f32 0.5, %v2026
          %v2028 = vsub.f32 1.5, %v2027
          %v2029 = vmul.f32 %v2024, %v2028
          %v2030 = vmul.f32 %v1898, %v2029
          %vm2031 = vcmp.eq.f32.partialorder %v1898, inf
          %v2032 = vsel %vm2031, %v1898, %v2030
          %vm2033 = vcmp.eq.f32.partialorder %v1898, 0.0
          %v2034 = vand.u32 %v1898, 2147483648
          %v2035 = vsel %vm2033, %v2034, %v2032
          %v2036 = vrsqrt.pop %v1899
          %v2037 = vmul.f32 %v2036, %v1899
          %v2038 = vmul.f32 %v2037, %v2036
          %v2039 = vmul.f32 0.5, %v2038
          %v2040 = vsub.f32 1.5, %v2039
          %v2041 = vmul.f32 %v2036, %v2040
          %v2042 = vmul.f32 %v1899, %v2041
          %vm2043 = vcmp.eq.f32.partialorder %v1899, inf
          %v2044 = vsel %vm2043, %v1899, %v2042
          %vm2045 = vcmp.eq.f32.partialorder %v1899, 0.0
          %v2046 = vand.u32 %v1899, 2147483648
          %v2047 = vsel %vm2045, %v2046, %v2044
          %v2048 = vrsqrt.pop %v1900
          %v2049 = vmul.f32 %v2048, %v1900
          %v2050 = vmul.f32 %v2049, %v2048
          %v2051 = vmul.f32 0.5, %v2050
          %v2052 = vsub.f32 1.5, %v2051
          %v2053 = vmul.f32 %v2048, %v2052
          %v2054 = vmul.f32 %v1900, %v2053
          %vm2055 = vcmp.eq.f32.partialorder %v1900, inf
          %v2056 = vsel %vm2055, %v1900, %v2054
          %vm2057 = vcmp.eq.f32.partialorder %v1900, 0.0
          %v2058 = vand.u32 %v1900, 2147483648
          %v2059 = vsel %vm2057, %v2058, %v2056
          %v2060 = vrsqrt.pop %v1901
          %v2061 = vmul.f32 %v2060, %v1901
          %v2062 = vmul.f32 %v2061, %v2060
          %v2063 = vmul.f32 0.5, %v2062
          %v2064 = vsub.f32 1.5, %v2063
          %v2065 = vmul.f32 %v2060, %v2064
          %v2066 = vmul.f32 %v1901, %v2065
          %vm2067 = vcmp.eq.f32.partialorder %v1901, inf
          %v2068 = vsel %vm2067, %v1901, %v2066
          %vm2069 = vcmp.eq.f32.partialorder %v1901, 0.0
          %v2070 = vand.u32 %v1901, 2147483648
          %v2071 = vsel %vm2069, %v2070, %v2068
          %v2072 = vrsqrt.pop %v1902
          %v2073 = vmul.f32 %v2072, %v1902
          %v2074 = vmul.f32 %v2073, %v2072
          %v2075 = vmul.f32 0.5, %v2074
          %v2076 = vsub.f32 1.5, %v2075
          %v2077 = vmul.f32 %v2072, %v2076
          %v2078 = vmul.f32 %v1902, %v2077
          %vm2079 = vcmp.eq.f32.partialorder %v1902, inf
          %v2080 = vsel %vm2079, %v1902, %v2078
          %vm2081 = vcmp.eq.f32.partialorder %v1902, 0.0
          %v2082 = vand.u32 %v1902, 2147483648
          %v2083 = vsel %vm2081, %v2082, %v2080
          %v2084 = vrsqrt.pop %v1903
          %v2085 = vmul.f32 %v2084, %v1903
          %v2086 = vmul.f32 %v2085, %v2084
          %v2087 = vmul.f32 0.5, %v2086
          %v2088 = vsub.f32 1.5, %v2087
          %v2089 = vmul.f32 %v2084, %v2088
          %v2090 = vmul.f32 %v1903, %v2089
          %vm2091 = vcmp.eq.f32.partialorder %v1903, inf
          %v2092 = vsel %vm2091, %v1903, %v2090
          %vm2093 = vcmp.eq.f32.partialorder %v1903, 0.0
          %v2094 = vand.u32 %v1903, 2147483648
          %v2095 = vsel %vm2093, %v2094, %v2092
          %v2096 = vadd.f32 %v1915, 1.0
          %v2097 = vadd.f32 %v1927, 1.0
          %v2098 = vadd.f32 %v1939, 1.0
          %v2099 = vadd.f32 %v1951, 1.0
          %v2100 = vadd.f32 %v1963, 1.0
          %v2101 = vadd.f32 %v1975, 1.0
          %v2102 = vadd.f32 %v1987, 1.0
          %v2103 = vadd.f32 %v1999, 1.0
          %v2104 = vadd.f32 %v2011, 1.0
          %v2105 = vadd.f32 %v2023, 1.0
          %v2106 = vadd.f32 %v2035, 1.0
          %v2107 = vadd.f32 %v2047, 1.0
          %v2108 = vadd.f32 %v2059, 1.0
          %v2109 = vadd.f32 %v2071, 1.0
          %v2110 = vadd.f32 %v2083, 1.0
          %v2111 = vadd.f32 %v2095, 1.0
          %v2112 = vrcp.pop %v2096
          %v2113 = vmul.f32 %v2096, %v2112
          %v2114 = vsub.f32 1.0, %v2113
          %v2115 = vmul.f32 %v2112, %v2114
          %v2116 = vadd.f32 %v2112, %v2115
          %vm2117 = vweird.f32 %v2096
          %vm2118 = vweird.f32 %v2112
          %vm2119 = vmor %vm2117, %vm2118
          %v2120 = vsel %vm2119, %v2112, %v2116
          %v2121 = vand.u32 2147483647, %v2096
          %vm2122 = vcmp.eq.f32.partialorder %v2121, 8.507059e+37
          %v2123 = vand.u32 %v2096, 2147483648
          %v2124 = vor.u32 1.1754944e-38, %v2123
          %v2125 = vsel %vm2122, %v2124, %v2120
          %v2126 = vmul.f32 %v1776, %v2125
          %v2127 = vrcp.pop %v2097
          %v2128 = vmul.f32 %v2097, %v2127
          %v2129 = vsub.f32 1.0, %v2128
          %v2130 = vmul.f32 %v2127, %v2129
          %v2131 = vadd.f32 %v2127, %v2130
          %vm2132 = vweird.f32 %v2097
          %vm2133 = vweird.f32 %v2127
          %vm2134 = vmor %vm2132, %vm2133
          %v2135 = vsel %vm2134, %v2127, %v2131
          %v2136 = vand.u32 2147483647, %v2097
          %vm2137 = vcmp.eq.f32.partialorder %v2136, 8.507059e+37
          %v2138 = vand.u32 %v2097, 2147483648
          %v2139 = vor.u32 1.1754944e-38, %v2138
          %v2140 = vsel %vm2137, %v2139, %v2135
          %v2141 = vmul.f32 %v1779, %v2140
          %v2142 = vrcp.pop %v2098
          %v2143 = vmul.f32 %v2098, %v2142
          %v2144 = vsub.f32 1.0, %v2143
          %v2145 = vmul.f32 %v2142, %v2144
          %v2146 = vadd.f32 %v2142, %v2145
          %vm2147 = vweird.f32 %v2098
          %vm2148 = vweird.f32 %v2142
          %vm2149 = vmor %vm2147, %vm2148
          %v2150 = vsel %vm2149, %v2142, %v2146
          %v2151 = vand.u32 2147483647, %v2098
          %vm2152 = vcmp.eq.f32.partialorder %v2151, 8.507059e+37
          %v2153 = vand.u32 %v2098, 2147483648
          %v2154 = vor.u32 1.1754944e-38, %v2153
          %v2155 = vsel %vm2152, %v2154, %v2150
          %v2156 = vmul.f32 %v1782, %v2155
          %v2157 = vrcp.pop %v2099
          %v2158 = vmul.f32 %v2099, %v2157
          %v2159 = vsub.f32 1.0, %v2158
          %v2160 = vmul.f32 %v2157, %v2159
          %v2161 = vadd.f32 %v2157, %v2160
          %vm2162 = vweird.f32 %v2099
          %vm2163 = vweird.f32 %v2157
          %vm2164 = vmor %vm2162, %vm2163
          %v2165 = vsel %vm2164, %v2157, %v2161
          %v2166 = vand.u32 2147483647, %v2099
          %vm2167 = vcmp.eq.f32.partialorder %v2166, 8.507059e+37
          %v2168 = vand.u32 %v2099, 2147483648
          %v2169 = vor.u32 1.1754944e-38, %v2168
          %v2170 = vsel %vm2167, %v2169, %v2165
          %v2171 = vmul.f32 %v1785, %v2170
          %v2172 = vrcp.pop %v2100
          %v2173 = vmul.f32 %v2100, %v2172
          %v2174 = vsub.f32 1.0, %v2173
          %v2175 = vmul.f32 %v2172, %v2174
          %v2176 = vadd.f32 %v2172, %v2175
          %vm2177 = vweird.f32 %v2100
          %vm2178 = vweird.f32 %v2172
          %vm2179 = vmor %vm2177, %vm2178
          %v2180 = vsel %vm2179, %v2172, %v2176
          %v2181 = vand.u32 2147483647, %v2100
          %vm2182 = vcmp.eq.f32.partialorder %v2181, 8.507059e+37
          %v2183 = vand.u32 %v2100, 2147483648
          %v2184 = vor.u32 1.1754944e-38, %v2183
          %v2185 = vsel %vm2182, %v2184, %v2180
          %v2186 = vmul.f32 %v1788, %v2185
          %v2187 = vrcp.pop %v2101
          %v2188 = vmul.f32 %v2101, %v2187
          %v2189 = vsub.f32 1.0, %v2188
          %v2190 = vmul.f32 %v2187, %v2189
          %v2191 = vadd.f32 %v2187, %v2190
          %vm2192 = vweird.f32 %v2101
          %vm2193 = vweird.f32 %v2187
          %vm2194 = vmor %vm2192, %vm2193
          %v2195 = vsel %vm2194, %v2187, %v2191
          %v2196 = vand.u32 2147483647, %v2101
          %vm2197 = vcmp.eq.f32.partialorder %v2196, 8.507059e+37
          %v2198 = vand.u32 %v2101, 2147483648
          %v2199 = vor.u32 1.1754944e-38, %v2198
          %v2200 = vsel %vm2197, %v2199, %v2195
          %v2201 = vmul.f32 %v1791, %v2200
          %v2202 = vrcp.pop %v2102
          %v2203 = vmul.f32 %v2102, %v2202
          %v2204 = vsub.f32 1.0, %v2203
          %v2205 = vmul.f32 %v2202, %v2204
          %v2206 = vadd.f32 %v2202, %v2205
          %vm2207 = vweird.f32 %v2102
          %vm2208 = vweird.f32 %v2202
          %vm2209 = vmor %vm2207, %vm2208
          %v2210 = vsel %vm2209, %v2202, %v2206
          %v2211 = vand.u32 2147483647, %v2102
          %vm2212 = vcmp.eq.f32.partialorder %v2211, 8.507059e+37
          %v2213 = vand.u32 %v2102, 2147483648
          %v2214 = vor.u32 1.1754944e-38, %v2213
          %v2215 = vsel %vm2212, %v2214, %v2210
          %v2216 = vmul.f32 %v1794, %v2215
          %v2217 = vrcp.pop %v2103
          %v2218 = vmul.f32 %v2103, %v2217
          %v2219 = vsub.f32 1.0, %v2218
          %v2220 = vmul.f32 %v2217, %v2219
          %v2221 = vadd.f32 %v2217, %v2220
          %vm2222 = vweird.f32 %v2103
          %vm2223 = vweird.f32 %v2217
          %vm2224 = vmor %vm2222, %vm2223
          %v2225 = vsel %vm2224, %v2217, %v2221
          %v2226 = vand.u32 2147483647, %v2103
          %vm2227 = vcmp.eq.f32.partialorder %v2226, 8.507059e+37
          %v2228 = vand.u32 %v2103, 2147483648
          %v2229 = vor.u32 1.1754944e-38, %v2228
          %v2230 = vsel %vm2227, %v2229, %v2225
          %v2231 = vmul.f32 %v1797, %v2230
          %v2232 = vrcp.pop %v2104
          %v2233 = vmul.f32 %v2104, %v2232
          %v2234 = vsub.f32 1.0, %v2233
          %v2235 = vmul.f32 %v2232, %v2234
          %v2236 = vadd.f32 %v2232, %v2235
          %vm2237 = vweird.f32 %v2104
          %vm2238 = vweird.f32 %v2232
          %vm2239 = vmor %vm2237, %vm2238
          %v2240 = vsel %vm2239, %v2232, %v2236
          %v2241 = vand.u32 2147483647, %v2104
          %vm2242 = vcmp.eq.f32.partialorder %v2241, 8.507059e+37
          %v2243 = vand.u32 %v2104, 2147483648
          %v2244 = vor.u32 1.1754944e-38, %v2243
          %v2245 = vsel %vm2242, %v2244, %v2240
          %v2246 = vmul.f32 %v1800, %v2245
          %v2247 = vrcp.pop %v2105
          %v2248 = vmul.f32 %v2105, %v2247
          %v2249 = vsub.f32 1.0, %v2248
          %v2250 = vmul.f32 %v2247, %v2249
          %v2251 = vadd.f32 %v2247, %v2250
          %vm2252 = vweird.f32 %v2105
          %vm2253 = vweird.f32 %v2247
          %vm2254 = vmor %vm2252, %vm2253
          %v2255 = vsel %vm2254, %v2247, %v2251
          %v2256 = vand.u32 2147483647, %v2105
          %vm2257 = vcmp.eq.f32.partialorder %v2256, 8.507059e+37
          %v2258 = vand.u32 %v2105, 2147483648
          %v2259 = vor.u32 1.1754944e-38, %v2258
          %v2260 = vsel %vm2257, %v2259, %v2255
          %v2261 = vmul.f32 %v1803, %v2260
          %v2262 = vrcp.pop %v2106
          %v2263 = vmul.f32 %v2106, %v2262
          %v2264 = vsub.f32 1.0, %v2263
          %v2265 = vmul.f32 %v2262, %v2264
          %v2266 = vadd.f32 %v2262, %v2265
          %vm2267 = vweird.f32 %v2106
          %vm2268 = vweird.f32 %v2262
          %vm2269 = vmor %vm2267, %vm2268
          %v2270 = vsel %vm2269, %v2262, %v2266
          %v2271 = vand.u32 2147483647, %v2106
          %vm2272 = vcmp.eq.f32.partialorder %v2271, 8.507059e+37
          %v2273 = vand.u32 %v2106, 2147483648
          %v2274 = vor.u32 1.1754944e-38, %v2273
          %v2275 = vsel %vm2272, %v2274, %v2270
          %v2276 = vmul.f32 %v1806, %v2275
          %v2277 = vrcp.pop %v2107
          %v2278 = vmul.f32 %v2107, %v2277
          %v2279 = vsub.f32 1.0, %v2278
          %v2280 = vmul.f32 %v2277, %v2279
          %v2281 = vadd.f32 %v2277, %v2280
          %vm2282 = vweird.f32 %v2107
          %vm2283 = vweird.f32 %v2277
          %vm2284 = vmor %vm2282, %vm2283
          %v2285 = vsel %vm2284, %v2277, %v2281
          %v2286 = vand.u32 2147483647, %v2107
          %vm2287 = vcmp.eq.f32.partialorder %v2286, 8.507059e+37
          %v2288 = vand.u32 %v2107, 2147483648
          %v2289 = vor.u32 1.1754944e-38, %v2288
          %v2290 = vsel %vm2287, %v2289, %v2285
          %v2291 = vmul.f32 %v1809, %v2290
          %v2292 = vrcp.pop %v2108
          %v2293 = vmul.f32 %v2108, %v2292
          %v2294 = vsub.f32 1.0, %v2293
          %v2295 = vmul.f32 %v2292, %v2294
          %v2296 = vadd.f32 %v2292, %v2295
          %vm2297 = vweird.f32 %v2108
          %vm2298 = vweird.f32 %v2292
          %vm2299 = vmor %vm2297, %vm2298
          %v2300 = vsel %vm2299, %v2292, %v2296
          %v2301 = vand.u32 2147483647, %v2108
          %vm2302 = vcmp.eq.f32.partialorder %v2301, 8.507059e+37
          %v2303 = vand.u32 %v2108, 2147483648
          %v2304 = vor.u32 1.1754944e-38, %v2303
          %v2305 = vsel %vm2302, %v2304, %v2300
          %v2306 = vmul.f32 %v1812, %v2305
          %v2307 = vrcp.pop %v2109
          %v2308 = vmul.f32 %v2109, %v2307
          %v2309 = vsub.f32 1.0, %v2308
          %v2310 = vmul.f32 %v2307, %v2309
          %v2311 = vadd.f32 %v2307, %v2310
          %vm2312 = vweird.f32 %v2109
          %vm2313 = vweird.f32 %v2307
          %vm2314 = vmor %vm2312, %vm2313
          %v2315 = vsel %vm2314, %v2307, %v2311
          %v2316 = vand.u32 2147483647, %v2109
          %vm2317 = vcmp.eq.f32.partialorder %v2316, 8.507059e+37
          %v2318 = vand.u32 %v2109, 2147483648
          %v2319 = vor.u32 1.1754944e-38, %v2318
          %v2320 = vsel %vm2317, %v2319, %v2315
          %v2321 = vmul.f32 %v1815, %v2320
          %v2322 = vrcp.pop %v2110
          %v2323 = vmul.f32 %v2110, %v2322
          %v2324 = vsub.f32 1.0, %v2323
          %v2325 = vmul.f32 %v2322, %v2324
          %v2326 = vadd.f32 %v2322, %v2325
          %vm2327 = vweird.f32 %v2110
          %vm2328 = vweird.f32 %v2322
          %vm2329 = vmor %vm2327, %vm2328
          %v2330 = vsel %vm2329, %v2322, %v2326
          %v2331 = vand.u32 2147483647, %v2110
          %vm2332 = vcmp.eq.f32.partialorder %v2331, 8.507059e+37
          %v2333 = vand.u32 %v2110, 2147483648
          %v2334 = vor.u32 1.1754944e-38, %v2333
          %v2335 = vsel %vm2332, %v2334, %v2330
          %v2336 = vmul.f32 %v1818, %v2335
          %v2337 = vrcp.pop %v2111
          %v2338 = vmul.f32 %v2111, %v2337
          %v2339 = vsub.f32 1.0, %v2338
          %v2340 = vmul.f32 %v2337, %v2339
          %v2341 = vadd.f32 %v2337, %v2340
          %vm2342 = vweird.f32 %v2111
          %vm2343 = vweird.f32 %v2337
          %vm2344 = vmor %vm2342, %vm2343
          %v2345 = vsel %vm2344, %v2337, %v2341
          %v2346 = vand.u32 2147483647, %v2111
          %vm2347 = vcmp.eq.f32.partialorder %v2346, 8.507059e+37
          %v2348 = vand.u32 %v2111, 2147483648
          %v2349 = vor.u32 1.1754944e-38, %v2348
          %v2350 = vsel %vm2347, %v2349, %v2345
          %v2351 = vmul.f32 %v1821, %v2350
          %s2352 = smul.u32 %s45, 128
          %s2353 = scalar_lea.vmem [#allocation6], %s2352
          %vm2354 = vcmask 7168
          %2355 = vst.msk [vmem:[%s2353] sm:$0xff] %vm2354, %v1842
          %2356 = vst.msk [vmem:[%s2353 + $0x8] sm:$0xff] %vm2354, %v1845
          %2357 = vst.msk [vmem:[%s2353 + $0x10] sm:$0xff] %vm2354, %v1848
          %2358 = vst.msk [vmem:[%s2353 + $0x18] sm:$0xff] %vm2354, %v1851
          %2359 = vst.msk [vmem:[%s2353 + $0x20] sm:$0xff] %vm2354, %v1854
          %2360 = vst.msk [vmem:[%s2353 + $0x28] sm:$0xff] %vm2354, %v1857
          %2361 = vst.msk [vmem:[%s2353 + $0x30] sm:$0xff] %vm2354, %v1860
          %2362 = vst.msk [vmem:[%s2353 + $0x38] sm:$0xff] %vm2354, %v1863
          %2363 = vst.msk [vmem:[%s2353 + $0x40] sm:$0xff] %vm2354, %v1866
          %2364 = vst.msk [vmem:[%s2353 + $0x48] sm:$0xff] %vm2354, %v1869
          %2365 = vst.msk [vmem:[%s2353 + $0x50] sm:$0xff] %vm2354, %v1872
          %2366 = vst.msk [vmem:[%s2353 + $0x58] sm:$0xff] %vm2354, %v1875
          %2367 = vst.msk [vmem:[%s2353 + $0x60] sm:$0xff] %vm2354, %v1878
          %2368 = vst.msk [vmem:[%s2353 + $0x68] sm:$0xff] %vm2354, %v1881
          %2369 = vst.msk [vmem:[%s2353 + $0x70] sm:$0xff] %vm2354, %v1884
          %2370 = vst.msk [vmem:[%s2353 + $0x78] sm:$0xff] %vm2354, %v1887
          %s2371 = scalar_lea.vmem [#allocation7], %s2352
          %2372 = vst.msk [vmem:[%s2371] sm:$0xff] %vm1839, %v2126
          %2373 = vst.msk [vmem:[%s2371 + $0x8] sm:$0xff] %vm1839, %v2141
          %2374 = vst.msk [vmem:[%s2371 + $0x10] sm:$0xff] %vm1839, %v2156
          %2375 = vst.msk [vmem:[%s2371 + $0x18] sm:$0xff] %vm1839, %v2171
          %2376 = vst.msk [vmem:[%s2371 + $0x20] sm:$0xff] %vm1839, %v2186
          %2377 = vst.msk [vmem:[%s2371 + $0x28] sm:$0xff] %vm1839, %v2201
          %2378 = vst.msk [vmem:[%s2371 + $0x30] sm:$0xff] %vm1839, %v2216
          %2379 = vst.msk [vmem:[%s2371 + $0x38] sm:$0xff] %vm1839, %v2231
          %2380 = vst.msk [vmem:[%s2371 + $0x40] sm:$0xff] %vm1839, %v2246
          %2381 = vst.msk [vmem:[%s2371 + $0x48] sm:$0xff] %vm1839, %v2261
          %2382 = vst.msk [vmem:[%s2371 + $0x50] sm:$0xff] %vm1839, %v2276
          %2383 = vst.msk [vmem:[%s2371 + $0x58] sm:$0xff] %vm1839, %v2291
          %2384 = vst.msk [vmem:[%s2371 + $0x60] sm:$0xff] %vm1839, %v2306
          %2385 = vst.msk [vmem:[%s2371 + $0x68] sm:$0xff] %vm1839, %v2321
          %2386 = vst.msk [vmem:[%s2371 + $0x70] sm:$0xff] %vm1839, %v2336
          %2387 = vst.msk [vmem:[%s2371 + $0x78] sm:$0xff] %vm1839, %v2351
        $region144: #{equivariant_block_forward.1} parent=123 // pred_fallthru
          _
        %s2388 = smul.u32 %s45, 128
        %s2389 = scalar_lea.vmem [#allocation6], %s2388
        %v2390 = vld [vmem:[%s2389] sm:$0xff]
        %v2391 = vld [vmem:[%s2389 + $0x8] sm:$0xff]
        %v2392 = vld [vmem:[%s2389 + $0x10] sm:$0xff]
        %v2393 = vld [vmem:[%s2389 + $0x18] sm:$0xff]
        %v2394 = vld [vmem:[%s2389 + $0x20] sm:$0xff]
        %v2395 = vld [vmem:[%s2389 + $0x28] sm:$0xff]
        %v2396 = vld [vmem:[%s2389 + $0x30] sm:$0xff]
        %v2397 = vld [vmem:[%s2389 + $0x38] sm:$0xff]
        %v2398 = vld [vmem:[%s2389 + $0x40] sm:$0xff]
        %v2399 = vld [vmem:[%s2389 + $0x48] sm:$0xff]
        %v2400 = vld [vmem:[%s2389 + $0x50] sm:$0xff]
        %v2401 = vld [vmem:[%s2389 + $0x58] sm:$0xff]
        %v2402 = vld [vmem:[%s2389 + $0x60] sm:$0xff]
        %v2403 = vld [vmem:[%s2389 + $0x68] sm:$0xff]
        %v2404 = vld [vmem:[%s2389 + $0x70] sm:$0xff]
        %v2405 = vld [vmem:[%s2389 + $0x78] sm:$0xff]
        // Predicated region
        $region145: #{equivariant_block_forward.1} parent=123 // pred_check
          %p2406 = pneg %p1055
        $region146: #{equivariant_block_forward.1} parent=123 // pred_check_branch
          %2408 = sbr.rel (%p2406) target = $region148
        $region147: #{equivariant_block_forward.1} parent=123 // pred_region
          %v2409 = vld [vmem:[%s1020] sm:$0x3]
          %v2410 = vld [vmem:[%s1023] sm:$0x1]
          %v2412 = vperm.slane %v2410, 0
          %v2414 = vadd.f32 %v1509, %v2412
          %v2415 = vadd.f32 %v1511, %v2412
          %v2416 = vadd.f32 %v1514, %v2412
          %v2417 = vadd.f32 %v1516, %v2412
          %v2418 = vadd.f32 %v1519, %v2412
          %v2419 = vadd.f32 %v1521, %v2412
          %v2420 = vadd.f32 %v1524, %v2412
          %v2421 = vadd.f32 %v1526, %v2412
          %v2422 = vadd.f32 %v1529, %v2412
          %v2423 = vadd.f32 %v1531, %v2412
          %v2424 = vadd.f32 %v1534, %v2412
          %v2425 = vadd.f32 %v1536, %v2412
          %v2426 = vadd.f32 %v1539, %v2412
          %v2427 = vadd.f32 %v1541, %v2412
          %v2428 = vadd.f32 %v1544, %v2412
          %v2429 = vadd.f32 %v1546, %v2412
          %2431 = vset.pattern.permute.xlu0 0
          %2432 = vperm.xlu0 %2431, %v2390
          %v2433 = vpop.permute.xlu0 %2432
          %2436 = vset.pattern.permute.xlu0 0
          %2437 = vperm.xlu0 %2436, %v2391
          %v2438 = vpop.permute.xlu0 %2437
          %2441 = vset.pattern.permute.xlu0 0
          %2442 = vperm.xlu0 %2441, %v2392
          %v2443 = vpop.permute.xlu0 %2442
          %2446 = vset.pattern.permute.xlu0 0
          %2447 = vperm.xlu0 %2446, %v2393
          %v2448 = vpop.permute.xlu0 %2447
          %2451 = vset.pattern.permute.xlu0 0
          %2452 = vperm.xlu0 %2451, %v2394
          %v2453 = vpop.permute.xlu0 %2452
          %2456 = vset.pattern.permute.xlu0 0
          %2457 = vperm.xlu0 %2456, %v2395
          %v2458 = vpop.permute.xlu0 %2457
          %2461 = vset.pattern.permute.xlu0 0
          %2462 = vperm.xlu0 %2461, %v2396
          %v2463 = vpop.permute.xlu0 %2462
          %2466 = vset.pattern.permute.xlu0 0
          %2467 = vperm.xlu0 %2466, %v2397
          %v2468 = vpop.permute.xlu0 %2467
          %2471 = vset.pattern.permute.xlu0 0
          %2472 = vperm.xlu0 %2471, %v2398
          %v2473 = vpop.permute.xlu0 %2472
          %2476 = vset.pattern.permute.xlu0 0
          %2477 = vperm.xlu0 %2476, %v2399
          %v2478 = vpop.permute.xlu0 %2477
          %2481 = vset.pattern.permute.xlu0 0
          %2482 = vperm.xlu0 %2481, %v2400
          %v2483 = vpop.permute.xlu0 %2482
          %2486 = vset.pattern.permute.xlu0 0
          %2487 = vperm.xlu0 %2486, %v2401
          %v2488 = vpop.permute.xlu0 %2487
          %2491 = vset.pattern.permute.xlu0 0
          %2492 = vperm.xlu0 %2491, %v2402
          %v2493 = vpop.permute.xlu0 %2492
          %2496 = vset.pattern.permute.xlu0 0
          %2497 = vperm.xlu0 %2496, %v2403
          %v2498 = vpop.permute.xlu0 %2497
          %2501 = vset.pattern.permute.xlu0 0
          %2502 = vperm.xlu0 %2501, %v2404
          %v2503 = vpop.permute.xlu0 %2502
          %2506 = vset.pattern.permute.xlu0 0
          %2507 = vperm.xlu0 %2506, %v2405
          %v2508 = vpop.permute.xlu0 %2507
          %v2510 = vperm.slane %v2409, 0
          %v2511 = vmul.f32 %v2433, %v2510
          %v2512 = vmul.f32 %v2438, %v2510
          %v2513 = vmul.f32 %v2443, %v2510
          %v2514 = vmul.f32 %v2448, %v2510
          %v2515 = vmul.f32 %v2453, %v2510
          %v2516 = vmul.f32 %v2458, %v2510
          %v2517 = vmul.f32 %v2463, %v2510
          %v2518 = vmul.f32 %v2468, %v2510
          %v2519 = vmul.f32 %v2473, %v2510
          %v2520 = vmul.f32 %v2478, %v2510
          %v2521 = vmul.f32 %v2483, %v2510
          %v2522 = vmul.f32 %v2488, %v2510
          %v2523 = vmul.f32 %v2493, %v2510
          %v2524 = vmul.f32 %v2498, %v2510
          %v2525 = vmul.f32 %v2503, %v2510
          %v2526 = vmul.f32 %v2508, %v2510
          %v2527 = vadd.f32 %v2414, %v2511
          %v2528 = vadd.f32 %v2415, %v2512
          %v2529 = vadd.f32 %v2416, %v2513
          %v2530 = vadd.f32 %v2417, %v2514
          %v2531 = vadd.f32 %v2418, %v2515
          %v2532 = vadd.f32 %v2419, %v2516
          %v2533 = vadd.f32 %v2420, %v2517
          %v2534 = vadd.f32 %v2421, %v2518
          %v2535 = vadd.f32 %v2422, %v2519
          %v2536 = vadd.f32 %v2423, %v2520
          %v2537 = vadd.f32 %v2424, %v2521
          %v2538 = vadd.f32 %v2425, %v2522
          %v2539 = vadd.f32 %v2426, %v2523
          %v2540 = vadd.f32 %v2427, %v2524
          %v2541 = vadd.f32 %v2428, %v2525
          %v2542 = vadd.f32 %v2429, %v2526
          %2544 = vset.pattern.permute.xlu0 0
          %2545 = vperm.xlu0 %2544, %v1240
          %v2546 = vpop.permute.xlu0 %2545
          %2549 = vset.pattern.permute.xlu0 0
          %2550 = vperm.xlu0 %2549, %v1241
          %v2551 = vpop.permute.xlu0 %2550
          %2554 = vset.pattern.permute.xlu0 0
          %2555 = vperm.xlu0 %2554, %v1242
          %v2556 = vpop.permute.xlu0 %2555
          %2559 = vset.pattern.permute.xlu0 0
          %2560 = vperm.xlu0 %2559, %v1243
          %v2561 = vpop.permute.xlu0 %2560
          %2564 = vset.pattern.permute.xlu0 0
          %2565 = vperm.xlu0 %2564, %v1244
          %v2566 = vpop.permute.xlu0 %2565
          %2569 = vset.pattern.permute.xlu0 0
          %2570 = vperm.xlu0 %2569, %v1245
          %v2571 = vpop.permute.xlu0 %2570
          %2574 = vset.pattern.permute.xlu0 0
          %2575 = vperm.xlu0 %2574, %v1246
          %v2576 = vpop.permute.xlu0 %2575
          %2579 = vset.pattern.permute.xlu0 0
          %2580 = vperm.xlu0 %2579, %v1247
          %v2581 = vpop.permute.xlu0 %2580
          %2584 = vset.pattern.permute.xlu0 0
          %2585 = vperm.xlu0 %2584, %v1248
          %v2586 = vpop.permute.xlu0 %2585
          %2589 = vset.pattern.permute.xlu0 0
          %2590 = vperm.xlu0 %2589, %v1249
          %v2591 = vpop.permute.xlu0 %2590
          %2594 = vset.pattern.permute.xlu0 0
          %2595 = vperm.xlu0 %2594, %v1250
          %v2596 = vpop.permute.xlu0 %2595
          %2599 = vset.pattern.permute.xlu0 0
          %2600 = vperm.xlu0 %2599, %v1251
          %v2601 = vpop.permute.xlu0 %2600
          %2604 = vset.pattern.permute.xlu0 0
          %2605 = vperm.xlu0 %2604, %v1252
          %v2606 = vpop.permute.xlu0 %2605
          %2609 = vset.pattern.permute.xlu0 0
          %2610 = vperm.xlu0 %2609, %v1253
          %v2611 = vpop.permute.xlu0 %2610
          %2614 = vset.pattern.permute.xlu0 0
          %2615 = vperm.xlu0 %2614, %v1254
          %v2616 = vpop.permute.xlu0 %2615
          %2619 = vset.pattern.permute.xlu0 0
          %2620 = vperm.xlu0 %2619, %v1255
          %v2621 = vpop.permute.xlu0 %2620
          %v2623 = vperm.slane %v2409, 1
          %v2624 = vmul.f32 %v2546, %v2623
          %v2625 = vmul.f32 %v2551, %v2623
          %v2626 = vmul.f32 %v2556, %v2623
          %v2627 = vmul.f32 %v2561, %v2623
          %v2628 = vmul.f32 %v2566, %v2623
          %v2629 = vmul.f32 %v2571, %v2623
          %v2630 = vmul.f32 %v2576, %v2623
          %v2631 = vmul.f32 %v2581, %v2623
          %v2632 = vmul.f32 %v2586, %v2623
          %v2633 = vmul.f32 %v2591, %v2623
          %v2634 = vmul.f32 %v2596, %v2623
          %v2635 = vmul.f32 %v2601, %v2623
          %v2636 = vmul.f32 %v2606, %v2623
          %v2637 = vmul.f32 %v2611, %v2623
          %v2638 = vmul.f32 %v2616, %v2623
          %v2639 = vmul.f32 %v2621, %v2623
          %v2640 = vadd.f32 %v2527, %v2624
          %v2641 = vadd.f32 %v2528, %v2625
          %v2642 = vadd.f32 %v2529, %v2626
          %v2643 = vadd.f32 %v2530, %v2627
          %v2644 = vadd.f32 %v2531, %v2628
          %v2645 = vadd.f32 %v2532, %v2629
          %v2646 = vadd.f32 %v2533, %v2630
          %v2647 = vadd.f32 %v2534, %v2631
          %v2648 = vadd.f32 %v2535, %v2632
          %v2649 = vadd.f32 %v2536, %v2633
          %v2650 = vadd.f32 %v2537, %v2634
          %v2651 = vadd.f32 %v2538, %v2635
          %v2652 = vadd.f32 %v2539, %v2636
          %v2653 = vadd.f32 %v2540, %v2637
          %v2654 = vadd.f32 %v2541, %v2638
          %v2655 = vadd.f32 %v2542, %v2639
          %v2656 = vxor.u32 %v2640, 2147483648
          %v2657 = vxor.u32 %v2641, 2147483648
          %v2658 = vxor.u32 %v2642, 2147483648
          %v2659 = vxor.u32 %v2643, 2147483648
          %v2660 = vxor.u32 %v2644, 2147483648
          %v2661 = vxor.u32 %v2645, 2147483648
          %v2662 = vxor.u32 %v2646, 2147483648
          %v2663 = vxor.u32 %v2647, 2147483648
          %v2664 = vxor.u32 %v2648, 2147483648
          %v2665 = vxor.u32 %v2649, 2147483648
          %v2666 = vxor.u32 %v2650, 2147483648
          %v2667 = vxor.u32 %v2651, 2147483648
          %v2668 = vxor.u32 %v2652, 2147483648
          %v2669 = vxor.u32 %v2653, 2147483648
          %v2670 = vxor.u32 %v2654, 2147483648
          %v2671 = vxor.u32 %v2655, 2147483648
          %v2672 = vmul.f32 %v2656, 1.442695
          %v2673 = vpow.pop %v2672
          %v2674 = vmul.f32 %v2657, 1.442695
          %v2675 = vpow.pop %v2674
          %v2676 = vmul.f32 %v2658, 1.442695
          %v2677 = vpow.pop %v2676
          %v2678 = vmul.f32 %v2659, 1.442695
          %v2679 = vpow.pop %v2678
          %v2680 = vmul.f32 %v2660, 1.442695
          %v2681 = vpow.pop %v2680
          %v2682 = vmul.f32 %v2661, 1.442695
          %v2683 = vpow.pop %v2682
          %v2684 = vmul.f32 %v2662, 1.442695
          %v2685 = vpow.pop %v2684
          %v2686 = vmul.f32 %v2663, 1.442695
          %v2687 = vpow.pop %v2686
          %v2688 = vmul.f32 %v2664, 1.442695
          %v2689 = vpow.pop %v2688
          %v2690 = vmul.f32 %v2665, 1.442695
          %v2691 = vpow.pop %v2690
          %v2692 = vmul.f32 %v2666, 1.442695
          %v2693 = vpow.pop %v2692
          %v2694 = vmul.f32 %v2667, 1.442695
          %v2695 = vpow.pop %v2694
          %v2696 = vmul.f32 %v2668, 1.442695
          %v2697 = vpow.pop %v2696
          %v2698 = vmul.f32 %v2669, 1.442695
          %v2699 = vpow.pop %v2698
          %v2700 = vmul.f32 %v2670, 1.442695
          %v2701 = vpow.pop %v2700
          %v2702 = vmul.f32 %v2671, 1.442695
          %v2703 = vpow.pop %v2702
          %v2704 = vadd.f32 %v2673, 1.0
          %v2705 = vadd.f32 %v2675, 1.0
          %v2706 = vadd.f32 %v2677, 1.0
          %v2707 = vadd.f32 %v2679, 1.0
          %v2708 = vadd.f32 %v2681, 1.0
          %v2709 = vadd.f32 %v2683, 1.0
          %v2710 = vadd.f32 %v2685, 1.0
          %v2711 = vadd.f32 %v2687, 1.0
          %v2712 = vadd.f32 %v2689, 1.0
          %v2713 = vadd.f32 %v2691, 1.0
          %v2714 = vadd.f32 %v2693, 1.0
          %v2715 = vadd.f32 %v2695, 1.0
          %v2716 = vadd.f32 %v2697, 1.0
          %v2717 = vadd.f32 %v2699, 1.0
          %v2718 = vadd.f32 %v2701, 1.0
          %v2719 = vadd.f32 %v2703, 1.0
          %v2720 = vrcp.pop %v2704
          %v2721 = vmul.f32 %v2704, %v2720
          %v2722 = vsub.f32 1.0, %v2721
          %v2723 = vmul.f32 %v2720, %v2722
          %v2724 = vadd.f32 %v2720, %v2723
          %vm2725 = vweird.f32 %v2704
          %vm2726 = vweird.f32 %v2720
          %vm2727 = vmor %vm2725, %vm2726
          %v2728 = vsel %vm2727, %v2720, %v2724
          %v2729 = vand.u32 2147483647, %v2704
          %vm2730 = vcmp.eq.f32.partialorder %v2729, 8.507059e+37
          %v2731 = vand.u32 %v2704, 2147483648
          %v2732 = vor.u32 1.1754944e-38, %v2731
          %v2733 = vsel %vm2730, %v2732, %v2728
          %v2734 = vmul.f32 1.0, %v2733
          %v2735 = vrcp.pop %v2705
          %v2736 = vmul.f32 %v2705, %v2735
          %v2737 = vsub.f32 1.0, %v2736
          %v2738 = vmul.f32 %v2735, %v2737
          %v2739 = vadd.f32 %v2735, %v2738
          %vm2740 = vweird.f32 %v2705
          %vm2741 = vweird.f32 %v2735
          %vm2742 = vmor %vm2740, %vm2741
          %v2743 = vsel %vm2742, %v2735, %v2739
          %v2744 = vand.u32 2147483647, %v2705
          %vm2745 = vcmp.eq.f32.partialorder %v2744, 8.507059e+37
          %v2746 = vand.u32 %v2705, 2147483648
          %v2747 = vor.u32 1.1754944e-38, %v2746
          %v2748 = vsel %vm2745, %v2747, %v2743
          %v2749 = vmul.f32 1.0, %v2748
          %v2750 = vrcp.pop %v2706
          %v2751 = vmul.f32 %v2706, %v2750
          %v2752 = vsub.f32 1.0, %v2751
          %v2753 = vmul.f32 %v2750, %v2752
          %v2754 = vadd.f32 %v2750, %v2753
          %vm2755 = vweird.f32 %v2706
          %vm2756 = vweird.f32 %v2750
          %vm2757 = vmor %vm2755, %vm2756
          %v2758 = vsel %vm2757, %v2750, %v2754
          %v2759 = vand.u32 2147483647, %v2706
          %vm2760 = vcmp.eq.f32.partialorder %v2759, 8.507059e+37
          %v2761 = vand.u32 %v2706, 2147483648
          %v2762 = vor.u32 1.1754944e-38, %v2761
          %v2763 = vsel %vm2760, %v2762, %v2758
          %v2764 = vmul.f32 1.0, %v2763
          %v2765 = vrcp.pop %v2707
          %v2766 = vmul.f32 %v2707, %v2765
          %v2767 = vsub.f32 1.0, %v2766
          %v2768 = vmul.f32 %v2765, %v2767
          %v2769 = vadd.f32 %v2765, %v2768
          %vm2770 = vweird.f32 %v2707
          %vm2771 = vweird.f32 %v2765
          %vm2772 = vmor %vm2770, %vm2771
          %v2773 = vsel %vm2772, %v2765, %v2769
          %v2774 = vand.u32 2147483647, %v2707
          %vm2775 = vcmp.eq.f32.partialorder %v2774, 8.507059e+37
          %v2776 = vand.u32 %v2707, 2147483648
          %v2777 = vor.u32 1.1754944e-38, %v2776
          %v2778 = vsel %vm2775, %v2777, %v2773
          %v2779 = vmul.f32 1.0, %v2778
          %v2780 = vrcp.pop %v2708
          %v2781 = vmul.f32 %v2708, %v2780
          %v2782 = vsub.f32 1.0, %v2781
          %v2783 = vmul.f32 %v2780, %v2782
          %v2784 = vadd.f32 %v2780, %v2783
          %vm2785 = vweird.f32 %v2708
          %vm2786 = vweird.f32 %v2780
          %vm2787 = vmor %vm2785, %vm2786
          %v2788 = vsel %vm2787, %v2780, %v2784
          %v2789 = vand.u32 2147483647, %v2708
          %vm2790 = vcmp.eq.f32.partialorder %v2789, 8.507059e+37
          %v2791 = vand.u32 %v2708, 2147483648
          %v2792 = vor.u32 1.1754944e-38, %v2791
          %v2793 = vsel %vm2790, %v2792, %v2788
          %v2794 = vmul.f32 1.0, %v2793
          %v2795 = vrcp.pop %v2709
          %v2796 = vmul.f32 %v2709, %v2795
          %v2797 = vsub.f32 1.0, %v2796
          %v2798 = vmul.f32 %v2795, %v2797
          %v2799 = vadd.f32 %v2795, %v2798
          %vm2800 = vweird.f32 %v2709
          %vm2801 = vweird.f32 %v2795
          %vm2802 = vmor %vm2800, %vm2801
          %v2803 = vsel %vm2802, %v2795, %v2799
          %v2804 = vand.u32 2147483647, %v2709
          %vm2805 = vcmp.eq.f32.partialorder %v2804, 8.507059e+37
          %v2806 = vand.u32 %v2709, 2147483648
          %v2807 = vor.u32 1.1754944e-38, %v2806
          %v2808 = vsel %vm2805, %v2807, %v2803
          %v2809 = vmul.f32 1.0, %v2808
          %v2810 = vrcp.pop %v2710
          %v2811 = vmul.f32 %v2710, %v2810
          %v2812 = vsub.f32 1.0, %v2811
          %v2813 = vmul.f32 %v2810, %v2812
          %v2814 = vadd.f32 %v2810, %v2813
          %vm2815 = vweird.f32 %v2710
          %vm2816 = vweird.f32 %v2810
          %vm2817 = vmor %vm2815, %vm2816
          %v2818 = vsel %vm2817, %v2810, %v2814
          %v2819 = vand.u32 2147483647, %v2710
          %vm2820 = vcmp.eq.f32.partialorder %v2819, 8.507059e+37
          %v2821 = vand.u32 %v2710, 2147483648
          %v2822 = vor.u32 1.1754944e-38, %v2821
          %v2823 = vsel %vm2820, %v2822, %v2818
          %v2824 = vmul.f32 1.0, %v2823
          %v2825 = vrcp.pop %v2711
          %v2826 = vmul.f32 %v2711, %v2825
          %v2827 = vsub.f32 1.0, %v2826
          %v2828 = vmul.f32 %v2825, %v2827
          %v2829 = vadd.f32 %v2825, %v2828
          %vm2830 = vweird.f32 %v2711
          %vm2831 = vweird.f32 %v2825
          %vm2832 = vmor %vm2830, %vm2831
          %v2833 = vsel %vm2832, %v2825, %v2829
          %v2834 = vand.u32 2147483647, %v2711
          %vm2835 = vcmp.eq.f32.partialorder %v2834, 8.507059e+37
          %v2836 = vand.u32 %v2711, 2147483648
          %v2837 = vor.u32 1.1754944e-38, %v2836
          %v2838 = vsel %vm2835, %v2837, %v2833
          %v2839 = vmul.f32 1.0, %v2838
          %v2840 = vrcp.pop %v2712
          %v2841 = vmul.f32 %v2712, %v2840
          %v2842 = vsub.f32 1.0, %v2841
          %v2843 = vmul.f32 %v2840, %v2842
          %v2844 = vadd.f32 %v2840, %v2843
          %vm2845 = vweird.f32 %v2712
          %vm2846 = vweird.f32 %v2840
          %vm2847 = vmor %vm2845, %vm2846
          %v2848 = vsel %vm2847, %v2840, %v2844
          %v2849 = vand.u32 2147483647, %v2712
          %vm2850 = vcmp.eq.f32.partialorder %v2849, 8.507059e+37
          %v2851 = vand.u32 %v2712, 2147483648
          %v2852 = vor.u32 1.1754944e-38, %v2851
          %v2853 = vsel %vm2850, %v2852, %v2848
          %v2854 = vmul.f32 1.0, %v2853
          %v2855 = vrcp.pop %v2713
          %v2856 = vmul.f32 %v2713, %v2855
          %v2857 = vsub.f32 1.0, %v2856
          %v2858 = vmul.f32 %v2855, %v2857
          %v2859 = vadd.f32 %v2855, %v2858
          %vm2860 = vweird.f32 %v2713
          %vm2861 = vweird.f32 %v2855
          %vm2862 = vmor %vm2860, %vm2861
          %v2863 = vsel %vm2862, %v2855, %v2859
          %v2864 = vand.u32 2147483647, %v2713
          %vm2865 = vcmp.eq.f32.partialorder %v2864, 8.507059e+37
          %v2866 = vand.u32 %v2713, 2147483648
          %v2867 = vor.u32 1.1754944e-38, %v2866
          %v2868 = vsel %vm2865, %v2867, %v2863
          %v2869 = vmul.f32 1.0, %v2868
          %v2870 = vrcp.pop %v2714
          %v2871 = vmul.f32 %v2714, %v2870
          %v2872 = vsub.f32 1.0, %v2871
          %v2873 = vmul.f32 %v2870, %v2872
          %v2874 = vadd.f32 %v2870, %v2873
          %vm2875 = vweird.f32 %v2714
          %vm2876 = vweird.f32 %v2870
          %vm2877 = vmor %vm2875, %vm2876
          %v2878 = vsel %vm2877, %v2870, %v2874
          %v2879 = vand.u32 2147483647, %v2714
          %vm2880 = vcmp.eq.f32.partialorder %v2879, 8.507059e+37
          %v2881 = vand.u32 %v2714, 2147483648
          %v2882 = vor.u32 1.1754944e-38, %v2881
          %v2883 = vsel %vm2880, %v2882, %v2878
          %v2884 = vmul.f32 1.0, %v2883
          %v2885 = vrcp.pop %v2715
          %v2886 = vmul.f32 %v2715, %v2885
          %v2887 = vsub.f32 1.0, %v2886
          %v2888 = vmul.f32 %v2885, %v2887
          %v2889 = vadd.f32 %v2885, %v2888
          %vm2890 = vweird.f32 %v2715
          %vm2891 = vweird.f32 %v2885
          %vm2892 = vmor %vm2890, %vm2891
          %v2893 = vsel %vm2892, %v2885, %v2889
          %v2894 = vand.u32 2147483647, %v2715
          %vm2895 = vcmp.eq.f32.partialorder %v2894, 8.507059e+37
          %v2896 = vand.u32 %v2715, 2147483648
          %v2897 = vor.u32 1.1754944e-38, %v2896
          %v2898 = vsel %vm2895, %v2897, %v2893
          %v2899 = vmul.f32 1.0, %v2898
          %v2900 = vrcp.pop %v2716
          %v2901 = vmul.f32 %v2716, %v2900
          %v2902 = vsub.f32 1.0, %v2901
          %v2903 = vmul.f32 %v2900, %v2902
          %v2904 = vadd.f32 %v2900, %v2903
          %vm2905 = vweird.f32 %v2716
          %vm2906 = vweird.f32 %v2900
          %vm2907 = vmor %vm2905, %vm2906
          %v2908 = vsel %vm2907, %v2900, %v2904
          %v2909 = vand.u32 2147483647, %v2716
          %vm2910 = vcmp.eq.f32.partialorder %v2909, 8.507059e+37
          %v2911 = vand.u32 %v2716, 2147483648
          %v2912 = vor.u32 1.1754944e-38, %v2911
          %v2913 = vsel %vm2910, %v2912, %v2908
          %v2914 = vmul.f32 1.0, %v2913
          %v2915 = vrcp.pop %v2717
          %v2916 = vmul.f32 %v2717, %v2915
          %v2917 = vsub.f32 1.0, %v2916
          %v2918 = vmul.f32 %v2915, %v2917
          %v2919 = vadd.f32 %v2915, %v2918
          %vm2920 = vweird.f32 %v2717
          %vm2921 = vweird.f32 %v2915
          %vm2922 = vmor %vm2920, %vm2921
          %v2923 = vsel %vm2922, %v2915, %v2919
          %v2924 = vand.u32 2147483647, %v2717
          %vm2925 = vcmp.eq.f32.partialorder %v2924, 8.507059e+37
          %v2926 = vand.u32 %v2717, 2147483648
          %v2927 = vor.u32 1.1754944e-38, %v2926
          %v2928 = vsel %vm2925, %v2927, %v2923
          %v2929 = vmul.f32 1.0, %v2928
          %v2930 = vrcp.pop %v2718
          %v2931 = vmul.f32 %v2718, %v2930
          %v2932 = vsub.f32 1.0, %v2931
          %v2933 = vmul.f32 %v2930, %v2932
          %v2934 = vadd.f32 %v2930, %v2933
          %vm2935 = vweird.f32 %v2718
          %vm2936 = vweird.f32 %v2930
          %vm2937 = vmor %vm2935, %vm2936
          %v2938 = vsel %vm2937, %v2930, %v2934
          %v2939 = vand.u32 2147483647, %v2718
          %vm2940 = vcmp.eq.f32.partialorder %v2939, 8.507059e+37
          %v2941 = vand.u32 %v2718, 2147483648
          %v2942 = vor.u32 1.1754944e-38, %v2941
          %v2943 = vsel %vm2940, %v2942, %v2938
          %v2944 = vmul.f32 1.0, %v2943
          %v2945 = vrcp.pop %v2719
          %v2946 = vmul.f32 %v2719, %v2945
          %v2947 = vsub.f32 1.0, %v2946
          %v2948 = vmul.f32 %v2945, %v2947
          %v2949 = vadd.f32 %v2945, %v2948
          %vm2950 = vweird.f32 %v2719
          %vm2951 = vweird.f32 %v2945
          %vm2952 = vmor %vm2950, %vm2951
          %v2953 = vsel %vm2952, %v2945, %v2949
          %v2954 = vand.u32 2147483647, %v2719
          %vm2955 = vcmp.eq.f32.partialorder %v2954, 8.507059e+37
          %v2956 = vand.u32 %v2719, 2147483648
          %v2957 = vor.u32 1.1754944e-38, %v2956
          %v2958 = vsel %vm2955, %v2957, %v2953
          %v2959 = vmul.f32 1.0, %v2958
          %v2960 = vmul.f32 %v2640, %v2734
          %v2961 = vmul.f32 %v2641, %v2749
          %v2962 = vmul.f32 %v2642, %v2764
          %v2963 = vmul.f32 %v2643, %v2779
          %v2964 = vmul.f32 %v2644, %v2794
          %v2965 = vmul.f32 %v2645, %v2809
          %v2966 = vmul.f32 %v2646, %v2824
          %v2967 = vmul.f32 %v2647, %v2839
          %v2968 = vmul.f32 %v2648, %v2854
          %v2969 = vmul.f32 %v2649, %v2869
          %v2970 = vmul.f32 %v2650, %v2884
          %v2971 = vmul.f32 %v2651, %v2899
          %v2972 = vmul.f32 %v2652, %v2914
          %v2973 = vmul.f32 %v2653, %v2929
          %v2974 = vmul.f32 %v2654, %v2944
          %v2975 = vmul.f32 %v2655, %v2959
          %v2976 = vld [vmem:[%s1028] sm:$0xff]
          %v2977 = vld [vmem:[%s1028 + $0x8] sm:$0xff]
          %v2978 = vld [vmem:[%s1028 + $0x10] sm:$0xff]
          %v2979 = vld [vmem:[%s1028 + $0x18] sm:$0xff]
          %v2980 = vld [vmem:[%s1031] sm:$0x1]
          %v2982 = vperm.slane %v2980, 0
          %v2985 = vsel %vm1474, %v2960, 0
          %v2988 = vsel %vm1474, %v2961, 0
          %v2991 = vsel %vm1474, %v2962, 0
          %v2994 = vsel %vm1474, %v2963, 0
          %v2997 = vsel %vm1474, %v2964, 0
          %v3000 = vsel %vm1474, %v2965, 0
          %v3003 = vsel %vm1474, %v2966, 0
          %v3006 = vsel %vm1474, %v2967, 0
          %v3009 = vsel %vm1474, %v2968, 0
          %v3012 = vsel %vm1474, %v2969, 0
          %v3015 = vsel %vm1474, %v2970, 0
          %v3018 = vsel %vm1474, %v2971, 0
          %v3021 = vsel %vm1474, %v2972, 0
          %v3024 = vsel %vm1474, %v2973, 0
          %v3027 = vsel %vm1474, %v2974, 0
          %v3030 = vsel %vm1474, %v2975, 0
          %3032 = vmatpush.msra.mxu0 0.0
          %3033 = vmatpush.msra.mxu0 0.0
          %3034 = vmatpush.msra.mxu0 0.0
          %3035 = vmatpush.msra.mxu0 0.0
          %3036 = vmatpush.msra.mxu0 0.0
          %3037 = vmatpush.msra.mxu0 0.0
          %3038 = vmatpush.msra.mxu0 0.0
          %3039 = vmatpush.msra.mxu0 0.0
          %3040 = vmatpush.msra.mxu0 0.0
          %3041 = vmatpush.msra.mxu0 0.0
          %3042 = vmatpush.msra.mxu0 0.0
          %3043 = vmatpush.msra.mxu0 0.0
          %3044 = vmatpush.msra.mxu0 %v2979
          %3045 = vmatpush.msra.mxu0 %v2978
          %3046 = vmatpush.msra.mxu0 %v2977
          %3047 = vmatpush.msra.mxu0 %v2976
          %3048 = vmatmul.f32.gmra.mxu0 %v2985
          %v3049 = vpop.f32.mrf.mxu0
          %v3050 = vadd.f32 %v2982, %v3049
          %3051 = vmatmul.f32.gmra.mxu0 %v2988
          %v3052 = vpop.f32.mrf.mxu0
          %v3053 = vadd.f32 %v2982, %v3052
          %3054 = vmatmul.f32.gmra.mxu0 %v2991
          %v3055 = vpop.f32.mrf.mxu0
          %v3056 = vadd.f32 %v2982, %v3055
          %3057 = vmatmul.f32.gmra.mxu0 %v2994
          %v3058 = vpop.f32.mrf.mxu0
          %v3059 = vadd.f32 %v2982, %v3058
          %3060 = vmatmul.f32.gmra.mxu0 %v2997
          %v3061 = vpop.f32.mrf.mxu0
          %v3062 = vadd.f32 %v2982, %v3061
          %3063 = vmatmul.f32.gmra.mxu0 %v3000
          %v3064 = vpop.f32.mrf.mxu0
          %v3065 = vadd.f32 %v2982, %v3064
          %3066 = vmatmul.f32.gmra.mxu0 %v3003
          %v3067 = vpop.f32.mrf.mxu0
          %v3068 = vadd.f32 %v2982, %v3067
          %3069 = vmatmul.f32.gmra.mxu0 %v3006
          %v3070 = vpop.f32.mrf.mxu0
          %v3071 = vadd.f32 %v2982, %v3070
          %3072 = vmatmul.f32.gmra.mxu0 %v3009
          %v3073 = vpop.f32.mrf.mxu0
          %v3074 = vadd.f32 %v2982, %v3073
          %3075 = vmatmul.f32.gmra.mxu0 %v3012
          %v3076 = vpop.f32.mrf.mxu0
          %v3077 = vadd.f32 %v2982, %v3076
          %3078 = vmatmul.f32.gmra.mxu0 %v3015
          %v3079 = vpop.f32.mrf.mxu0
          %v3080 = vadd.f32 %v2982, %v3079
          %3081 = vmatmul.f32.gmra.mxu0 %v3018
          %v3082 = vpop.f32.mrf.mxu0
          %v3083 = vadd.f32 %v2982, %v3082
          %3084 = vmatmul.f32.gmra.mxu0 %v3021
          %v3085 = vpop.f32.mrf.mxu0
          %v3086 = vadd.f32 %v2982, %v3085
          %3087 = vmatmul.f32.gmra.mxu0 %v3024
          %v3088 = vpop.f32.mrf.mxu0
          %v3089 = vadd.f32 %v2982, %v3088
          %3090 = vmatmul.f32.gmra.mxu0 %v3027
          %v3091 = vpop.f32.mrf.mxu0
          %v3092 = vadd.f32 %v2982, %v3091
          %3093 = vmatmul.f32.gmra.mxu0 %v3030
          %v3094 = vpop.f32.mrf.mxu0
          %v3095 = vadd.f32 %v2982, %v3094
          %3096 = vdwg.mxu0
          %v3097 = vxor.u32 %v3050, 2147483648
          %v3098 = vxor.u32 %v3053, 2147483648
          %v3099 = vxor.u32 %v3056, 2147483648
          %v3100 = vxor.u32 %v3059, 2147483648
          %v3101 = vxor.u32 %v3062, 2147483648
          %v3102 = vxor.u32 %v3065, 2147483648
          %v3103 = vxor.u32 %v3068, 2147483648
          %v3104 = vxor.u32 %v3071, 2147483648
          %v3105 = vxor.u32 %v3074, 2147483648
          %v3106 = vxor.u32 %v3077, 2147483648
          %v3107 = vxor.u32 %v3080, 2147483648
          %v3108 = vxor.u32 %v3083, 2147483648
          %v3109 = vxor.u32 %v3086, 2147483648
          %v3110 = vxor.u32 %v3089, 2147483648
          %v3111 = vxor.u32 %v3092, 2147483648
          %v3112 = vxor.u32 %v3095, 2147483648
          %v3113 = vmul.f32 %v3097, 1.442695
          %v3114 = vpow.pop %v3113
          %v3115 = vmul.f32 %v3098, 1.442695
          %v3116 = vpow.pop %v3115
          %v3117 = vmul.f32 %v3099, 1.442695
          %v3118 = vpow.pop %v3117
          %v3119 = vmul.f32 %v3100, 1.442695
          %v3120 = vpow.pop %v3119
          %v3121 = vmul.f32 %v3101, 1.442695
          %v3122 = vpow.pop %v3121
          %v3123 = vmul.f32 %v3102, 1.442695
          %v3124 = vpow.pop %v3123
          %v3125 = vmul.f32 %v3103, 1.442695
          %v3126 = vpow.pop %v3125
          %v3127 = vmul.f32 %v3104, 1.442695
          %v3128 = vpow.pop %v3127
          %v3129 = vmul.f32 %v3105, 1.442695
          %v3130 = vpow.pop %v3129
          %v3131 = vmul.f32 %v3106, 1.442695
          %v3132 = vpow.pop %v3131
          %v3133 = vmul.f32 %v3107, 1.442695
          %v3134 = vpow.pop %v3133
          %v3135 = vmul.f32 %v3108, 1.442695
          %v3136 = vpow.pop %v3135
          %v3137 = vmul.f32 %v3109, 1.442695
          %v3138 = vpow.pop %v3137
          %v3139 = vmul.f32 %v3110, 1.442695
          %v3140 = vpow.pop %v3139
          %v3141 = vmul.f32 %v3111, 1.442695
          %v3142 = vpow.pop %v3141
          %v3143 = vmul.f32 %v3112, 1.442695
          %v3144 = vpow.pop %v3143
          %v3145 = vadd.f32 %v3114, 1.0
          %v3146 = vadd.f32 %v3116, 1.0
          %v3147 = vadd.f32 %v3118, 1.0
          %v3148 = vadd.f32 %v3120, 1.0
          %v3149 = vadd.f32 %v3122, 1.0
          %v3150 = vadd.f32 %v3124, 1.0
          %v3151 = vadd.f32 %v3126, 1.0
          %v3152 = vadd.f32 %v3128, 1.0
          %v3153 = vadd.f32 %v3130, 1.0
          %v3154 = vadd.f32 %v3132, 1.0
          %v3155 = vadd.f32 %v3134, 1.0
          %v3156 = vadd.f32 %v3136, 1.0
          %v3157 = vadd.f32 %v3138, 1.0
          %v3158 = vadd.f32 %v3140, 1.0
          %v3159 = vadd.f32 %v3142, 1.0
          %v3160 = vadd.f32 %v3144, 1.0
          %v3161 = vrcp.pop %v3145
          %v3162 = vmul.f32 %v3145, %v3161
          %v3163 = vsub.f32 1.0, %v3162
          %v3164 = vmul.f32 %v3161, %v3163
          %v3165 = vadd.f32 %v3161, %v3164
          %vm3166 = vweird.f32 %v3145
          %vm3167 = vweird.f32 %v3161
          %vm3168 = vmor %vm3166, %vm3167
          %v3169 = vsel %vm3168, %v3161, %v3165
          %v3170 = vand.u32 2147483647, %v3145
          %vm3171 = vcmp.eq.f32.partialorder %v3170, 8.507059e+37
          %v3172 = vand.u32 %v3145, 2147483648
          %v3173 = vor.u32 1.1754944e-38, %v3172
          %v3174 = vsel %vm3171, %v3173, %v3169
          %v3175 = vmul.f32 1.0, %v3174
          %v3176 = vrcp.pop %v3146
          %v3177 = vmul.f32 %v3146, %v3176
          %v3178 = vsub.f32 1.0, %v3177
          %v3179 = vmul.f32 %v3176, %v3178
          %v3180 = vadd.f32 %v3176, %v3179
          %vm3181 = vweird.f32 %v3146
          %vm3182 = vweird.f32 %v3176
          %vm3183 = vmor %vm3181, %vm3182
          %v3184 = vsel %vm3183, %v3176, %v3180
          %v3185 = vand.u32 2147483647, %v3146
          %vm3186 = vcmp.eq.f32.partialorder %v3185, 8.507059e+37
          %v3187 = vand.u32 %v3146, 2147483648
          %v3188 = vor.u32 1.1754944e-38, %v3187
          %v3189 = vsel %vm3186, %v3188, %v3184
          %v3190 = vmul.f32 1.0, %v3189
          %v3191 = vrcp.pop %v3147
          %v3192 = vmul.f32 %v3147, %v3191
          %v3193 = vsub.f32 1.0, %v3192
          %v3194 = vmul.f32 %v3191, %v3193
          %v3195 = vadd.f32 %v3191, %v3194
          %vm3196 = vweird.f32 %v3147
          %vm3197 = vweird.f32 %v3191
          %vm3198 = vmor %vm3196, %vm3197
          %v3199 = vsel %vm3198, %v3191, %v3195
          %v3200 = vand.u32 2147483647, %v3147
          %vm3201 = vcmp.eq.f32.partialorder %v3200, 8.507059e+37
          %v3202 = vand.u32 %v3147, 2147483648
          %v3203 = vor.u32 1.1754944e-38, %v3202
          %v3204 = vsel %vm3201, %v3203, %v3199
          %v3205 = vmul.f32 1.0, %v3204
          %v3206 = vrcp.pop %v3148
          %v3207 = vmul.f32 %v3148, %v3206
          %v3208 = vsub.f32 1.0, %v3207
          %v3209 = vmul.f32 %v3206, %v3208
          %v3210 = vadd.f32 %v3206, %v3209
          %vm3211 = vweird.f32 %v3148
          %vm3212 = vweird.f32 %v3206
          %vm3213 = vmor %vm3211, %vm3212
          %v3214 = vsel %vm3213, %v3206, %v3210
          %v3215 = vand.u32 2147483647, %v3148
          %vm3216 = vcmp.eq.f32.partialorder %v3215, 8.507059e+37
          %v3217 = vand.u32 %v3148, 2147483648
          %v3218 = vor.u32 1.1754944e-38, %v3217
          %v3219 = vsel %vm3216, %v3218, %v3214
          %v3220 = vmul.f32 1.0, %v3219
          %v3221 = vrcp.pop %v3149
          %v3222 = vmul.f32 %v3149, %v3221
          %v3223 = vsub.f32 1.0, %v3222
          %v3224 = vmul.f32 %v3221, %v3223
          %v3225 = vadd.f32 %v3221, %v3224
          %vm3226 = vweird.f32 %v3149
          %vm3227 = vweird.f32 %v3221
          %vm3228 = vmor %vm3226, %vm3227
          %v3229 = vsel %vm3228, %v3221, %v3225
          %v3230 = vand.u32 2147483647, %v3149
          %vm3231 = vcmp.eq.f32.partialorder %v3230, 8.507059e+37
          %v3232 = vand.u32 %v3149, 2147483648
          %v3233 = vor.u32 1.1754944e-38, %v3232
          %v3234 = vsel %vm3231, %v3233, %v3229
          %v3235 = vmul.f32 1.0, %v3234
          %v3236 = vrcp.pop %v3150
          %v3237 = vmul.f32 %v3150, %v3236
          %v3238 = vsub.f32 1.0, %v3237
          %v3239 = vmul.f32 %v3236, %v3238
          %v3240 = vadd.f32 %v3236, %v3239
          %vm3241 = vweird.f32 %v3150
          %vm3242 = vweird.f32 %v3236
          %vm3243 = vmor %vm3241, %vm3242
          %v3244 = vsel %vm3243, %v3236, %v3240
          %v3245 = vand.u32 2147483647, %v3150
          %vm3246 = vcmp.eq.f32.partialorder %v3245, 8.507059e+37
          %v3247 = vand.u32 %v3150, 2147483648
          %v3248 = vor.u32 1.1754944e-38, %v3247
          %v3249 = vsel %vm3246, %v3248, %v3244
          %v3250 = vmul.f32 1.0, %v3249
          %v3251 = vrcp.pop %v3151
          %v3252 = vmul.f32 %v3151, %v3251
          %v3253 = vsub.f32 1.0, %v3252
          %v3254 = vmul.f32 %v3251, %v3253
          %v3255 = vadd.f32 %v3251, %v3254
          %vm3256 = vweird.f32 %v3151
          %vm3257 = vweird.f32 %v3251
          %vm3258 = vmor %vm3256, %vm3257
          %v3259 = vsel %vm3258, %v3251, %v3255
          %v3260 = vand.u32 2147483647, %v3151
          %vm3261 = vcmp.eq.f32.partialorder %v3260, 8.507059e+37
          %v3262 = vand.u32 %v3151, 2147483648
          %v3263 = vor.u32 1.1754944e-38, %v3262
          %v3264 = vsel %vm3261, %v3263, %v3259
          %v3265 = vmul.f32 1.0, %v3264
          %v3266 = vrcp.pop %v3152
          %v3267 = vmul.f32 %v3152, %v3266
          %v3268 = vsub.f32 1.0, %v3267
          %v3269 = vmul.f32 %v3266, %v3268
          %v3270 = vadd.f32 %v3266, %v3269
          %vm3271 = vweird.f32 %v3152
          %vm3272 = vweird.f32 %v3266
          %vm3273 = vmor %vm3271, %vm3272
          %v3274 = vsel %vm3273, %v3266, %v3270
          %v3275 = vand.u32 2147483647, %v3152
          %vm3276 = vcmp.eq.f32.partialorder %v3275, 8.507059e+37
          %v3277 = vand.u32 %v3152, 2147483648
          %v3278 = vor.u32 1.1754944e-38, %v3277
          %v3279 = vsel %vm3276, %v3278, %v3274
          %v3280 = vmul.f32 1.0, %v3279
          %v3281 = vrcp.pop %v3153
          %v3282 = vmul.f32 %v3153, %v3281
          %v3283 = vsub.f32 1.0, %v3282
          %v3284 = vmul.f32 %v3281, %v3283
          %v3285 = vadd.f32 %v3281, %v3284
          %vm3286 = vweird.f32 %v3153
          %vm3287 = vweird.f32 %v3281
          %vm3288 = vmor %vm3286, %vm3287
          %v3289 = vsel %vm3288, %v3281, %v3285
          %v3290 = vand.u32 2147483647, %v3153
          %vm3291 = vcmp.eq.f32.partialorder %v3290, 8.507059e+37
          %v3292 = vand.u32 %v3153, 2147483648
          %v3293 = vor.u32 1.1754944e-38, %v3292
          %v3294 = vsel %vm3291, %v3293, %v3289
          %v3295 = vmul.f32 1.0, %v3294
          %v3296 = vrcp.pop %v3154
          %v3297 = vmul.f32 %v3154, %v3296
          %v3298 = vsub.f32 1.0, %v3297
          %v3299 = vmul.f32 %v3296, %v3298
          %v3300 = vadd.f32 %v3296, %v3299
          %vm3301 = vweird.f32 %v3154
          %vm3302 = vweird.f32 %v3296
          %vm3303 = vmor %vm3301, %vm3302
          %v3304 = vsel %vm3303, %v3296, %v3300
          %v3305 = vand.u32 2147483647, %v3154
          %vm3306 = vcmp.eq.f32.partialorder %v3305, 8.507059e+37
          %v3307 = vand.u32 %v3154, 2147483648
          %v3308 = vor.u32 1.1754944e-38, %v3307
          %v3309 = vsel %vm3306, %v3308, %v3304
          %v3310 = vmul.f32 1.0, %v3309
          %v3311 = vrcp.pop %v3155
          %v3312 = vmul.f32 %v3155, %v3311
          %v3313 = vsub.f32 1.0, %v3312
          %v3314 = vmul.f32 %v3311, %v3313
          %v3315 = vadd.f32 %v3311, %v3314
          %vm3316 = vweird.f32 %v3155
          %vm3317 = vweird.f32 %v3311
          %vm3318 = vmor %vm3316, %vm3317
          %v3319 = vsel %vm3318, %v3311, %v3315
          %v3320 = vand.u32 2147483647, %v3155
          %vm3321 = vcmp.eq.f32.partialorder %v3320, 8.507059e+37
          %v3322 = vand.u32 %v3155, 2147483648
          %v3323 = vor.u32 1.1754944e-38, %v3322
          %v3324 = vsel %vm3321, %v3323, %v3319
          %v3325 = vmul.f32 1.0, %v3324
          %v3326 = vrcp.pop %v3156
          %v3327 = vmul.f32 %v3156, %v3326
          %v3328 = vsub.f32 1.0, %v3327
          %v3329 = vmul.f32 %v3326, %v3328
          %v3330 = vadd.f32 %v3326, %v3329
          %vm3331 = vweird.f32 %v3156
          %vm3332 = vweird.f32 %v3326
          %vm3333 = vmor %vm3331, %vm3332
          %v3334 = vsel %vm3333, %v3326, %v3330
          %v3335 = vand.u32 2147483647, %v3156
          %vm3336 = vcmp.eq.f32.partialorder %v3335, 8.507059e+37
          %v3337 = vand.u32 %v3156, 2147483648
          %v3338 = vor.u32 1.1754944e-38, %v3337
          %v3339 = vsel %vm3336, %v3338, %v3334
          %v3340 = vmul.f32 1.0, %v3339
          %v3341 = vrcp.pop %v3157
          %v3342 = vmul.f32 %v3157, %v3341
          %v3343 = vsub.f32 1.0, %v3342
          %v3344 = vmul.f32 %v3341, %v3343
          %v3345 = vadd.f32 %v3341, %v3344
          %vm3346 = vweird.f32 %v3157
          %vm3347 = vweird.f32 %v3341
          %vm3348 = vmor %vm3346, %vm3347
          %v3349 = vsel %vm3348, %v3341, %v3345
          %v3350 = vand.u32 2147483647, %v3157
          %vm3351 = vcmp.eq.f32.partialorder %v3350, 8.507059e+37
          %v3352 = vand.u32 %v3157, 2147483648
          %v3353 = vor.u32 1.1754944e-38, %v3352
          %v3354 = vsel %vm3351, %v3353, %v3349
          %v3355 = vmul.f32 1.0, %v3354
          %v3356 = vrcp.pop %v3158
          %v3357 = vmul.f32 %v3158, %v3356
          %v3358 = vsub.f32 1.0, %v3357
          %v3359 = vmul.f32 %v3356, %v3358
          %v3360 = vadd.f32 %v3356, %v3359
          %vm3361 = vweird.f32 %v3158
          %vm3362 = vweird.f32 %v3356
          %vm3363 = vmor %vm3361, %vm3362
          %v3364 = vsel %vm3363, %v3356, %v3360
          %v3365 = vand.u32 2147483647, %v3158
          %vm3366 = vcmp.eq.f32.partialorder %v3365, 8.507059e+37
          %v3367 = vand.u32 %v3158, 2147483648
          %v3368 = vor.u32 1.1754944e-38, %v3367
          %v3369 = vsel %vm3366, %v3368, %v3364
          %v3370 = vmul.f32 1.0, %v3369
          %v3371 = vrcp.pop %v3159
          %v3372 = vmul.f32 %v3159, %v3371
          %v3373 = vsub.f32 1.0, %v3372
          %v3374 = vmul.f32 %v3371, %v3373
          %v3375 = vadd.f32 %v3371, %v3374
          %vm3376 = vweird.f32 %v3159
          %vm3377 = vweird.f32 %v3371
          %vm3378 = vmor %vm3376, %vm3377
          %v3379 = vsel %vm3378, %v3371, %v3375
          %v3380 = vand.u32 2147483647, %v3159
          %vm3381 = vcmp.eq.f32.partialorder %v3380, 8.507059e+37
          %v3382 = vand.u32 %v3159, 2147483648
          %v3383 = vor.u32 1.1754944e-38, %v3382
          %v3384 = vsel %vm3381, %v3383, %v3379
          %v3385 = vmul.f32 1.0, %v3384
          %v3386 = vrcp.pop %v3160
          %v3387 = vmul.f32 %v3160, %v3386
          %v3388 = vsub.f32 1.0, %v3387
          %v3389 = vmul.f32 %v3386, %v3388
          %v3390 = vadd.f32 %v3386, %v3389
          %vm3391 = vweird.f32 %v3160
          %vm3392 = vweird.f32 %v3386
          %vm3393 = vmor %vm3391, %vm3392
          %v3394 = vsel %vm3393, %v3386, %v3390
          %v3395 = vand.u32 2147483647, %v3160
          %vm3396 = vcmp.eq.f32.partialorder %v3395, 8.507059e+37
          %v3397 = vand.u32 %v3160, 2147483648
          %v3398 = vor.u32 1.1754944e-38, %v3397
          %v3399 = vsel %vm3396, %v3398, %v3394
          %v3400 = vmul.f32 1.0, %v3399
          %v3401 = vmul.f32 %v3050, %v3175
          %v3402 = vmul.f32 %v3053, %v3190
          %v3403 = vmul.f32 %v3056, %v3205
          %v3404 = vmul.f32 %v3059, %v3220
          %v3405 = vmul.f32 %v3062, %v3235
          %v3406 = vmul.f32 %v3065, %v3250
          %v3407 = vmul.f32 %v3068, %v3265
          %v3408 = vmul.f32 %v3071, %v3280
          %v3409 = vmul.f32 %v3074, %v3295
          %v3410 = vmul.f32 %v3077, %v3310
          %v3411 = vmul.f32 %v3080, %v3325
          %v3412 = vmul.f32 %v3083, %v3340
          %v3413 = vmul.f32 %v3086, %v3355
          %v3414 = vmul.f32 %v3089, %v3370
          %v3415 = vmul.f32 %v3092, %v3385
          %v3416 = vmul.f32 %v3095, %v3400
          %v3417 = vld [vmem:[%s1034] sm:$0x1]
          %v3419 = vperm.slane %v3417, 0
          %v3421 = vmul.f32 %v3401, %v3419
          %v3422 = vmul.f32 %v3402, %v3419
          %v3423 = vmul.f32 %v3403, %v3419
          %v3424 = vmul.f32 %v3404, %v3419
          %v3425 = vmul.f32 %v3405, %v3419
          %v3426 = vmul.f32 %v3406, %v3419
          %v3427 = vmul.f32 %v3407, %v3419
          %v3428 = vmul.f32 %v3408, %v3419
          %v3429 = vmul.f32 %v3409, %v3419
          %v3430 = vmul.f32 %v3410, %v3419
          %v3431 = vmul.f32 %v3411, %v3419
          %v3432 = vmul.f32 %v3412, %v3419
          %v3433 = vmul.f32 %v3413, %v3419
          %v3434 = vmul.f32 %v3414, %v3419
          %v3435 = vmul.f32 %v3415, %v3419
          %v3436 = vmul.f32 %v3416, %v3419
          %v3437 = vsel %vm1474, %v3421, 0.0
          %3438 = vadd.xlane.f32.xlu0 %v3437
          %v3439 = vpop.xlane.xlu0 %3438
          %v3440 = vsel %vm1474, %v3422, 0.0
          %3441 = vadd.xlane.f32.xlu0 %v3440
          %v3442 = vpop.xlane.xlu0 %3441
          %v3443 = vsel %vm1474, %v3423, 0.0
          %3444 = vadd.xlane.f32.xlu0 %v3443
          %v3445 = vpop.xlane.xlu0 %3444
          %v3446 = vsel %vm1474, %v3424, 0.0
          %3447 = vadd.xlane.f32.xlu0 %v3446
          %v3448 = vpop.xlane.xlu0 %3447
          %v3449 = vsel %vm1474, %v3425, 0.0
          %3450 = vadd.xlane.f32.xlu0 %v3449
          %v3451 = vpop.xlane.xlu0 %3450
          %v3452 = vsel %vm1474, %v3426, 0.0
          %3453 = vadd.xlane.f32.xlu0 %v3452
          %v3454 = vpop.xlane.xlu0 %3453
          %v3455 = vsel %vm1474, %v3427, 0.0
          %3456 = vadd.xlane.f32.xlu0 %v3455
          %v3457 = vpop.xlane.xlu0 %3456
          %v3458 = vsel %vm1474, %v3428, 0.0
          %3459 = vadd.xlane.f32.xlu0 %v3458
          %v3460 = vpop.xlane.xlu0 %3459
          %v3461 = vsel %vm1474, %v3429, 0.0
          %3462 = vadd.xlane.f32.xlu0 %v3461
          %v3463 = vpop.xlane.xlu0 %3462
          %v3464 = vsel %vm1474, %v3430, 0.0
          %3465 = vadd.xlane.f32.xlu0 %v3464
          %v3466 = vpop.xlane.xlu0 %3465
          %v3467 = vsel %vm1474, %v3431, 0.0
          %3468 = vadd.xlane.f32.xlu0 %v3467
          %v3469 = vpop.xlane.xlu0 %3468
          %v3470 = vsel %vm1474, %v3432, 0.0
          %3471 = vadd.xlane.f32.xlu0 %v3470
          %v3472 = vpop.xlane.xlu0 %3471
          %v3473 = vsel %vm1474, %v3433, 0.0
          %3474 = vadd.xlane.f32.xlu0 %v3473
          %v3475 = vpop.xlane.xlu0 %3474
          %v3476 = vsel %vm1474, %v3434, 0.0
          %3477 = vadd.xlane.f32.xlu0 %v3476
          %v3478 = vpop.xlane.xlu0 %3477
          %v3479 = vsel %vm1474, %v3435, 0.0
          %3480 = vadd.xlane.f32.xlu0 %v3479
          %v3481 = vpop.xlane.xlu0 %3480
          %v3482 = vsel %vm1474, %v3436, 0.0
          %3483 = vadd.xlane.f32.xlu0 %v3482
          %v3484 = vpop.xlane.xlu0 %3483
          %v3485 = vld [vmem:[%s1037] sm:$0x1]
          %v3487 = vperm.slane %v3485, 0
          %v3489 = vadd.f32 %v3439, %v3487
          %v3490 = vadd.f32 %v3442, %v3487
          %v3491 = vadd.f32 %v3445, %v3487
          %v3492 = vadd.f32 %v3448, %v3487
          %v3493 = vadd.f32 %v3451, %v3487
          %v3494 = vadd.f32 %v3454, %v3487
          %v3495 = vadd.f32 %v3457, %v3487
          %v3496 = vadd.f32 %v3460, %v3487
          %v3497 = vadd.f32 %v3463, %v3487
          %v3498 = vadd.f32 %v3466, %v3487
          %v3499 = vadd.f32 %v3469, %v3487
          %v3500 = vadd.f32 %v3472, %v3487
          %v3501 = vadd.f32 %v3475, %v3487
          %v3502 = vadd.f32 %v3478, %v3487
          %v3503 = vadd.f32 %v3481, %v3487
          %v3504 = vadd.f32 %v3484, %v3487
          %v3505 = vxor.u32 %v3489, 2147483648
          %v3506 = vxor.u32 %v3490, 2147483648
          %v3507 = vxor.u32 %v3491, 2147483648
          %v3508 = vxor.u32 %v3492, 2147483648
          %v3509 = vxor.u32 %v3493, 2147483648
          %v3510 = vxor.u32 %v3494, 2147483648
          %v3511 = vxor.u32 %v3495, 2147483648
          %v3512 = vxor.u32 %v3496, 2147483648
          %v3513 = vxor.u32 %v3497, 2147483648
          %v3514 = vxor.u32 %v3498, 2147483648
          %v3515 = vxor.u32 %v3499, 2147483648
          %v3516 = vxor.u32 %v3500, 2147483648
          %v3517 = vxor.u32 %v3501, 2147483648
          %v3518 = vxor.u32 %v3502, 2147483648
          %v3519 = vxor.u32 %v3503, 2147483648
          %v3520 = vxor.u32 %v3504, 2147483648
          %v3521 = vmul.f32 %v3505, 1.442695
          %v3522 = vpow.pop %v3521
          %v3523 = vmul.f32 %v3506, 1.442695
          %v3524 = vpow.pop %v3523
          %v3525 = vmul.f32 %v3507, 1.442695
          %v3526 = vpow.pop %v3525
          %v3527 = vmul.f32 %v3508, 1.442695
          %v3528 = vpow.pop %v3527
          %v3529 = vmul.f32 %v3509, 1.442695
          %v3530 = vpow.pop %v3529
          %v3531 = vmul.f32 %v3510, 1.442695
          %v3532 = vpow.pop %v3531
          %v3533 = vmul.f32 %v3511, 1.442695
          %v3534 = vpow.pop %v3533
          %v3535 = vmul.f32 %v3512, 1.442695
          %v3536 = vpow.pop %v3535
          %v3537 = vmul.f32 %v3513, 1.442695
          %v3538 = vpow.pop %v3537
          %v3539 = vmul.f32 %v3514, 1.442695
          %v3540 = vpow.pop %v3539
          %v3541 = vmul.f32 %v3515, 1.442695
          %v3542 = vpow.pop %v3541
          %v3543 = vmul.f32 %v3516, 1.442695
          %v3544 = vpow.pop %v3543
          %v3545 = vmul.f32 %v3517, 1.442695
          %v3546 = vpow.pop %v3545
          %v3547 = vmul.f32 %v3518, 1.442695
          %v3548 = vpow.pop %v3547
          %v3549 = vmul.f32 %v3519, 1.442695
          %v3550 = vpow.pop %v3549
          %v3551 = vmul.f32 %v3520, 1.442695
          %v3552 = vpow.pop %v3551
          %v3553 = vadd.f32 %v3522, 1.0
          %v3554 = vadd.f32 %v3524, 1.0
          %v3555 = vadd.f32 %v3526, 1.0
          %v3556 = vadd.f32 %v3528, 1.0
          %v3557 = vadd.f32 %v3530, 1.0
          %v3558 = vadd.f32 %v3532, 1.0
          %v3559 = vadd.f32 %v3534, 1.0
          %v3560 = vadd.f32 %v3536, 1.0
          %v3561 = vadd.f32 %v3538, 1.0
          %v3562 = vadd.f32 %v3540, 1.0
          %v3563 = vadd.f32 %v3542, 1.0
          %v3564 = vadd.f32 %v3544, 1.0
          %v3565 = vadd.f32 %v3546, 1.0
          %v3566 = vadd.f32 %v3548, 1.0
          %v3567 = vadd.f32 %v3550, 1.0
          %v3568 = vadd.f32 %v3552, 1.0
          %v3569 = vrcp.pop %v3553
          %v3570 = vmul.f32 %v3553, %v3569
          %v3571 = vsub.f32 1.0, %v3570
          %v3572 = vmul.f32 %v3569, %v3571
          %v3573 = vadd.f32 %v3569, %v3572
          %vm3574 = vweird.f32 %v3553
          %vm3575 = vweird.f32 %v3569
          %vm3576 = vmor %vm3574, %vm3575
          %v3577 = vsel %vm3576, %v3569, %v3573
          %v3578 = vand.u32 2147483647, %v3553
          %vm3579 = vcmp.eq.f32.partialorder %v3578, 8.507059e+37
          %v3580 = vand.u32 %v3553, 2147483648
          %v3581 = vor.u32 1.1754944e-38, %v3580
          %v3582 = vsel %vm3579, %v3581, %v3577
          %v3583 = vmul.f32 1.0, %v3582
          %v3584 = vrcp.pop %v3554
          %v3585 = vmul.f32 %v3554, %v3584
          %v3586 = vsub.f32 1.0, %v3585
          %v3587 = vmul.f32 %v3584, %v3586
          %v3588 = vadd.f32 %v3584, %v3587
          %vm3589 = vweird.f32 %v3554
          %vm3590 = vweird.f32 %v3584
          %vm3591 = vmor %vm3589, %vm3590
          %v3592 = vsel %vm3591, %v3584, %v3588
          %v3593 = vand.u32 2147483647, %v3554
          %vm3594 = vcmp.eq.f32.partialorder %v3593, 8.507059e+37
          %v3595 = vand.u32 %v3554, 2147483648
          %v3596 = vor.u32 1.1754944e-38, %v3595
          %v3597 = vsel %vm3594, %v3596, %v3592
          %v3598 = vmul.f32 1.0, %v3597
          %v3599 = vrcp.pop %v3555
          %v3600 = vmul.f32 %v3555, %v3599
          %v3601 = vsub.f32 1.0, %v3600
          %v3602 = vmul.f32 %v3599, %v3601
          %v3603 = vadd.f32 %v3599, %v3602
          %vm3604 = vweird.f32 %v3555
          %vm3605 = vweird.f32 %v3599
          %vm3606 = vmor %vm3604, %vm3605
          %v3607 = vsel %vm3606, %v3599, %v3603
          %v3608 = vand.u32 2147483647, %v3555
          %vm3609 = vcmp.eq.f32.partialorder %v3608, 8.507059e+37
          %v3610 = vand.u32 %v3555, 2147483648
          %v3611 = vor.u32 1.1754944e-38, %v3610
          %v3612 = vsel %vm3609, %v3611, %v3607
          %v3613 = vmul.f32 1.0, %v3612
          %v3614 = vrcp.pop %v3556
          %v3615 = vmul.f32 %v3556, %v3614
          %v3616 = vsub.f32 1.0, %v3615
          %v3617 = vmul.f32 %v3614, %v3616
          %v3618 = vadd.f32 %v3614, %v3617
          %vm3619 = vweird.f32 %v3556
          %vm3620 = vweird.f32 %v3614
          %vm3621 = vmor %vm3619, %vm3620
          %v3622 = vsel %vm3621, %v3614, %v3618
          %v3623 = vand.u32 2147483647, %v3556
          %vm3624 = vcmp.eq.f32.partialorder %v3623, 8.507059e+37
          %v3625 = vand.u32 %v3556, 2147483648
          %v3626 = vor.u32 1.1754944e-38, %v3625
          %v3627 = vsel %vm3624, %v3626, %v3622
          %v3628 = vmul.f32 1.0, %v3627
          %v3629 = vrcp.pop %v3557
          %v3630 = vmul.f32 %v3557, %v3629
          %v3631 = vsub.f32 1.0, %v3630
          %v3632 = vmul.f32 %v3629, %v3631
          %v3633 = vadd.f32 %v3629, %v3632
          %vm3634 = vweird.f32 %v3557
          %vm3635 = vweird.f32 %v3629
          %vm3636 = vmor %vm3634, %vm3635
          %v3637 = vsel %vm3636, %v3629, %v3633
          %v3638 = vand.u32 2147483647, %v3557
          %vm3639 = vcmp.eq.f32.partialorder %v3638, 8.507059e+37
          %v3640 = vand.u32 %v3557, 2147483648
          %v3641 = vor.u32 1.1754944e-38, %v3640
          %v3642 = vsel %vm3639, %v3641, %v3637
          %v3643 = vmul.f32 1.0, %v3642
          %v3644 = vrcp.pop %v3558
          %v3645 = vmul.f32 %v3558, %v3644
          %v3646 = vsub.f32 1.0, %v3645
          %v3647 = vmul.f32 %v3644, %v3646
          %v3648 = vadd.f32 %v3644, %v3647
          %vm3649 = vweird.f32 %v3558
          %vm3650 = vweird.f32 %v3644
          %vm3651 = vmor %vm3649, %vm3650
          %v3652 = vsel %vm3651, %v3644, %v3648
          %v3653 = vand.u32 2147483647, %v3558
          %vm3654 = vcmp.eq.f32.partialorder %v3653, 8.507059e+37
          %v3655 = vand.u32 %v3558, 2147483648
          %v3656 = vor.u32 1.1754944e-38, %v3655
          %v3657 = vsel %vm3654, %v3656, %v3652
          %v3658 = vmul.f32 1.0, %v3657
          %v3659 = vrcp.pop %v3559
          %v3660 = vmul.f32 %v3559, %v3659
          %v3661 = vsub.f32 1.0, %v3660
          %v3662 = vmul.f32 %v3659, %v3661
          %v3663 = vadd.f32 %v3659, %v3662
          %vm3664 = vweird.f32 %v3559
          %vm3665 = vweird.f32 %v3659
          %vm3666 = vmor %vm3664, %vm3665
          %v3667 = vsel %vm3666, %v3659, %v3663
          %v3668 = vand.u32 2147483647, %v3559
          %vm3669 = vcmp.eq.f32.partialorder %v3668, 8.507059e+37
          %v3670 = vand.u32 %v3559, 2147483648
          %v3671 = vor.u32 1.1754944e-38, %v3670
          %v3672 = vsel %vm3669, %v3671, %v3667
          %v3673 = vmul.f32 1.0, %v3672
          %v3674 = vrcp.pop %v3560
          %v3675 = vmul.f32 %v3560, %v3674
          %v3676 = vsub.f32 1.0, %v3675
          %v3677 = vmul.f32 %v3674, %v3676
          %v3678 = vadd.f32 %v3674, %v3677
          %vm3679 = vweird.f32 %v3560
          %vm3680 = vweird.f32 %v3674
          %vm3681 = vmor %vm3679, %vm3680
          %v3682 = vsel %vm3681, %v3674, %v3678
          %v3683 = vand.u32 2147483647, %v3560
          %vm3684 = vcmp.eq.f32.partialorder %v3683, 8.507059e+37
          %v3685 = vand.u32 %v3560, 2147483648
          %v3686 = vor.u32 1.1754944e-38, %v3685
          %v3687 = vsel %vm3684, %v3686, %v3682
          %v3688 = vmul.f32 1.0, %v3687
          %v3689 = vrcp.pop %v3561
          %v3690 = vmul.f32 %v3561, %v3689
          %v3691 = vsub.f32 1.0, %v3690
          %v3692 = vmul.f32 %v3689, %v3691
          %v3693 = vadd.f32 %v3689, %v3692
          %vm3694 = vweird.f32 %v3561
          %vm3695 = vweird.f32 %v3689
          %vm3696 = vmor %vm3694, %vm3695
          %v3697 = vsel %vm3696, %v3689, %v3693
          %v3698 = vand.u32 2147483647, %v3561
          %vm3699 = vcmp.eq.f32.partialorder %v3698, 8.507059e+37
          %v3700 = vand.u32 %v3561, 2147483648
          %v3701 = vor.u32 1.1754944e-38, %v3700
          %v3702 = vsel %vm3699, %v3701, %v3697
          %v3703 = vmul.f32 1.0, %v3702
          %v3704 = vrcp.pop %v3562
          %v3705 = vmul.f32 %v3562, %v3704
          %v3706 = vsub.f32 1.0, %v3705
          %v3707 = vmul.f32 %v3704, %v3706
          %v3708 = vadd.f32 %v3704, %v3707
          %vm3709 = vweird.f32 %v3562
          %vm3710 = vweird.f32 %v3704
          %vm3711 = vmor %vm3709, %vm3710
          %v3712 = vsel %vm3711, %v3704, %v3708
          %v3713 = vand.u32 2147483647, %v3562
          %vm3714 = vcmp.eq.f32.partialorder %v3713, 8.507059e+37
          %v3715 = vand.u32 %v3562, 2147483648
          %v3716 = vor.u32 1.1754944e-38, %v3715
          %v3717 = vsel %vm3714, %v3716, %v3712
          %v3718 = vmul.f32 1.0, %v3717
          %v3719 = vrcp.pop %v3563
          %v3720 = vmul.f32 %v3563, %v3719
          %v3721 = vsub.f32 1.0, %v3720
          %v3722 = vmul.f32 %v3719, %v3721
          %v3723 = vadd.f32 %v3719, %v3722
          %vm3724 = vweird.f32 %v3563
          %vm3725 = vweird.f32 %v3719
          %vm3726 = vmor %vm3724, %vm3725
          %v3727 = vsel %vm3726, %v3719, %v3723
          %v3728 = vand.u32 2147483647, %v3563
          %vm3729 = vcmp.eq.f32.partialorder %v3728, 8.507059e+37
          %v3730 = vand.u32 %v3563, 2147483648
          %v3731 = vor.u32 1.1754944e-38, %v3730
          %v3732 = vsel %vm3729, %v3731, %v3727
          %v3733 = vmul.f32 1.0, %v3732
          %v3734 = vrcp.pop %v3564
          %v3735 = vmul.f32 %v3564, %v3734
          %v3736 = vsub.f32 1.0, %v3735
          %v3737 = vmul.f32 %v3734, %v3736
          %v3738 = vadd.f32 %v3734, %v3737
          %vm3739 = vweird.f32 %v3564
          %vm3740 = vweird.f32 %v3734
          %vm3741 = vmor %vm3739, %vm3740
          %v3742 = vsel %vm3741, %v3734, %v3738
          %v3743 = vand.u32 2147483647, %v3564
          %vm3744 = vcmp.eq.f32.partialorder %v3743, 8.507059e+37
          %v3745 = vand.u32 %v3564, 2147483648
          %v3746 = vor.u32 1.1754944e-38, %v3745
          %v3747 = vsel %vm3744, %v3746, %v3742
          %v3748 = vmul.f32 1.0, %v3747
          %v3749 = vrcp.pop %v3565
          %v3750 = vmul.f32 %v3565, %v3749
          %v3751 = vsub.f32 1.0, %v3750
          %v3752 = vmul.f32 %v3749, %v3751
          %v3753 = vadd.f32 %v3749, %v3752
          %vm3754 = vweird.f32 %v3565
          %vm3755 = vweird.f32 %v3749
          %vm3756 = vmor %vm3754, %vm3755
          %v3757 = vsel %vm3756, %v3749, %v3753
          %v3758 = vand.u32 2147483647, %v3565
          %vm3759 = vcmp.eq.f32.partialorder %v3758, 8.507059e+37
          %v3760 = vand.u32 %v3565, 2147483648
          %v3761 = vor.u32 1.1754944e-38, %v3760
          %v3762 = vsel %vm3759, %v3761, %v3757
          %v3763 = vmul.f32 1.0, %v3762
          %v3764 = vrcp.pop %v3566
          %v3765 = vmul.f32 %v3566, %v3764
          %v3766 = vsub.f32 1.0, %v3765
          %v3767 = vmul.f32 %v3764, %v3766
          %v3768 = vadd.f32 %v3764, %v3767
          %vm3769 = vweird.f32 %v3566
          %vm3770 = vweird.f32 %v3764
          %vm3771 = vmor %vm3769, %vm3770
          %v3772 = vsel %vm3771, %v3764, %v3768
          %v3773 = vand.u32 2147483647, %v3566
          %vm3774 = vcmp.eq.f32.partialorder %v3773, 8.507059e+37
          %v3775 = vand.u32 %v3566, 2147483648
          %v3776 = vor.u32 1.1754944e-38, %v3775
          %v3777 = vsel %vm3774, %v3776, %v3772
          %v3778 = vmul.f32 1.0, %v3777
          %v3779 = vrcp.pop %v3567
          %v3780 = vmul.f32 %v3567, %v3779
          %v3781 = vsub.f32 1.0, %v3780
          %v3782 = vmul.f32 %v3779, %v3781
          %v3783 = vadd.f32 %v3779, %v3782
          %vm3784 = vweird.f32 %v3567
          %vm3785 = vweird.f32 %v3779
          %vm3786 = vmor %vm3784, %vm3785
          %v3787 = vsel %vm3786, %v3779, %v3783
          %v3788 = vand.u32 2147483647, %v3567
          %vm3789 = vcmp.eq.f32.partialorder %v3788, 8.507059e+37
          %v3790 = vand.u32 %v3567, 2147483648
          %v3791 = vor.u32 1.1754944e-38, %v3790
          %v3792 = vsel %vm3789, %v3791, %v3787
          %v3793 = vmul.f32 1.0, %v3792
          %v3794 = vrcp.pop %v3568
          %v3795 = vmul.f32 %v3568, %v3794
          %v3796 = vsub.f32 1.0, %v3795
          %v3797 = vmul.f32 %v3794, %v3796
          %v3798 = vadd.f32 %v3794, %v3797
          %vm3799 = vweird.f32 %v3568
          %vm3800 = vweird.f32 %v3794
          %vm3801 = vmor %vm3799, %vm3800
          %v3802 = vsel %vm3801, %v3794, %v3798
          %v3803 = vand.u32 2147483647, %v3568
          %vm3804 = vcmp.eq.f32.partialorder %v3803, 8.507059e+37
          %v3805 = vand.u32 %v3568, 2147483648
          %v3806 = vor.u32 1.1754944e-38, %v3805
          %v3807 = vsel %vm3804, %v3806, %v3802
          %v3808 = vmul.f32 1.0, %v3807
          %3810 = vset.pattern.permute.xlu0 0
          %3811 = vperm.xlu0 %3810, %v3583
          %v3812 = vpop.permute.xlu0 %3811
          %3815 = vset.pattern.permute.xlu0 0
          %3816 = vperm.xlu0 %3815, %v3598
          %v3817 = vpop.permute.xlu0 %3816
          %3820 = vset.pattern.permute.xlu0 0
          %3821 = vperm.xlu0 %3820, %v3613
          %v3822 = vpop.permute.xlu0 %3821
          %3825 = vset.pattern.permute.xlu0 0
          %3826 = vperm.xlu0 %3825, %v3628
          %v3827 = vpop.permute.xlu0 %3826
          %3830 = vset.pattern.permute.xlu0 0
          %3831 = vperm.xlu0 %3830, %v3643
          %v3832 = vpop.permute.xlu0 %3831
          %3835 = vset.pattern.permute.xlu0 0
          %3836 = vperm.xlu0 %3835, %v3658
          %v3837 = vpop.permute.xlu0 %3836
          %3840 = vset.pattern.permute.xlu0 0
          %3841 = vperm.xlu0 %3840, %v3673
          %v3842 = vpop.permute.xlu0 %3841
          %3845 = vset.pattern.permute.xlu0 0
          %3846 = vperm.xlu0 %3845, %v3688
          %v3847 = vpop.permute.xlu0 %3846
          %3850 = vset.pattern.permute.xlu0 0
          %3851 = vperm.xlu0 %3850, %v3703
          %v3852 = vpop.permute.xlu0 %3851
          %3855 = vset.pattern.permute.xlu0 0
          %3856 = vperm.xlu0 %3855, %v3718
          %v3857 = vpop.permute.xlu0 %3856
          %3860 = vset.pattern.permute.xlu0 0
          %3861 = vperm.xlu0 %3860, %v3733
          %v3862 = vpop.permute.xlu0 %3861
          %3865 = vset.pattern.permute.xlu0 0
          %3866 = vperm.xlu0 %3865, %v3748
          %v3867 = vpop.permute.xlu0 %3866
          %3870 = vset.pattern.permute.xlu0 0
          %3871 = vperm.xlu0 %3870, %v3763
          %v3872 = vpop.permute.xlu0 %3871
          %3875 = vset.pattern.permute.xlu0 0
          %3876 = vperm.xlu0 %3875, %v3778
          %v3877 = vpop.permute.xlu0 %3876
          %3880 = vset.pattern.permute.xlu0 0
          %3881 = vperm.xlu0 %3880, %v3793
          %v3882 = vpop.permute.xlu0 %3881
          %3885 = vset.pattern.permute.xlu0 0
          %3886 = vperm.xlu0 %3885, %v3808
          %v3887 = vpop.permute.xlu0 %3886
          %v3889 = vmul.f32 %v3401, %v3812
          %v3890 = vmul.f32 %v3402, %v3817
          %v3891 = vmul.f32 %v3403, %v3822
          %v3892 = vmul.f32 %v3404, %v3827
          %v3893 = vmul.f32 %v3405, %v3832
          %v3894 = vmul.f32 %v3406, %v3837
          %v3895 = vmul.f32 %v3407, %v3842
          %v3896 = vmul.f32 %v3408, %v3847
          %v3897 = vmul.f32 %v3409, %v3852
          %v3898 = vmul.f32 %v3410, %v3857
          %v3899 = vmul.f32 %v3411, %v3862
          %v3900 = vmul.f32 %v3412, %v3867
          %v3901 = vmul.f32 %v3413, %v3872
          %v3902 = vmul.f32 %v3414, %v3877
          %v3903 = vmul.f32 %v3415, %v3882
          %v3904 = vmul.f32 %v3416, %v3887
          %3905 = vset.pattern.permute.xlu0 1
          %3906 = vperm.xlu0 %3905, %v1240
          %v3907 = vpop.permute.xlu0 %3906
          %3909 = vset.pattern.permute.xlu0 1
          %3910 = vperm.xlu0 %3909, %v1241
          %v3911 = vpop.permute.xlu0 %3910
          %3913 = vset.pattern.permute.xlu0 1
          %3914 = vperm.xlu0 %3913, %v1242
          %v3915 = vpop.permute.xlu0 %3914
          %3917 = vset.pattern.permute.xlu0 1
          %3918 = vperm.xlu0 %3917, %v1243
          %v3919 = vpop.permute.xlu0 %3918
          %3921 = vset.pattern.permute.xlu0 1
          %3922 = vperm.xlu0 %3921, %v1244
          %v3923 = vpop.permute.xlu0 %3922
          %3925 = vset.pattern.permute.xlu0 1
          %3926 = vperm.xlu0 %3925, %v1245
          %v3927 = vpop.permute.xlu0 %3926
          %3929 = vset.pattern.permute.xlu0 1
          %3930 = vperm.xlu0 %3929, %v1246
          %v3931 = vpop.permute.xlu0 %3930
          %3933 = vset.pattern.permute.xlu0 1
          %3934 = vperm.xlu0 %3933, %v1247
          %v3935 = vpop.permute.xlu0 %3934
          %3937 = vset.pattern.permute.xlu0 1
          %3938 = vperm.xlu0 %3937, %v1248
          %v3939 = vpop.permute.xlu0 %3938
          %3941 = vset.pattern.permute.xlu0 1
          %3942 = vperm.xlu0 %3941, %v1249
          %v3943 = vpop.permute.xlu0 %3942
          %3945 = vset.pattern.permute.xlu0 1
          %3946 = vperm.xlu0 %3945, %v1250
          %v3947 = vpop.permute.xlu0 %3946
          %3949 = vset.pattern.permute.xlu0 1
          %3950 = vperm.xlu0 %3949, %v1251
          %v3951 = vpop.permute.xlu0 %3950
          %3953 = vset.pattern.permute.xlu0 1
          %3954 = vperm.xlu0 %3953, %v1252
          %v3955 = vpop.permute.xlu0 %3954
          %3957 = vset.pattern.permute.xlu0 1
          %3958 = vperm.xlu0 %3957, %v1253
          %v3959 = vpop.permute.xlu0 %3958
          %3961 = vset.pattern.permute.xlu0 1
          %3962 = vperm.xlu0 %3961, %v1254
          %v3963 = vpop.permute.xlu0 %3962
          %3965 = vset.pattern.permute.xlu0 1
          %3966 = vperm.xlu0 %3965, %v1255
          %v3967 = vpop.permute.xlu0 %3966
          %v3969 = vmul.f32 %v3889, %v3907
          %v3970 = vmul.f32 %v3890, %v3911
          %v3971 = vmul.f32 %v3891, %v3915
          %v3972 = vmul.f32 %v3892, %v3919
          %v3973 = vmul.f32 %v3893, %v3923
          %v3974 = vmul.f32 %v3894, %v3927
          %v3975 = vmul.f32 %v3895, %v3931
          %v3976 = vmul.f32 %v3896, %v3935
          %v3977 = vmul.f32 %v3897, %v3939
          %v3978 = vmul.f32 %v3898, %v3943
          %v3979 = vmul.f32 %v3899, %v3947
          %v3980 = vmul.f32 %v3900, %v3951
          %v3981 = vmul.f32 %v3901, %v3955
          %v3982 = vmul.f32 %v3902, %v3959
          %v3983 = vmul.f32 %v3903, %v3963
          %v3984 = vmul.f32 %v3904, %v3967
          %v3985 = vpack.c.bf16 %v3970, %v3969
          %v3986 = vpack.c.bf16 %v3972, %v3971
          %v3987 = vpack.c.bf16 %v3974, %v3973
          %v3988 = vpack.c.bf16 %v3976, %v3975
          %v3989 = vpack.c.bf16 %v3978, %v3977
          %v3990 = vpack.c.bf16 %v3980, %v3979
          %v3991 = vpack.c.bf16 %v3982, %v3981
          %v3992 = vpack.c.bf16 %v3984, %v3983
          %v3993 = vld [vmem:[#allocation4] sm:$0xff]
          %v3994 = vld [vmem:[#allocation4 + $0x8] sm:$0xff]
          %3995 = vmatpush.bf16.msra.mxu0 %v3992
          %3996 = vmatpush.bf16.msra.mxu0 %v3991
          %3997 = vmatpush.bf16.msra.mxu0 %v3990
          %3998 = vmatpush.bf16.msra.mxu0 %v3989
          %3999 = vmatpush.bf16.msra.mxu0 %v3988
          %4000 = vmatpush.bf16.msra.mxu0 %v3987
          %4001 = vmatpush.bf16.msra.mxu0 %v3986
          %4002 = vmatpush.bf16.msra.mxu0 %v3985
          %4003 = vmatmul.bf16.gmra.mxu0 %v1559
          %v4004 = vpop.f32.mrf.mxu0
          %v4005 = vadd.f32 0.0, %v4004
          %v4006 = vpop.f32.mrf.mxu0
          %v4007 = vadd.f32 0.0, %v4006
          %4008 = vdwg.mxu0
          %v4009 = vadd.f32 %v3993, %v4005
          %v4010 = vadd.f32 %v3994, %v4007
          %4011 = vst.msk [vmem:[#allocation4] sm:$0xff] %vm1474, %v4009
          %4012 = vst.msk [vmem:[#allocation4 + $0x8] sm:$0xff] %vm1474, %v4010
          %p4013 = scmp.eq.s32.totalorder %s45, 1
          // Predicated region
          $region149: #{equivariant_block_forward.1} parent=147 // pred_check
            %p4014 = pneg %p4013
          $region150: #{equivariant_block_forward.1} parent=147 // pred_check_branch
            %4016 = sbr.rel (%p4014) target = $region152
          $region151: #{equivariant_block_forward.1} parent=147 // pred_region
            %v4017 = vld [vmem:[#allocation2] sm:$0xff]
            %v4018 = vld [vmem:[#allocation2 + $0x8] sm:$0xff]
            %v4019 = vld [vmem:[#allocation4] sm:$0xff]
            %v4020 = vld [vmem:[#allocation4 + $0x8] sm:$0xff]
            %v4021 = vmul.f32 %v4019, 0.01
            %v4022 = vmul.f32 %v4020, 0.01
            %4025 = vrot.lane.b32.xlu0 %v4021, 32
            %v4026 = vpop.permute.xlu0 %4025
            %4027 = vrot.lane.b32.xlu0 %v4022, 32
            %v4028 = vpop.permute.xlu0 %4027
            %v4031 = vsel %vm1474, %v4017, %v4026
            %v4032 = vsel %vm1474, %v4018, %v4028
            %v4033 = vld [vmem:[%s1042] sm:$0xff]
            %v4034 = vld [vmem:[%s1042 + $0x8] sm:$0xff]
            %v4035 = vld [vmem:[%s1042 + $0x10] sm:$0xff]
            %v4036 = vld [vmem:[%s1042 + $0x18] sm:$0xff]
            %v4037 = vld [vmem:[%s1042 + $0x20] sm:$0xff]
            %v4038 = vld [vmem:[%s1042 + $0x28] sm:$0xff]
            %v4039 = vld [vmem:[%s1042 + $0x30] sm:$0xff]
            %v4040 = vld [vmem:[%s1042 + $0x38] sm:$0xff]
            %v4041 = vld [vmem:[%s1045] sm:$0x1]
            %v4043 = vperm.slane %v4041, 0
            %vm4045 = vcmask 523264
            %v4047 = vsel %vm4045, %v4031, 0
            %v4050 = vsel %vm4045, %v4032, 0
            %4052 = vmatpush.msra.mxu0 0.0
            %4053 = vmatpush.msra.mxu0 0.0
            %4054 = vmatpush.msra.mxu0 0.0
            %4055 = vmatpush.msra.mxu0 0.0
            %4056 = vmatpush.msra.mxu0 0.0
            %4057 = vmatpush.msra.mxu0 0.0
            %4058 = vmatpush.msra.mxu0 0.0
            %4059 = vmatpush.msra.mxu0 0.0
            %4060 = vmatpush.msra.mxu0 %v4040
            %4061 = vmatpush.msra.mxu0 %v4039
            %4062 = vmatpush.msra.mxu0 %v4038
            %4063 = vmatpush.msra.mxu0 %v4037
            %4064 = vmatpush.msra.mxu0 %v4036
            %4065 = vmatpush.msra.mxu0 %v4035
            %4066 = vmatpush.msra.mxu0 %v4034
            %4067 = vmatpush.msra.mxu0 %v4033
            %4068 = vmatmul.f32.gmra.mxu0 %v4047
            %v4069 = vpop.f32.mrf.mxu0
            %v4070 = vadd.f32 %v4043, %v4069
            %4071 = vmatmul.f32.gmra.mxu0 %v4050
            %v4072 = vpop.f32.mrf.mxu0
            %v4073 = vadd.f32 %v4043, %v4072
            %4074 = vdwg.mxu0
            %v4075 = vxor.u32 %v4070, 2147483648
            %v4076 = vxor.u32 %v4073, 2147483648
            %v4077 = vmul.f32 %v4075, 1.442695
            %v4078 = vpow.pop %v4077
            %v4079 = vmul.f32 %v4076, 1.442695
            %v4080 = vpow.pop %v4079
            %v4081 = vadd.f32 %v4078, 1.0
            %v4082 = vadd.f32 %v4080, 1.0
            %v4083 = vrcp.pop %v4081
            %v4084 = vmul.f32 %v4081, %v4083
            %v4085 = vsub.f32 1.0, %v4084
            %v4086 = vmul.f32 %v4083, %v4085
            %v4087 = vadd.f32 %v4083, %v4086
            %vm4088 = vweird.f32 %v4081
            %vm4089 = vweird.f32 %v4083
            %vm4090 = vmor %vm4088, %vm4089
            %v4091 = vsel %vm4090, %v4083, %v4087
            %v4092 = vand.u32 2147483647, %v4081
            %vm4093 = vcmp.eq.f32.partialorder %v4092, 8.507059e+37
            %v4094 = vand.u32 %v4081, 2147483648
            %v4095 = vor.u32 1.1754944e-38, %v4094
            %v4096 = vsel %vm4093, %v4095, %v4091
            %v4097 = vmul.f32 1.0, %v4096
            %v4098 = vrcp.pop %v4082
            %v4099 = vmul.f32 %v4082, %v4098
            %v4100 = vsub.f32 1.0, %v4099
            %v4101 = vmul.f32 %v4098, %v4100
            %v4102 = vadd.f32 %v4098, %v4101
            %vm4103 = vweird.f32 %v4082
            %vm4104 = vweird.f32 %v4098
            %vm4105 = vmor %vm4103, %vm4104
            %v4106 = vsel %vm4105, %v4098, %v4102
            %v4107 = vand.u32 2147483647, %v4082
            %vm4108 = vcmp.eq.f32.partialorder %v4107, 8.507059e+37
            %v4109 = vand.u32 %v4082, 2147483648
            %v4110 = vor.u32 1.1754944e-38, %v4109
            %v4111 = vsel %vm4108, %v4110, %v4106
            %v4112 = vmul.f32 1.0, %v4111
            %v4113 = vmul.f32 %v4070, %v4097
            %v4114 = vmul.f32 %v4073, %v4112
            %v4115 = vld [vmem:[%s1050] sm:$0xff]
            %v4116 = vld [vmem:[%s1050 + $0x8] sm:$0xff]
            %v4117 = vld [vmem:[%s1050 + $0x10] sm:$0xff]
            %v4118 = vld [vmem:[%s1050 + $0x18] sm:$0xff]
            %v4119 = vld [vmem:[%s1053] sm:$0x1]
            %v4121 = vperm.slane %v4119, 0
            %v4124 = vsel %vm1474, %v4113, 0
            %v4127 = vsel %vm1474, %v4114, 0
            %4129 = vmatpush.msra.mxu0 0.0
            %4130 = vmatpush.msra.mxu0 0.0
            %4131 = vmatpush.msra.mxu0 0.0
            %4132 = vmatpush.msra.mxu0 0.0
            %4133 = vmatpush.msra.mxu0 0.0
            %4134 = vmatpush.msra.mxu0 0.0
            %4135 = vmatpush.msra.mxu0 0.0
            %4136 = vmatpush.msra.mxu0 0.0
            %4137 = vmatpush.msra.mxu0 0.0
            %4138 = vmatpush.msra.mxu0 0.0
            %4139 = vmatpush.msra.mxu0 0.0
            %4140 = vmatpush.msra.mxu0 0.0
            %4141 = vmatpush.msra.mxu0 %v4118
            %4142 = vmatpush.msra.mxu0 %v4117
            %4143 = vmatpush.msra.mxu0 %v4116
            %4144 = vmatpush.msra.mxu0 %v4115
            %4145 = vmatmul.f32.gmra.mxu0 %v4124
            %v4146 = vpop.f32.mrf.mxu0
            %v4147 = vadd.f32 %v4121, %v4146
            %4148 = vmatmul.f32.gmra.mxu0 %v4127
            %v4149 = vpop.f32.mrf.mxu0
            %v4150 = vadd.f32 %v4121, %v4149
            %4151 = vdwg.mxu0
            %v4152 = vadd.f32 %v4017, %v4147
            %v4153 = vadd.f32 %v4018, %v4150
            %v4154 = vld [vmem:[%s5] sm:$0xff]
            %v4155 = vld [vmem:[%s5 + $0x8] sm:$0xff]
            %4157 = vset.pattern.permute.xlu0 0
            %4158 = vperm.xlu0 %4157, %v4154
            %v4159 = vpop.permute.xlu0 %4158
            %4162 = vset.pattern.permute.xlu0 0
            %4163 = vperm.xlu0 %4162, %v4155
            %v4164 = vpop.permute.xlu0 %4163
            %v4166 = vmul.f32 %v4152, %v4159
            %v4167 = vmul.f32 %v4153, %v4164
            %4168 = vst.msk [vmem:[#allocation2] sm:$0xff] %vm1474, %v4166
            %4169 = vst.msk [vmem:[#allocation2 + $0x8] sm:$0xff] %vm1474, %v4167
          $region152: #{equivariant_block_forward.1} parent=147 // pred_fallthru
            _
        $region148: #{equivariant_block_forward.1} parent=123 // pred_fallthru
          _
        // Predicated region
        $region153: #{equivariant_block_forward.1} parent=123 // pred_check
          %p4170 = pneg %p1056
        $region154: #{equivariant_block_forward.1} parent=123 // pred_check_branch
          %4172 = sbr.rel (%p4170) target = $region156
        $region155: #{equivariant_block_forward.1} parent=123 // pred_region
          %v4173 = vld [vmem:[%s21] sm:$0x3]
          %v4174 = vld [vmem:[%s22] sm:$0x1]
          %v4176 = vperm.slane %v4174, 0
          %v4178 = vadd.f32 %v1509, %v4176
          %v4179 = vadd.f32 %v1511, %v4176
          %v4180 = vadd.f32 %v1514, %v4176
          %v4181 = vadd.f32 %v1516, %v4176
          %v4182 = vadd.f32 %v1519, %v4176
          %v4183 = vadd.f32 %v1521, %v4176
          %v4184 = vadd.f32 %v1524, %v4176
          %v4185 = vadd.f32 %v1526, %v4176
          %v4186 = vadd.f32 %v1529, %v4176
          %v4187 = vadd.f32 %v1531, %v4176
          %v4188 = vadd.f32 %v1534, %v4176
          %v4189 = vadd.f32 %v1536, %v4176
          %v4190 = vadd.f32 %v1539, %v4176
          %v4191 = vadd.f32 %v1541, %v4176
          %v4192 = vadd.f32 %v1544, %v4176
          %v4193 = vadd.f32 %v1546, %v4176
          %4195 = vset.pattern.permute.xlu0 0
          %4196 = vperm.xlu0 %4195, %v2390
          %v4197 = vpop.permute.xlu0 %4196
          %4200 = vset.pattern.permute.xlu0 0
          %4201 = vperm.xlu0 %4200, %v2391
          %v4202 = vpop.permute.xlu0 %4201
          %4205 = vset.pattern.permute.xlu0 0
          %4206 = vperm.xlu0 %4205, %v2392
          %v4207 = vpop.permute.xlu0 %4206
          %4210 = vset.pattern.permute.xlu0 0
          %4211 = vperm.xlu0 %4210, %v2393
          %v4212 = vpop.permute.xlu0 %4211
          %4215 = vset.pattern.permute.xlu0 0
          %4216 = vperm.xlu0 %4215, %v2394
          %v4217 = vpop.permute.xlu0 %4216
          %4220 = vset.pattern.permute.xlu0 0
          %4221 = vperm.xlu0 %4220, %v2395
          %v4222 = vpop.permute.xlu0 %4221
          %4225 = vset.pattern.permute.xlu0 0
          %4226 = vperm.xlu0 %4225, %v2396
          %v4227 = vpop.permute.xlu0 %4226
          %4230 = vset.pattern.permute.xlu0 0
          %4231 = vperm.xlu0 %4230, %v2397
          %v4232 = vpop.permute.xlu0 %4231
          %4235 = vset.pattern.permute.xlu0 0
          %4236 = vperm.xlu0 %4235, %v2398
          %v4237 = vpop.permute.xlu0 %4236
          %4240 = vset.pattern.permute.xlu0 0
          %4241 = vperm.xlu0 %4240, %v2399
          %v4242 = vpop.permute.xlu0 %4241
          %4245 = vset.pattern.permute.xlu0 0
          %4246 = vperm.xlu0 %4245, %v2400
          %v4247 = vpop.permute.xlu0 %4246
          %4250 = vset.pattern.permute.xlu0 0
          %4251 = vperm.xlu0 %4250, %v2401
          %v4252 = vpop.permute.xlu0 %4251
          %4255 = vset.pattern.permute.xlu0 0
          %4256 = vperm.xlu0 %4255, %v2402
          %v4257 = vpop.permute.xlu0 %4256
          %4260 = vset.pattern.permute.xlu0 0
          %4261 = vperm.xlu0 %4260, %v2403
          %v4262 = vpop.permute.xlu0 %4261
          %4265 = vset.pattern.permute.xlu0 0
          %4266 = vperm.xlu0 %4265, %v2404
          %v4267 = vpop.permute.xlu0 %4266
          %4270 = vset.pattern.permute.xlu0 0
          %4271 = vperm.xlu0 %4270, %v2405
          %v4272 = vpop.permute.xlu0 %4271
          %v4274 = vperm.slane %v4173, 0
          %v4275 = vmul.f32 %v4197, %v4274
          %v4276 = vmul.f32 %v4202, %v4274
          %v4277 = vmul.f32 %v4207, %v4274
          %v4278 = vmul.f32 %v4212, %v4274
          %v4279 = vmul.f32 %v4217, %v4274
          %v4280 = vmul.f32 %v4222, %v4274
          %v4281 = vmul.f32 %v4227, %v4274
          %v4282 = vmul.f32 %v4232, %v4274
          %v4283 = vmul.f32 %v4237, %v4274
          %v4284 = vmul.f32 %v4242, %v4274
          %v4285 = vmul.f32 %v4247, %v4274
          %v4286 = vmul.f32 %v4252, %v4274
          %v4287 = vmul.f32 %v4257, %v4274
          %v4288 = vmul.f32 %v4262, %v4274
          %v4289 = vmul.f32 %v4267, %v4274
          %v4290 = vmul.f32 %v4272, %v4274
          %v4291 = vadd.f32 %v4178, %v4275
          %v4292 = vadd.f32 %v4179, %v4276
          %v4293 = vadd.f32 %v4180, %v4277
          %v4294 = vadd.f32 %v4181, %v4278
          %v4295 = vadd.f32 %v4182, %v4279
          %v4296 = vadd.f32 %v4183, %v4280
          %v4297 = vadd.f32 %v4184, %v4281
          %v4298 = vadd.f32 %v4185, %v4282
          %v4299 = vadd.f32 %v4186, %v4283
          %v4300 = vadd.f32 %v4187, %v4284
          %v4301 = vadd.f32 %v4188, %v4285
          %v4302 = vadd.f32 %v4189, %v4286
          %v4303 = vadd.f32 %v4190, %v4287
          %v4304 = vadd.f32 %v4191, %v4288
          %v4305 = vadd.f32 %v4192, %v4289
          %v4306 = vadd.f32 %v4193, %v4290
          %4308 = vset.pattern.permute.xlu0 0
          %4309 = vperm.xlu0 %4308, %v1240
          %v4310 = vpop.permute.xlu0 %4309
          %4313 = vset.pattern.permute.xlu0 0
          %4314 = vperm.xlu0 %4313, %v1241
          %v4315 = vpop.permute.xlu0 %4314
          %4318 = vset.pattern.permute.xlu0 0
          %4319 = vperm.xlu0 %4318, %v1242
          %v4320 = vpop.permute.xlu0 %4319
          %4323 = vset.pattern.permute.xlu0 0
          %4324 = vperm.xlu0 %4323, %v1243
          %v4325 = vpop.permute.xlu0 %4324
          %4328 = vset.pattern.permute.xlu0 0
          %4329 = vperm.xlu0 %4328, %v1244
          %v4330 = vpop.permute.xlu0 %4329
          %4333 = vset.pattern.permute.xlu0 0
          %4334 = vperm.xlu0 %4333, %v1245
          %v4335 = vpop.permute.xlu0 %4334
          %4338 = vset.pattern.permute.xlu0 0
          %4339 = vperm.xlu0 %4338, %v1246
          %v4340 = vpop.permute.xlu0 %4339
          %4343 = vset.pattern.permute.xlu0 0
          %4344 = vperm.xlu0 %4343, %v1247
          %v4345 = vpop.permute.xlu0 %4344
          %4348 = vset.pattern.permute.xlu0 0
          %4349 = vperm.xlu0 %4348, %v1248
          %v4350 = vpop.permute.xlu0 %4349
          %4353 = vset.pattern.permute.xlu0 0
          %4354 = vperm.xlu0 %4353, %v1249
          %v4355 = vpop.permute.xlu0 %4354
          %4358 = vset.pattern.permute.xlu0 0
          %4359 = vperm.xlu0 %4358, %v1250
          %v4360 = vpop.permute.xlu0 %4359
          %4363 = vset.pattern.permute.xlu0 0
          %4364 = vperm.xlu0 %4363, %v1251
          %v4365 = vpop.permute.xlu0 %4364
          %4368 = vset.pattern.permute.xlu0 0
          %4369 = vperm.xlu0 %4368, %v1252
          %v4370 = vpop.permute.xlu0 %4369
          %4373 = vset.pattern.permute.xlu0 0
          %4374 = vperm.xlu0 %4373, %v1253
          %v4375 = vpop.permute.xlu0 %4374
          %4378 = vset.pattern.permute.xlu0 0
          %4379 = vperm.xlu0 %4378, %v1254
          %v4380 = vpop.permute.xlu0 %4379
          %4383 = vset.pattern.permute.xlu0 0
          %4384 = vperm.xlu0 %4383, %v1255
          %v4385 = vpop.permute.xlu0 %4384
          %v4387 = vperm.slane %v4173, 1
          %v4388 = vmul.f32 %v4310, %v4387
          %v4389 = vmul.f32 %v4315, %v4387
          %v4390 = vmul.f32 %v4320, %v4387
          %v4391 = vmul.f32 %v4325, %v4387
          %v4392 = vmul.f32 %v4330, %v4387
          %v4393 = vmul.f32 %v4335, %v4387
          %v4394 = vmul.f32 %v4340, %v4387
          %v4395 = vmul.f32 %v4345, %v4387
          %v4396 = vmul.f32 %v4350, %v4387
          %v4397 = vmul.f32 %v4355, %v4387
          %v4398 = vmul.f32 %v4360, %v4387
          %v4399 = vmul.f32 %v4365, %v4387
          %v4400 = vmul.f32 %v4370, %v4387
          %v4401 = vmul.f32 %v4375, %v4387
          %v4402 = vmul.f32 %v4380, %v4387
          %v4403 = vmul.f32 %v4385, %v4387
          %v4404 = vadd.f32 %v4291, %v4388
          %v4405 = vadd.f32 %v4292, %v4389
          %v4406 = vadd.f32 %v4293, %v4390
          %v4407 = vadd.f32 %v4294, %v4391
          %v4408 = vadd.f32 %v4295, %v4392
          %v4409 = vadd.f32 %v4296, %v4393
          %v4410 = vadd.f32 %v4297, %v4394
          %v4411 = vadd.f32 %v4298, %v4395
          %v4412 = vadd.f32 %v4299, %v4396
          %v4413 = vadd.f32 %v4300, %v4397
          %v4414 = vadd.f32 %v4301, %v4398
          %v4415 = vadd.f32 %v4302, %v4399
          %v4416 = vadd.f32 %v4303, %v4400
          %v4417 = vadd.f32 %v4304, %v4401
          %v4418 = vadd.f32 %v4305, %v4402
          %v4419 = vadd.f32 %v4306, %v4403
          %v4420 = vxor.u32 %v4404, 2147483648
          %v4421 = vxor.u32 %v4405, 2147483648
          %v4422 = vxor.u32 %v4406, 2147483648
          %v4423 = vxor.u32 %v4407, 2147483648
          %v4424 = vxor.u32 %v4408, 2147483648
          %v4425 = vxor.u32 %v4409, 2147483648
          %v4426 = vxor.u32 %v4410, 2147483648
          %v4427 = vxor.u32 %v4411, 2147483648
          %v4428 = vxor.u32 %v4412, 2147483648
          %v4429 = vxor.u32 %v4413, 2147483648
          %v4430 = vxor.u32 %v4414, 2147483648
          %v4431 = vxor.u32 %v4415, 2147483648
          %v4432 = vxor.u32 %v4416, 2147483648
          %v4433 = vxor.u32 %v4417, 2147483648
          %v4434 = vxor.u32 %v4418, 2147483648
          %v4435 = vxor.u32 %v4419, 2147483648
          %v4436 = vmul.f32 %v4420, 1.442695
          %v4437 = vpow.pop %v4436
          %v4438 = vmul.f32 %v4421, 1.442695
          %v4439 = vpow.pop %v4438
          %v4440 = vmul.f32 %v4422, 1.442695
          %v4441 = vpow.pop %v4440
          %v4442 = vmul.f32 %v4423, 1.442695
          %v4443 = vpow.pop %v4442
          %v4444 = vmul.f32 %v4424, 1.442695
          %v4445 = vpow.pop %v4444
          %v4446 = vmul.f32 %v4425, 1.442695
          %v4447 = vpow.pop %v4446
          %v4448 = vmul.f32 %v4426, 1.442695
          %v4449 = vpow.pop %v4448
          %v4450 = vmul.f32 %v4427, 1.442695
          %v4451 = vpow.pop %v4450
          %v4452 = vmul.f32 %v4428, 1.442695
          %v4453 = vpow.pop %v4452
          %v4454 = vmul.f32 %v4429, 1.442695
          %v4455 = vpow.pop %v4454
          %v4456 = vmul.f32 %v4430, 1.442695
          %v4457 = vpow.pop %v4456
          %v4458 = vmul.f32 %v4431, 1.442695
          %v4459 = vpow.pop %v4458
          %v4460 = vmul.f32 %v4432, 1.442695
          %v4461 = vpow.pop %v4460
          %v4462 = vmul.f32 %v4433, 1.442695
          %v4463 = vpow.pop %v4462
          %v4464 = vmul.f32 %v4434, 1.442695
          %v4465 = vpow.pop %v4464
          %v4466 = vmul.f32 %v4435, 1.442695
          %v4467 = vpow.pop %v4466
          %v4468 = vadd.f32 %v4437, 1.0
          %v4469 = vadd.f32 %v4439, 1.0
          %v4470 = vadd.f32 %v4441, 1.0
          %v4471 = vadd.f32 %v4443, 1.0
          %v4472 = vadd.f32 %v4445, 1.0
          %v4473 = vadd.f32 %v4447, 1.0
          %v4474 = vadd.f32 %v4449, 1.0
          %v4475 = vadd.f32 %v4451, 1.0
          %v4476 = vadd.f32 %v4453, 1.0
          %v4477 = vadd.f32 %v4455, 1.0
          %v4478 = vadd.f32 %v4457, 1.0
          %v4479 = vadd.f32 %v4459, 1.0
          %v4480 = vadd.f32 %v4461, 1.0
          %v4481 = vadd.f32 %v4463, 1.0
          %v4482 = vadd.f32 %v4465, 1.0
          %v4483 = vadd.f32 %v4467, 1.0
          %v4484 = vrcp.pop %v4468
          %v4485 = vmul.f32 %v4468, %v4484
          %v4486 = vsub.f32 1.0, %v4485
          %v4487 = vmul.f32 %v4484, %v4486
          %v4488 = vadd.f32 %v4484, %v4487
          %vm4489 = vweird.f32 %v4468
          %vm4490 = vweird.f32 %v4484
          %vm4491 = vmor %vm4489, %vm4490
          %v4492 = vsel %vm4491, %v4484, %v4488
          %v4493 = vand.u32 2147483647, %v4468
          %vm4494 = vcmp.eq.f32.partialorder %v4493, 8.507059e+37
          %v4495 = vand.u32 %v4468, 2147483648
          %v4496 = vor.u32 1.1754944e-38, %v4495
          %v4497 = vsel %vm4494, %v4496, %v4492
          %v4498 = vmul.f32 1.0, %v4497
          %v4499 = vrcp.pop %v4469
          %v4500 = vmul.f32 %v4469, %v4499
          %v4501 = vsub.f32 1.0, %v4500
          %v4502 = vmul.f32 %v4499, %v4501
          %v4503 = vadd.f32 %v4499, %v4502
          %vm4504 = vweird.f32 %v4469
          %vm4505 = vweird.f32 %v4499
          %vm4506 = vmor %vm4504, %vm4505
          %v4507 = vsel %vm4506, %v4499, %v4503
          %v4508 = vand.u32 2147483647, %v4469
          %vm4509 = vcmp.eq.f32.partialorder %v4508, 8.507059e+37
          %v4510 = vand.u32 %v4469, 2147483648
          %v4511 = vor.u32 1.1754944e-38, %v4510
          %v4512 = vsel %vm4509, %v4511, %v4507
          %v4513 = vmul.f32 1.0, %v4512
          %v4514 = vrcp.pop %v4470
          %v4515 = vmul.f32 %v4470, %v4514
          %v4516 = vsub.f32 1.0, %v4515
          %v4517 = vmul.f32 %v4514, %v4516
          %v4518 = vadd.f32 %v4514, %v4517
          %vm4519 = vweird.f32 %v4470
          %vm4520 = vweird.f32 %v4514
          %vm4521 = vmor %vm4519, %vm4520
          %v4522 = vsel %vm4521, %v4514, %v4518
          %v4523 = vand.u32 2147483647, %v4470
          %vm4524 = vcmp.eq.f32.partialorder %v4523, 8.507059e+37
          %v4525 = vand.u32 %v4470, 2147483648
          %v4526 = vor.u32 1.1754944e-38, %v4525
          %v4527 = vsel %vm4524, %v4526, %v4522
          %v4528 = vmul.f32 1.0, %v4527
          %v4529 = vrcp.pop %v4471
          %v4530 = vmul.f32 %v4471, %v4529
          %v4531 = vsub.f32 1.0, %v4530
          %v4532 = vmul.f32 %v4529, %v4531
          %v4533 = vadd.f32 %v4529, %v4532
          %vm4534 = vweird.f32 %v4471
          %vm4535 = vweird.f32 %v4529
          %vm4536 = vmor %vm4534, %vm4535
          %v4537 = vsel %vm4536, %v4529, %v4533
          %v4538 = vand.u32 2147483647, %v4471
          %vm4539 = vcmp.eq.f32.partialorder %v4538, 8.507059e+37
          %v4540 = vand.u32 %v4471, 2147483648
          %v4541 = vor.u32 1.1754944e-38, %v4540
          %v4542 = vsel %vm4539, %v4541, %v4537
          %v4543 = vmul.f32 1.0, %v4542
          %v4544 = vrcp.pop %v4472
          %v4545 = vmul.f32 %v4472, %v4544
          %v4546 = vsub.f32 1.0, %v4545
          %v4547 = vmul.f32 %v4544, %v4546
          %v4548 = vadd.f32 %v4544, %v4547
          %vm4549 = vweird.f32 %v4472
          %vm4550 = vweird.f32 %v4544
          %vm4551 = vmor %vm4549, %vm4550
          %v4552 = vsel %vm4551, %v4544, %v4548
          %v4553 = vand.u32 2147483647, %v4472
          %vm4554 = vcmp.eq.f32.partialorder %v4553, 8.507059e+37
          %v4555 = vand.u32 %v4472, 2147483648
          %v4556 = vor.u32 1.1754944e-38, %v4555
          %v4557 = vsel %vm4554, %v4556, %v4552
          %v4558 = vmul.f32 1.0, %v4557
          %v4559 = vrcp.pop %v4473
          %v4560 = vmul.f32 %v4473, %v4559
          %v4561 = vsub.f32 1.0, %v4560
          %v4562 = vmul.f32 %v4559, %v4561
          %v4563 = vadd.f32 %v4559, %v4562
          %vm4564 = vweird.f32 %v4473
          %vm4565 = vweird.f32 %v4559
          %vm4566 = vmor %vm4564, %vm4565
          %v4567 = vsel %vm4566, %v4559, %v4563
          %v4568 = vand.u32 2147483647, %v4473
          %vm4569 = vcmp.eq.f32.partialorder %v4568, 8.507059e+37
          %v4570 = vand.u32 %v4473, 2147483648
          %v4571 = vor.u32 1.1754944e-38, %v4570
          %v4572 = vsel %vm4569, %v4571, %v4567
          %v4573 = vmul.f32 1.0, %v4572
          %v4574 = vrcp.pop %v4474
          %v4575 = vmul.f32 %v4474, %v4574
          %v4576 = vsub.f32 1.0, %v4575
          %v4577 = vmul.f32 %v4574, %v4576
          %v4578 = vadd.f32 %v4574, %v4577
          %vm4579 = vweird.f32 %v4474
          %vm4580 = vweird.f32 %v4574
          %vm4581 = vmor %vm4579, %vm4580
          %v4582 = vsel %vm4581, %v4574, %v4578
          %v4583 = vand.u32 2147483647, %v4474
          %vm4584 = vcmp.eq.f32.partialorder %v4583, 8.507059e+37
          %v4585 = vand.u32 %v4474, 2147483648
          %v4586 = vor.u32 1.1754944e-38, %v4585
          %v4587 = vsel %vm4584, %v4586, %v4582
          %v4588 = vmul.f32 1.0, %v4587
          %v4589 = vrcp.pop %v4475
          %v4590 = vmul.f32 %v4475, %v4589
          %v4591 = vsub.f32 1.0, %v4590
          %v4592 = vmul.f32 %v4589, %v4591
          %v4593 = vadd.f32 %v4589, %v4592
          %vm4594 = vweird.f32 %v4475
          %vm4595 = vweird.f32 %v4589
          %vm4596 = vmor %vm4594, %vm4595
          %v4597 = vsel %vm4596, %v4589, %v4593
          %v4598 = vand.u32 2147483647, %v4475
          %vm4599 = vcmp.eq.f32.partialorder %v4598, 8.507059e+37
          %v4600 = vand.u32 %v4475, 2147483648
          %v4601 = vor.u32 1.1754944e-38, %v4600
          %v4602 = vsel %vm4599, %v4601, %v4597
          %v4603 = vmul.f32 1.0, %v4602
          %v4604 = vrcp.pop %v4476
          %v4605 = vmul.f32 %v4476, %v4604
          %v4606 = vsub.f32 1.0, %v4605
          %v4607 = vmul.f32 %v4604, %v4606
          %v4608 = vadd.f32 %v4604, %v4607
          %vm4609 = vweird.f32 %v4476
          %vm4610 = vweird.f32 %v4604
          %vm4611 = vmor %vm4609, %vm4610
          %v4612 = vsel %vm4611, %v4604, %v4608
          %v4613 = vand.u32 2147483647, %v4476
          %vm4614 = vcmp.eq.f32.partialorder %v4613, 8.507059e+37
          %v4615 = vand.u32 %v4476, 2147483648
          %v4616 = vor.u32 1.1754944e-38, %v4615
          %v4617 = vsel %vm4614, %v4616, %v4612
          %v4618 = vmul.f32 1.0, %v4617
          %v4619 = vrcp.pop %v4477
          %v4620 = vmul.f32 %v4477, %v4619
          %v4621 = vsub.f32 1.0, %v4620
          %v4622 = vmul.f32 %v4619, %v4621
          %v4623 = vadd.f32 %v4619, %v4622
          %vm4624 = vweird.f32 %v4477
          %vm4625 = vweird.f32 %v4619
          %vm4626 = vmor %vm4624, %vm4625
          %v4627 = vsel %vm4626, %v4619, %v4623
          %v4628 = vand.u32 2147483647, %v4477
          %vm4629 = vcmp.eq.f32.partialorder %v4628, 8.507059e+37
          %v4630 = vand.u32 %v4477, 2147483648
          %v4631 = vor.u32 1.1754944e-38, %v4630
          %v4632 = vsel %vm4629, %v4631, %v4627
          %v4633 = vmul.f32 1.0, %v4632
          %v4634 = vrcp.pop %v4478
          %v4635 = vmul.f32 %v4478, %v4634
          %v4636 = vsub.f32 1.0, %v4635
          %v4637 = vmul.f32 %v4634, %v4636
          %v4638 = vadd.f32 %v4634, %v4637
          %vm4639 = vweird.f32 %v4478
          %vm4640 = vweird.f32 %v4634
          %vm4641 = vmor %vm4639, %vm4640
          %v4642 = vsel %vm4641, %v4634, %v4638
          %v4643 = vand.u32 2147483647, %v4478
          %vm4644 = vcmp.eq.f32.partialorder %v4643, 8.507059e+37
          %v4645 = vand.u32 %v4478, 2147483648
          %v4646 = vor.u32 1.1754944e-38, %v4645
          %v4647 = vsel %vm4644, %v4646, %v4642
          %v4648 = vmul.f32 1.0, %v4647
          %v4649 = vrcp.pop %v4479
          %v4650 = vmul.f32 %v4479, %v4649
          %v4651 = vsub.f32 1.0, %v4650
          %v4652 = vmul.f32 %v4649, %v4651
          %v4653 = vadd.f32 %v4649, %v4652
          %vm4654 = vweird.f32 %v4479
          %vm4655 = vweird.f32 %v4649
          %vm4656 = vmor %vm4654, %vm4655
          %v4657 = vsel %vm4656, %v4649, %v4653
          %v4658 = vand.u32 2147483647, %v4479
          %vm4659 = vcmp.eq.f32.partialorder %v4658, 8.507059e+37
          %v4660 = vand.u32 %v4479, 2147483648
          %v4661 = vor.u32 1.1754944e-38, %v4660
          %v4662 = vsel %vm4659, %v4661, %v4657
          %v4663 = vmul.f32 1.0, %v4662
          %v4664 = vrcp.pop %v4480
          %v4665 = vmul.f32 %v4480, %v4664
          %v4666 = vsub.f32 1.0, %v4665
          %v4667 = vmul.f32 %v4664, %v4666
          %v4668 = vadd.f32 %v4664, %v4667
          %vm4669 = vweird.f32 %v4480
          %vm4670 = vweird.f32 %v4664
          %vm4671 = vmor %vm4669, %vm4670
          %v4672 = vsel %vm4671, %v4664, %v4668
          %v4673 = vand.u32 2147483647, %v4480
          %vm4674 = vcmp.eq.f32.partialorder %v4673, 8.507059e+37
          %v4675 = vand.u32 %v4480, 2147483648
          %v4676 = vor.u32 1.1754944e-38, %v4675
          %v4677 = vsel %vm4674, %v4676, %v4672
          %v4678 = vmul.f32 1.0, %v4677
          %v4679 = vrcp.pop %v4481
          %v4680 = vmul.f32 %v4481, %v4679
          %v4681 = vsub.f32 1.0, %v4680
          %v4682 = vmul.f32 %v4679, %v4681
          %v4683 = vadd.f32 %v4679, %v4682
          %vm4684 = vweird.f32 %v4481
          %vm4685 = vweird.f32 %v4679
          %vm4686 = vmor %vm4684, %vm4685
          %v4687 = vsel %vm4686, %v4679, %v4683
          %v4688 = vand.u32 2147483647, %v4481
          %vm4689 = vcmp.eq.f32.partialorder %v4688, 8.507059e+37
          %v4690 = vand.u32 %v4481, 2147483648
          %v4691 = vor.u32 1.1754944e-38, %v4690
          %v4692 = vsel %vm4689, %v4691, %v4687
          %v4693 = vmul.f32 1.0, %v4692
          %v4694 = vrcp.pop %v4482
          %v4695 = vmul.f32 %v4482, %v4694
          %v4696 = vsub.f32 1.0, %v4695
          %v4697 = vmul.f32 %v4694, %v4696
          %v4698 = vadd.f32 %v4694, %v4697
          %vm4699 = vweird.f32 %v4482
          %vm4700 = vweird.f32 %v4694
          %vm4701 = vmor %vm4699, %vm4700
          %v4702 = vsel %vm4701, %v4694, %v4698
          %v4703 = vand.u32 2147483647, %v4482
          %vm4704 = vcmp.eq.f32.partialorder %v4703, 8.507059e+37
          %v4705 = vand.u32 %v4482, 2147483648
          %v4706 = vor.u32 1.1754944e-38, %v4705
          %v4707 = vsel %vm4704, %v4706, %v4702
          %v4708 = vmul.f32 1.0, %v4707
          %v4709 = vrcp.pop %v4483
          %v4710 = vmul.f32 %v4483, %v4709
          %v4711 = vsub.f32 1.0, %v4710
          %v4712 = vmul.f32 %v4709, %v4711
          %v4713 = vadd.f32 %v4709, %v4712
          %vm4714 = vweird.f32 %v4483
          %vm4715 = vweird.f32 %v4709
          %vm4716 = vmor %vm4714, %vm4715
          %v4717 = vsel %vm4716, %v4709, %v4713
          %v4718 = vand.u32 2147483647, %v4483
          %vm4719 = vcmp.eq.f32.partialorder %v4718, 8.507059e+37
          %v4720 = vand.u32 %v4483, 2147483648
          %v4721 = vor.u32 1.1754944e-38, %v4720
          %v4722 = vsel %vm4719, %v4721, %v4717
          %v4723 = vmul.f32 1.0, %v4722
          %v4724 = vmul.f32 %v4404, %v4498
          %v4725 = vmul.f32 %v4405, %v4513
          %v4726 = vmul.f32 %v4406, %v4528
          %v4727 = vmul.f32 %v4407, %v4543
          %v4728 = vmul.f32 %v4408, %v4558
          %v4729 = vmul.f32 %v4409, %v4573
          %v4730 = vmul.f32 %v4410, %v4588
          %v4731 = vmul.f32 %v4411, %v4603
          %v4732 = vmul.f32 %v4412, %v4618
          %v4733 = vmul.f32 %v4413, %v4633
          %v4734 = vmul.f32 %v4414, %v4648
          %v4735 = vmul.f32 %v4415, %v4663
          %v4736 = vmul.f32 %v4416, %v4678
          %v4737 = vmul.f32 %v4417, %v4693
          %v4738 = vmul.f32 %v4418, %v4708
          %v4739 = vmul.f32 %v4419, %v4723
          %v4740 = vld [vmem:[%s23] sm:$0xff]
          %v4741 = vld [vmem:[%s23 + $0x8] sm:$0xff]
          %v4742 = vld [vmem:[%s23 + $0x10] sm:$0xff]
          %v4743 = vld [vmem:[%s23 + $0x18] sm:$0xff]
          %v4744 = vld [vmem:[%s24] sm:$0x1]
          %v4746 = vperm.slane %v4744, 0
          %v4749 = vsel %vm1474, %v4724, 0
          %v4752 = vsel %vm1474, %v4725, 0
          %v4755 = vsel %vm1474, %v4726, 0
          %v4758 = vsel %vm1474, %v4727, 0
          %v4761 = vsel %vm1474, %v4728, 0
          %v4764 = vsel %vm1474, %v4729, 0
          %v4767 = vsel %vm1474, %v4730, 0
          %v4770 = vsel %vm1474, %v4731, 0
          %v4773 = vsel %vm1474, %v4732, 0
          %v4776 = vsel %vm1474, %v4733, 0
          %v4779 = vsel %vm1474, %v4734, 0
          %v4782 = vsel %vm1474, %v4735, 0
          %v4785 = vsel %vm1474, %v4736, 0
          %v4788 = vsel %vm1474, %v4737, 0
          %v4791 = vsel %vm1474, %v4738, 0
          %v4794 = vsel %vm1474, %v4739, 0
          %4796 = vmatpush.msra.mxu0 0.0
          %4797 = vmatpush.msra.mxu0 0.0
          %4798 = vmatpush.msra.mxu0 0.0
          %4799 = vmatpush.msra.mxu0 0.0
          %4800 = vmatpush.msra.mxu0 0.0
          %4801 = vmatpush.msra.mxu0 0.0
          %4802 = vmatpush.msra.mxu0 0.0
          %4803 = vmatpush.msra.mxu0 0.0
          %4804 = vmatpush.msra.mxu0 0.0
          %4805 = vmatpush.msra.mxu0 0.0
          %4806 = vmatpush.msra.mxu0 0.0
          %4807 = vmatpush.msra.mxu0 0.0
          %4808 = vmatpush.msra.mxu0 %v4743
          %4809 = vmatpush.msra.mxu0 %v4742
          %4810 = vmatpush.msra.mxu0 %v4741
          %4811 = vmatpush.msra.mxu0 %v4740
          %4812 = vmatmul.f32.gmra.mxu0 %v4749
          %v4813 = vpop.f32.mrf.mxu0
          %v4814 = vadd.f32 %v4746, %v4813
          %4815 = vmatmul.f32.gmra.mxu0 %v4752
          %v4816 = vpop.f32.mrf.mxu0
          %v4817 = vadd.f32 %v4746, %v4816
          %4818 = vmatmul.f32.gmra.mxu0 %v4755
          %v4819 = vpop.f32.mrf.mxu0
          %v4820 = vadd.f32 %v4746, %v4819
          %4821 = vmatmul.f32.gmra.mxu0 %v4758
          %v4822 = vpop.f32.mrf.mxu0
          %v4823 = vadd.f32 %v4746, %v4822
          %4824 = vmatmul.f32.gmra.mxu0 %v4761
          %v4825 = vpop.f32.mrf.mxu0
          %v4826 = vadd.f32 %v4746, %v4825
          %4827 = vmatmul.f32.gmra.mxu0 %v4764
          %v4828 = vpop.f32.mrf.mxu0
          %v4829 = vadd.f32 %v4746, %v4828
          %4830 = vmatmul.f32.gmra.mxu0 %v4767
          %v4831 = vpop.f32.mrf.mxu0
          %v4832 = vadd.f32 %v4746, %v4831
          %4833 = vmatmul.f32.gmra.mxu0 %v4770
          %v4834 = vpop.f32.mrf.mxu0
          %v4835 = vadd.f32 %v4746, %v4834
          %4836 = vmatmul.f32.gmra.mxu0 %v4773
          %v4837 = vpop.f32.mrf.mxu0
          %v4838 = vadd.f32 %v4746, %v4837
          %4839 = vmatmul.f32.gmra.mxu0 %v4776
          %v4840 = vpop.f32.mrf.mxu0
          %v4841 = vadd.f32 %v4746, %v4840
          %4842 = vmatmul.f32.gmra.mxu0 %v4779
          %v4843 = vpop.f32.mrf.mxu0
          %v4844 = vadd.f32 %v4746, %v4843
          %4845 = vmatmul.f32.gmra.mxu0 %v4782
          %v4846 = vpop.f32.mrf.mxu0
          %v4847 = vadd.f32 %v4746, %v4846
          %4848 = vmatmul.f32.gmra.mxu0 %v4785
          %v4849 = vpop.f32.mrf.mxu0
          %v4850 = vadd.f32 %v4746, %v4849
          %4851 = vmatmul.f32.gmra.mxu0 %v4788
          %v4852 = vpop.f32.mrf.mxu0
          %v4853 = vadd.f32 %v4746, %v4852
          %4854 = vmatmul.f32.gmra.mxu0 %v4791
          %v4855 = vpop.f32.mrf.mxu0
          %v4856 = vadd.f32 %v4746, %v4855
          %4857 = vmatmul.f32.gmra.mxu0 %v4794
          %v4858 = vpop.f32.mrf.mxu0
          %v4859 = vadd.f32 %v4746, %v4858
          %4860 = vdwg.mxu0
          %v4861 = vxor.u32 %v4814, 2147483648
          %v4862 = vxor.u32 %v4817, 2147483648
          %v4863 = vxor.u32 %v4820, 2147483648
          %v4864 = vxor.u32 %v4823, 2147483648
          %v4865 = vxor.u32 %v4826, 2147483648
          %v4866 = vxor.u32 %v4829, 2147483648
          %v4867 = vxor.u32 %v4832, 2147483648
          %v4868 = vxor.u32 %v4835, 2147483648
          %v4869 = vxor.u32 %v4838, 2147483648
          %v4870 = vxor.u32 %v4841, 2147483648
          %v4871 = vxor.u32 %v4844, 2147483648
          %v4872 = vxor.u32 %v4847, 2147483648
          %v4873 = vxor.u32 %v4850, 2147483648
          %v4874 = vxor.u32 %v4853, 2147483648
          %v4875 = vxor.u32 %v4856, 2147483648
          %v4876 = vxor.u32 %v4859, 2147483648
          %v4877 = vmul.f32 %v4861, 1.442695
          %v4878 = vpow.pop %v4877
          %v4879 = vmul.f32 %v4862, 1.442695
          %v4880 = vpow.pop %v4879
          %v4881 = vmul.f32 %v4863, 1.442695
          %v4882 = vpow.pop %v4881
          %v4883 = vmul.f32 %v4864, 1.442695
          %v4884 = vpow.pop %v4883
          %v4885 = vmul.f32 %v4865, 1.442695
          %v4886 = vpow.pop %v4885
          %v4887 = vmul.f32 %v4866, 1.442695
          %v4888 = vpow.pop %v4887
          %v4889 = vmul.f32 %v4867, 1.442695
          %v4890 = vpow.pop %v4889
          %v4891 = vmul.f32 %v4868, 1.442695
          %v4892 = vpow.pop %v4891
          %v4893 = vmul.f32 %v4869, 1.442695
          %v4894 = vpow.pop %v4893
          %v4895 = vmul.f32 %v4870, 1.442695
          %v4896 = vpow.pop %v4895
          %v4897 = vmul.f32 %v4871, 1.442695
          %v4898 = vpow.pop %v4897
          %v4899 = vmul.f32 %v4872, 1.442695
          %v4900 = vpow.pop %v4899
          %v4901 = vmul.f32 %v4873, 1.442695
          %v4902 = vpow.pop %v4901
          %v4903 = vmul.f32 %v4874, 1.442695
          %v4904 = vpow.pop %v4903
          %v4905 = vmul.f32 %v4875, 1.442695
          %v4906 = vpow.pop %v4905
          %v4907 = vmul.f32 %v4876, 1.442695
          %v4908 = vpow.pop %v4907
          %v4909 = vadd.f32 %v4878, 1.0
          %v4910 = vadd.f32 %v4880, 1.0
          %v4911 = vadd.f32 %v4882, 1.0
          %v4912 = vadd.f32 %v4884, 1.0
          %v4913 = vadd.f32 %v4886, 1.0
          %v4914 = vadd.f32 %v4888, 1.0
          %v4915 = vadd.f32 %v4890, 1.0
          %v4916 = vadd.f32 %v4892, 1.0
          %v4917 = vadd.f32 %v4894, 1.0
          %v4918 = vadd.f32 %v4896, 1.0
          %v4919 = vadd.f32 %v4898, 1.0
          %v4920 = vadd.f32 %v4900, 1.0
          %v4921 = vadd.f32 %v4902, 1.0
          %v4922 = vadd.f32 %v4904, 1.0
          %v4923 = vadd.f32 %v4906, 1.0
          %v4924 = vadd.f32 %v4908, 1.0
          %v4925 = vrcp.pop %v4909
          %v4926 = vmul.f32 %v4909, %v4925
          %v4927 = vsub.f32 1.0, %v4926
          %v4928 = vmul.f32 %v4925, %v4927
          %v4929 = vadd.f32 %v4925, %v4928
          %vm4930 = vweird.f32 %v4909
          %vm4931 = vweird.f32 %v4925
          %vm4932 = vmor %vm4930, %vm4931
          %v4933 = vsel %vm4932, %v4925, %v4929
          %v4934 = vand.u32 2147483647, %v4909
          %vm4935 = vcmp.eq.f32.partialorder %v4934, 8.507059e+37
          %v4936 = vand.u32 %v4909, 2147483648
          %v4937 = vor.u32 1.1754944e-38, %v4936
          %v4938 = vsel %vm4935, %v4937, %v4933
          %v4939 = vmul.f32 1.0, %v4938
          %v4940 = vrcp.pop %v4910
          %v4941 = vmul.f32 %v4910, %v4940
          %v4942 = vsub.f32 1.0, %v4941
          %v4943 = vmul.f32 %v4940, %v4942
          %v4944 = vadd.f32 %v4940, %v4943
          %vm4945 = vweird.f32 %v4910
          %vm4946 = vweird.f32 %v4940
          %vm4947 = vmor %vm4945, %vm4946
          %v4948 = vsel %vm4947, %v4940, %v4944
          %v4949 = vand.u32 2147483647, %v4910
          %vm4950 = vcmp.eq.f32.partialorder %v4949, 8.507059e+37
          %v4951 = vand.u32 %v4910, 2147483648
          %v4952 = vor.u32 1.1754944e-38, %v4951
          %v4953 = vsel %vm4950, %v4952, %v4948
          %v4954 = vmul.f32 1.0, %v4953
          %v4955 = vrcp.pop %v4911
          %v4956 = vmul.f32 %v4911, %v4955
          %v4957 = vsub.f32 1.0, %v4956
          %v4958 = vmul.f32 %v4955, %v4957
          %v4959 = vadd.f32 %v4955, %v4958
          %vm4960 = vweird.f32 %v4911
          %vm4961 = vweird.f32 %v4955
          %vm4962 = vmor %vm4960, %vm4961
          %v4963 = vsel %vm4962, %v4955, %v4959
          %v4964 = vand.u32 2147483647, %v4911
          %vm4965 = vcmp.eq.f32.partialorder %v4964, 8.507059e+37
          %v4966 = vand.u32 %v4911, 2147483648
          %v4967 = vor.u32 1.1754944e-38, %v4966
          %v4968 = vsel %vm4965, %v4967, %v4963
          %v4969 = vmul.f32 1.0, %v4968
          %v4970 = vrcp.pop %v4912
          %v4971 = vmul.f32 %v4912, %v4970
          %v4972 = vsub.f32 1.0, %v4971
          %v4973 = vmul.f32 %v4970, %v4972
          %v4974 = vadd.f32 %v4970, %v4973
          %vm4975 = vweird.f32 %v4912
          %vm4976 = vweird.f32 %v4970
          %vm4977 = vmor %vm4975, %vm4976
          %v4978 = vsel %vm4977, %v4970, %v4974
          %v4979 = vand.u32 2147483647, %v4912
          %vm4980 = vcmp.eq.f32.partialorder %v4979, 8.507059e+37
          %v4981 = vand.u32 %v4912, 2147483648
          %v4982 = vor.u32 1.1754944e-38, %v4981
          %v4983 = vsel %vm4980, %v4982, %v4978
          %v4984 = vmul.f32 1.0, %v4983
          %v4985 = vrcp.pop %v4913
          %v4986 = vmul.f32 %v4913, %v4985
          %v4987 = vsub.f32 1.0, %v4986
          %v4988 = vmul.f32 %v4985, %v4987
          %v4989 = vadd.f32 %v4985, %v4988
          %vm4990 = vweird.f32 %v4913
          %vm4991 = vweird.f32 %v4985
          %vm4992 = vmor %vm4990, %vm4991
          %v4993 = vsel %vm4992, %v4985, %v4989
          %v4994 = vand.u32 2147483647, %v4913
          %vm4995 = vcmp.eq.f32.partialorder %v4994, 8.507059e+37
          %v4996 = vand.u32 %v4913, 2147483648
          %v4997 = vor.u32 1.1754944e-38, %v4996
          %v4998 = vsel %vm4995, %v4997, %v4993
          %v4999 = vmul.f32 1.0, %v4998
          %v5000 = vrcp.pop %v4914
          %v5001 = vmul.f32 %v4914, %v5000
          %v5002 = vsub.f32 1.0, %v5001
          %v5003 = vmul.f32 %v5000, %v5002
          %v5004 = vadd.f32 %v5000, %v5003
          %vm5005 = vweird.f32 %v4914
          %vm5006 = vweird.f32 %v5000
          %vm5007 = vmor %vm5005, %vm5006
          %v5008 = vsel %vm5007, %v5000, %v5004
          %v5009 = vand.u32 2147483647, %v4914
          %vm5010 = vcmp.eq.f32.partialorder %v5009, 8.507059e+37
          %v5011 = vand.u32 %v4914, 2147483648
          %v5012 = vor.u32 1.1754944e-38, %v5011
          %v5013 = vsel %vm5010, %v5012, %v5008
          %v5014 = vmul.f32 1.0, %v5013
          %v5015 = vrcp.pop %v4915
          %v5016 = vmul.f32 %v4915, %v5015
          %v5017 = vsub.f32 1.0, %v5016
          %v5018 = vmul.f32 %v5015, %v5017
          %v5019 = vadd.f32 %v5015, %v5018
          %vm5020 = vweird.f32 %v4915
          %vm5021 = vweird.f32 %v5015
          %vm5022 = vmor %vm5020, %vm5021
          %v5023 = vsel %vm5022, %v5015, %v5019
          %v5024 = vand.u32 2147483647, %v4915
          %vm5025 = vcmp.eq.f32.partialorder %v5024, 8.507059e+37
          %v5026 = vand.u32 %v4915, 2147483648
          %v5027 = vor.u32 1.1754944e-38, %v5026
          %v5028 = vsel %vm5025, %v5027, %v5023
          %v5029 = vmul.f32 1.0, %v5028
          %v5030 = vrcp.pop %v4916
          %v5031 = vmul.f32 %v4916, %v5030
          %v5032 = vsub.f32 1.0, %v5031
          %v5033 = vmul.f32 %v5030, %v5032
          %v5034 = vadd.f32 %v5030, %v5033
          %vm5035 = vweird.f32 %v4916
          %vm5036 = vweird.f32 %v5030
          %vm5037 = vmor %vm5035, %vm5036
          %v5038 = vsel %vm5037, %v5030, %v5034
          %v5039 = vand.u32 2147483647, %v4916
          %vm5040 = vcmp.eq.f32.partialorder %v5039, 8.507059e+37
          %v5041 = vand.u32 %v4916, 2147483648
          %v5042 = vor.u32 1.1754944e-38, %v5041
          %v5043 = vsel %vm5040, %v5042, %v5038
          %v5044 = vmul.f32 1.0, %v5043
          %v5045 = vrcp.pop %v4917
          %v5046 = vmul.f32 %v4917, %v5045
          %v5047 = vsub.f32 1.0, %v5046
          %v5048 = vmul.f32 %v5045, %v5047
          %v5049 = vadd.f32 %v5045, %v5048
          %vm5050 = vweird.f32 %v4917
          %vm5051 = vweird.f32 %v5045
          %vm5052 = vmor %vm5050, %vm5051
          %v5053 = vsel %vm5052, %v5045, %v5049
          %v5054 = vand.u32 2147483647, %v4917
          %vm5055 = vcmp.eq.f32.partialorder %v5054, 8.507059e+37
          %v5056 = vand.u32 %v4917, 2147483648
          %v5057 = vor.u32 1.1754944e-38, %v5056
          %v5058 = vsel %vm5055, %v5057, %v5053
          %v5059 = vmul.f32 1.0, %v5058
          %v5060 = vrcp.pop %v4918
          %v5061 = vmul.f32 %v4918, %v5060
          %v5062 = vsub.f32 1.0, %v5061
          %v5063 = vmul.f32 %v5060, %v5062
          %v5064 = vadd.f32 %v5060, %v5063
          %vm5065 = vweird.f32 %v4918
          %vm5066 = vweird.f32 %v5060
          %vm5067 = vmor %vm5065, %vm5066
          %v5068 = vsel %vm5067, %v5060, %v5064
          %v5069 = vand.u32 2147483647, %v4918
          %vm5070 = vcmp.eq.f32.partialorder %v5069, 8.507059e+37
          %v5071 = vand.u32 %v4918, 2147483648
          %v5072 = vor.u32 1.1754944e-38, %v5071
          %v5073 = vsel %vm5070, %v5072, %v5068
          %v5074 = vmul.f32 1.0, %v5073
          %v5075 = vrcp.pop %v4919
          %v5076 = vmul.f32 %v4919, %v5075
          %v5077 = vsub.f32 1.0, %v5076
          %v5078 = vmul.f32 %v5075, %v5077
          %v5079 = vadd.f32 %v5075, %v5078
          %vm5080 = vweird.f32 %v4919
          %vm5081 = vweird.f32 %v5075
          %vm5082 = vmor %vm5080, %vm5081
          %v5083 = vsel %vm5082, %v5075, %v5079
          %v5084 = vand.u32 2147483647, %v4919
          %vm5085 = vcmp.eq.f32.partialorder %v5084, 8.507059e+37
          %v5086 = vand.u32 %v4919, 2147483648
          %v5087 = vor.u32 1.1754944e-38, %v5086
          %v5088 = vsel %vm5085, %v5087, %v5083
          %v5089 = vmul.f32 1.0, %v5088
          %v5090 = vrcp.pop %v4920
          %v5091 = vmul.f32 %v4920, %v5090
          %v5092 = vsub.f32 1.0, %v5091
          %v5093 = vmul.f32 %v5090, %v5092
          %v5094 = vadd.f32 %v5090, %v5093
          %vm5095 = vweird.f32 %v4920
          %vm5096 = vweird.f32 %v5090
          %vm5097 = vmor %vm5095, %vm5096
          %v5098 = vsel %vm5097, %v5090, %v5094
          %v5099 = vand.u32 2147483647, %v4920
          %vm5100 = vcmp.eq.f32.partialorder %v5099, 8.507059e+37
          %v5101 = vand.u32 %v4920, 2147483648
          %v5102 = vor.u32 1.1754944e-38, %v5101
          %v5103 = vsel %vm5100, %v5102, %v5098
          %v5104 = vmul.f32 1.0, %v5103
          %v5105 = vrcp.pop %v4921
          %v5106 = vmul.f32 %v4921, %v5105
          %v5107 = vsub.f32 1.0, %v5106
          %v5108 = vmul.f32 %v5105, %v5107
          %v5109 = vadd.f32 %v5105, %v5108
          %vm5110 = vweird.f32 %v4921
          %vm5111 = vweird.f32 %v5105
          %vm5112 = vmor %vm5110, %vm5111
          %v5113 = vsel %vm5112, %v5105, %v5109
          %v5114 = vand.u32 2147483647, %v4921
          %vm5115 = vcmp.eq.f32.partialorder %v5114, 8.507059e+37
          %v5116 = vand.u32 %v4921, 2147483648
          %v5117 = vor.u32 1.1754944e-38, %v5116
          %v5118 = vsel %vm5115, %v5117, %v5113
          %v5119 = vmul.f32 1.0, %v5118
          %v5120 = vrcp.pop %v4922
          %v5121 = vmul.f32 %v4922, %v5120
          %v5122 = vsub.f32 1.0, %v5121
          %v5123 = vmul.f32 %v5120, %v5122
          %v5124 = vadd.f32 %v5120, %v5123
          %vm5125 = vweird.f32 %v4922
          %vm5126 = vweird.f32 %v5120
          %vm5127 = vmor %vm5125, %vm5126
          %v5128 = vsel %vm5127, %v5120, %v5124
          %v5129 = vand.u32 2147483647, %v4922
          %vm5130 = vcmp.eq.f32.partialorder %v5129, 8.507059e+37
          %v5131 = vand.u32 %v4922, 2147483648
          %v5132 = vor.u32 1.1754944e-38, %v5131
          %v5133 = vsel %vm5130, %v5132, %v5128
          %v5134 = vmul.f32 1.0, %v5133
          %v5135 = vrcp.pop %v4923
          %v5136 = vmul.f32 %v4923, %v5135
          %v5137 = vsub.f32 1.0, %v5136
          %v5138 = vmul.f32 %v5135, %v5137
          %v5139 = vadd.f32 %v5135, %v5138
          %vm5140 = vweird.f32 %v4923
          %vm5141 = vweird.f32 %v5135
          %vm5142 = vmor %vm5140, %vm5141
          %v5143 = vsel %vm5142, %v5135, %v5139
          %v5144 = vand.u32 2147483647, %v4923
          %vm5145 = vcmp.eq.f32.partialorder %v5144, 8.507059e+37
          %v5146 = vand.u32 %v4923, 2147483648
          %v5147 = vor.u32 1.1754944e-38, %v5146
          %v5148 = vsel %vm5145, %v5147, %v5143
          %v5149 = vmul.f32 1.0, %v5148
          %v5150 = vrcp.pop %v4924
          %v5151 = vmul.f32 %v4924, %v5150
          %v5152 = vsub.f32 1.0, %v5151
          %v5153 = vmul.f32 %v5150, %v5152
          %v5154 = vadd.f32 %v5150, %v5153
          %vm5155 = vweird.f32 %v4924
          %vm5156 = vweird.f32 %v5150
          %vm5157 = vmor %vm5155, %vm5156
          %v5158 = vsel %vm5157, %v5150, %v5154
          %v5159 = vand.u32 2147483647, %v4924
          %vm5160 = vcmp.eq.f32.partialorder %v5159, 8.507059e+37
          %v5161 = vand.u32 %v4924, 2147483648
          %v5162 = vor.u32 1.1754944e-38, %v5161
          %v5163 = vsel %vm5160, %v5162, %v5158
          %v5164 = vmul.f32 1.0, %v5163
          %v5165 = vmul.f32 %v4814, %v4939
          %v5166 = vmul.f32 %v4817, %v4954
          %v5167 = vmul.f32 %v4820, %v4969
          %v5168 = vmul.f32 %v4823, %v4984
          %v5169 = vmul.f32 %v4826, %v4999
          %v5170 = vmul.f32 %v4829, %v5014
          %v5171 = vmul.f32 %v4832, %v5029
          %v5172 = vmul.f32 %v4835, %v5044
          %v5173 = vmul.f32 %v4838, %v5059
          %v5174 = vmul.f32 %v4841, %v5074
          %v5175 = vmul.f32 %v4844, %v5089
          %v5176 = vmul.f32 %v4847, %v5104
          %v5177 = vmul.f32 %v4850, %v5119
          %v5178 = vmul.f32 %v4853, %v5134
          %v5179 = vmul.f32 %v4856, %v5149
          %v5180 = vmul.f32 %v4859, %v5164
          %v5181 = vld [vmem:[%s25] sm:$0x1]
          %v5183 = vperm.slane %v5181, 0
          %v5185 = vmul.f32 %v5165, %v5183
          %v5186 = vmul.f32 %v5166, %v5183
          %v5187 = vmul.f32 %v5167, %v5183
          %v5188 = vmul.f32 %v5168, %v5183
          %v5189 = vmul.f32 %v5169, %v5183
          %v5190 = vmul.f32 %v5170, %v5183
          %v5191 = vmul.f32 %v5171, %v5183
          %v5192 = vmul.f32 %v5172, %v5183
          %v5193 = vmul.f32 %v5173, %v5183
          %v5194 = vmul.f32 %v5174, %v5183
          %v5195 = vmul.f32 %v5175, %v5183
          %v5196 = vmul.f32 %v5176, %v5183
          %v5197 = vmul.f32 %v5177, %v5183
          %v5198 = vmul.f32 %v5178, %v5183
          %v5199 = vmul.f32 %v5179, %v5183
          %v5200 = vmul.f32 %v5180, %v5183
          %v5201 = vsel %vm1474, %v5185, 0.0
          %5202 = vadd.xlane.f32.xlu0 %v5201
          %v5203 = vpop.xlane.xlu0 %5202
          %v5204 = vsel %vm1474, %v5186, 0.0
          %5205 = vadd.xlane.f32.xlu0 %v5204
          %v5206 = vpop.xlane.xlu0 %5205
          %v5207 = vsel %vm1474, %v5187, 0.0
          %5208 = vadd.xlane.f32.xlu0 %v5207
          %v5209 = vpop.xlane.xlu0 %5208
          %v5210 = vsel %vm1474, %v5188, 0.0
          %5211 = vadd.xlane.f32.xlu0 %v5210
          %v5212 = vpop.xlane.xlu0 %5211
          %v5213 = vsel %vm1474, %v5189, 0.0
          %5214 = vadd.xlane.f32.xlu0 %v5213
          %v5215 = vpop.xlane.xlu0 %5214
          %v5216 = vsel %vm1474, %v5190, 0.0
          %5217 = vadd.xlane.f32.xlu0 %v5216
          %v5218 = vpop.xlane.xlu0 %5217
          %v5219 = vsel %vm1474, %v5191, 0.0
          %5220 = vadd.xlane.f32.xlu0 %v5219
          %v5221 = vpop.xlane.xlu0 %5220
          %v5222 = vsel %vm1474, %v5192, 0.0
          %5223 = vadd.xlane.f32.xlu0 %v5222
          %v5224 = vpop.xlane.xlu0 %5223
          %v5225 = vsel %vm1474, %v5193, 0.0
          %5226 = vadd.xlane.f32.xlu0 %v5225
          %v5227 = vpop.xlane.xlu0 %5226
          %v5228 = vsel %vm1474, %v5194, 0.0
          %5229 = vadd.xlane.f32.xlu0 %v5228
          %v5230 = vpop.xlane.xlu0 %5229
          %v5231 = vsel %vm1474, %v5195, 0.0
          %5232 = vadd.xlane.f32.xlu0 %v5231
          %v5233 = vpop.xlane.xlu0 %5232
          %v5234 = vsel %vm1474, %v5196, 0.0
          %5235 = vadd.xlane.f32.xlu0 %v5234
          %v5236 = vpop.xlane.xlu0 %5235
          %v5237 = vsel %vm1474, %v5197, 0.0
          %5238 = vadd.xlane.f32.xlu0 %v5237
          %v5239 = vpop.xlane.xlu0 %5238
          %v5240 = vsel %vm1474, %v5198, 0.0
          %5241 = vadd.xlane.f32.xlu0 %v5240
          %v5242 = vpop.xlane.xlu0 %5241
          %v5243 = vsel %vm1474, %v5199, 0.0
          %5244 = vadd.xlane.f32.xlu0 %v5243
          %v5245 = vpop.xlane.xlu0 %5244
          %v5246 = vsel %vm1474, %v5200, 0.0
          %5247 = vadd.xlane.f32.xlu0 %v5246
          %v5248 = vpop.xlane.xlu0 %5247
          %s5249 = scalar_lea.vmem [#allocation7], %s2388
          %v5250 = vld [vmem:[%s5249] sm:$0xff]
          %v5251 = vld [vmem:[%s5249 + $0x8] sm:$0xff]
          %v5252 = vld [vmem:[%s5249 + $0x10] sm:$0xff]
          %v5253 = vld [vmem:[%s5249 + $0x18] sm:$0xff]
          %v5254 = vld [vmem:[%s5249 + $0x20] sm:$0xff]
          %v5255 = vld [vmem:[%s5249 + $0x28] sm:$0xff]
          %v5256 = vld [vmem:[%s5249 + $0x30] sm:$0xff]
          %v5257 = vld [vmem:[%s5249 + $0x38] sm:$0xff]
          %v5258 = vld [vmem:[%s5249 + $0x40] sm:$0xff]
          %v5259 = vld [vmem:[%s5249 + $0x48] sm:$0xff]
          %v5260 = vld [vmem:[%s5249 + $0x50] sm:$0xff]
          %v5261 = vld [vmem:[%s5249 + $0x58] sm:$0xff]
          %v5262 = vld [vmem:[%s5249 + $0x60] sm:$0xff]
          %v5263 = vld [vmem:[%s5249 + $0x68] sm:$0xff]
          %v5264 = vld [vmem:[%s5249 + $0x70] sm:$0xff]
          %v5265 = vld [vmem:[%s5249 + $0x78] sm:$0xff]
          %v5266 = vmul.f32 %v5250, %v5203
          %v5267 = vmul.f32 %v5251, %v5206
          %v5268 = vmul.f32 %v5252, %v5209
          %v5269 = vmul.f32 %v5253, %v5212
          %v5270 = vmul.f32 %v5254, %v5215
          %v5271 = vmul.f32 %v5255, %v5218
          %v5272 = vmul.f32 %v5256, %v5221
          %v5273 = vmul.f32 %v5257, %v5224
          %v5274 = vmul.f32 %v5258, %v5227
          %v5275 = vmul.f32 %v5259, %v5230
          %v5276 = vmul.f32 %v5260, %v5233
          %v5277 = vmul.f32 %v5261, %v5236
          %v5278 = vmul.f32 %v5262, %v5239
          %v5279 = vmul.f32 %v5263, %v5242
          %v5280 = vmul.f32 %v5264, %v5245
          %v5281 = vmul.f32 %v5265, %v5248
          %5282 = vset.pattern.permute.xlu0 1
          %5283 = vperm.xlu0 %5282, %v1240
          %v5284 = vpop.permute.xlu0 %5283
          %5286 = vset.pattern.permute.xlu0 1
          %5287 = vperm.xlu0 %5286, %v1241
          %v5288 = vpop.permute.xlu0 %5287
          %5290 = vset.pattern.permute.xlu0 1
          %5291 = vperm.xlu0 %5290, %v1242
          %v5292 = vpop.permute.xlu0 %5291
          %5294 = vset.pattern.permute.xlu0 1
          %5295 = vperm.xlu0 %5294, %v1243
          %v5296 = vpop.permute.xlu0 %5295
          %5298 = vset.pattern.permute.xlu0 1
          %5299 = vperm.xlu0 %5298, %v1244
          %v5300 = vpop.permute.xlu0 %5299
          %5302 = vset.pattern.permute.xlu0 1
          %5303 = vperm.xlu0 %5302, %v1245
          %v5304 = vpop.permute.xlu0 %5303
          %5306 = vset.pattern.permute.xlu0 1
          %5307 = vperm.xlu0 %5306, %v1246
          %v5308 = vpop.permute.xlu0 %5307
          %5310 = vset.pattern.permute.xlu0 1
          %5311 = vperm.xlu0 %5310, %v1247
          %v5312 = vpop.permute.xlu0 %5311
          %5314 = vset.pattern.permute.xlu0 1
          %5315 = vperm.xlu0 %5314, %v1248
          %v5316 = vpop.permute.xlu0 %5315
          %5318 = vset.pattern.permute.xlu0 1
          %5319 = vperm.xlu0 %5318, %v1249
          %v5320 = vpop.permute.xlu0 %5319
          %5322 = vset.pattern.permute.xlu0 1
          %5323 = vperm.xlu0 %5322, %v1250
          %v5324 = vpop.permute.xlu0 %5323
          %5326 = vset.pattern.permute.xlu0 1
          %5327 = vperm.xlu0 %5326, %v1251
          %v5328 = vpop.permute.xlu0 %5327
          %5330 = vset.pattern.permute.xlu0 1
          %5331 = vperm.xlu0 %5330, %v1252
          %v5332 = vpop.permute.xlu0 %5331
          %5334 = vset.pattern.permute.xlu0 1
          %5335 = vperm.xlu0 %5334, %v1253
          %v5336 = vpop.permute.xlu0 %5335
          %5338 = vset.pattern.permute.xlu0 1
          %5339 = vperm.xlu0 %5338, %v1254
          %v5340 = vpop.permute.xlu0 %5339
          %5342 = vset.pattern.permute.xlu0 1
          %5343 = vperm.xlu0 %5342, %v1255
          %v5344 = vpop.permute.xlu0 %5343
          %v5346 = vmul.f32 %v5266, %v5284
          %v5347 = vmul.f32 %v5267, %v5288
          %v5348 = vmul.f32 %v5268, %v5292
          %v5349 = vmul.f32 %v5269, %v5296
          %v5350 = vmul.f32 %v5270, %v5300
          %v5351 = vmul.f32 %v5271, %v5304
          %v5352 = vmul.f32 %v5272, %v5308
          %v5353 = vmul.f32 %v5273, %v5312
          %v5354 = vmul.f32 %v5274, %v5316
          %v5355 = vmul.f32 %v5275, %v5320
          %v5356 = vmul.f32 %v5276, %v5324
          %v5357 = vmul.f32 %v5277, %v5328
          %v5358 = vmul.f32 %v5278, %v5332
          %v5359 = vmul.f32 %v5279, %v5336
          %v5360 = vmul.f32 %v5280, %v5340
          %v5361 = vmul.f32 %v5281, %v5344
          %v5362 = vpack.c.bf16 %v5347, %v5346
          %v5363 = vpack.c.bf16 %v5349, %v5348
          %v5364 = vpack.c.bf16 %v5351, %v5350
          %v5365 = vpack.c.bf16 %v5353, %v5352
          %v5366 = vpack.c.bf16 %v5355, %v5354
          %v5367 = vpack.c.bf16 %v5357, %v5356
          %v5368 = vpack.c.bf16 %v5359, %v5358
          %v5369 = vpack.c.bf16 %v5361, %v5360
          %v5370 = vld [vmem:[#allocation5] sm:$0xff]
          %v5371 = vld [vmem:[#allocation5 + $0x8] sm:$0xff]
          %5372 = vmatpush.bf16.msra.mxu0 %v5369
          %5373 = vmatpush.bf16.msra.mxu0 %v5368
          %5374 = vmatpush.bf16.msra.mxu0 %v5367
          %5375 = vmatpush.bf16.msra.mxu0 %v5366
          %5376 = vmatpush.bf16.msra.mxu0 %v5365
          %5377 = vmatpush.bf16.msra.mxu0 %v5364
          %5378 = vmatpush.bf16.msra.mxu0 %v5363
          %5379 = vmatpush.bf16.msra.mxu0 %v5362
          %5380 = vmatmul.bf16.gmra.mxu0 %v1559
          %v5381 = vpop.f32.mrf.mxu0
          %v5382 = vadd.f32 0.0, %v5381
          %v5383 = vpop.f32.mrf.mxu0
          %v5384 = vadd.f32 0.0, %v5383
          %5385 = vdwg.mxu0
          %v5386 = vadd.f32 %v5370, %v5382
          %v5387 = vadd.f32 %v5371, %v5384
          %vm5388 = vcmask 64512
          %5389 = vst.msk [vmem:[#allocation5] sm:$0xff] %vm5388, %v5386
          %5390 = vst.msk [vmem:[#allocation5 + $0x8] sm:$0xff] %vm5388, %v5387
          %p5391 = scmp.eq.s32.totalorder %s45, 1
          // Predicated region
          $region157: #{equivariant_block_forward.1} parent=155 // pred_check
            %p5392 = pneg %p5391
          $region158: #{equivariant_block_forward.1} parent=155 // pred_check_branch
            %5394 = sbr.rel (%p5392) target = $region160
          $region159: #{equivariant_block_forward.1} parent=155 // pred_region
            %v5395 = vld [vmem:[#allocation5] sm:$0xff]
            %v5396 = vld [vmem:[#allocation5 + $0x8] sm:$0xff]
            %v5397 = vmul.f32 %v5395, 0.01
            %v5398 = vmul.f32 %v5396, 0.01
            %v5399 = vld [vmem:[%s6] sm:$0xff]
            %v5400 = vld [vmem:[%s6 + $0x8] sm:$0xff]
            %5402 = vset.pattern.permute.xlu0 0
            %5403 = vperm.xlu0 %5402, %v5399
            %v5404 = vpop.permute.xlu0 %5403
            %5407 = vset.pattern.permute.xlu0 0
            %5408 = vperm.xlu0 %5407, %v5400
            %v5409 = vpop.permute.xlu0 %5408
            %v5411 = vmul.f32 %v5397, %v5404
            %v5412 = vmul.f32 %v5398, %v5409
            %v5413 = vld [vmem:[%s4] sm:$0xff]
            %v5414 = vld [vmem:[%s4 + $0x8] sm:$0xff]
            %v5415 = vadd.f32 %v5413, %v5411
            %v5416 = vadd.f32 %v5414, %v5412
            %v5417 = vld [vmem:[%s5] sm:$0xff]
            %v5418 = vld [vmem:[%s5 + $0x8] sm:$0xff]
            %5420 = vset.pattern.permute.xlu0 0
            %5421 = vperm.xlu0 %5420, %v5417
            %v5422 = vpop.permute.xlu0 %5421
            %5425 = vset.pattern.permute.xlu0 0
            %5426 = vperm.xlu0 %5425, %v5418
            %v5427 = vpop.permute.xlu0 %5426
            %v5429 = vmul.f32 %v5415, %v5422
            %v5430 = vmul.f32 %v5416, %v5427
            %5431 = vst.msk [vmem:[%s27] sm:$0xff] %vm5388, %v5429
            %5432 = vst.msk [vmem:[%s27 + $0x8] sm:$0xff] %vm5388, %v5430
            %v5433 = vld [vmem:[#allocation2] sm:$0xff]
            %v5434 = vld [vmem:[#allocation2 + $0x8] sm:$0xff]
            %v5435 = vld [vmem:[%s5] sm:$0xff]
            %v5436 = vld [vmem:[%s5 + $0x8] sm:$0xff]
            %5438 = vset.pattern.permute.xlu0 0
            %5439 = vperm.xlu0 %5438, %v5435
            %v5440 = vpop.permute.xlu0 %5439
            %5443 = vset.pattern.permute.xlu0 0
            %5444 = vperm.xlu0 %5443, %v5436
            %v5445 = vpop.permute.xlu0 %5444
            %v5447 = vmul.f32 %v5433, %v5440
            %v5448 = vmul.f32 %v5434, %v5445
            %5449 = vst.msk [vmem:[#allocation8] sm:$0xff] %vm1474, %v5447
            %5450 = vst.msk [vmem:[#allocation8 + $0x8] sm:$0xff] %vm1474, %v5448
          $region160: #{equivariant_block_forward.1} parent=155 // pred_fallthru
            _
        $region156: #{equivariant_block_forward.1} parent=123 // pred_fallthru
          _
        // Predicated region
        $region161: #{equivariant_block_forward.1} parent=123 // pred_check
          %p5451 = pneg %p686
        $region162: #{equivariant_block_forward.1} parent=123 // pred_check_branch
          %5453 = sbr.rel (%p5451) target = $region164
        $region163: #{equivariant_block_forward.1} parent=123 // pred_region
          %5455 = vsyncadd [#allocation9], 0
          %s5456 = sshll.u32 [#allocation8], 4
          %s5457 = int_to_ptr.vmem [resolvable:$true] %s5456
          %s5458 = sshll.u32 %s26, 4
          %s5459 = int_to_ptr.hbm [resolvable:$true] %s5458
          %5464 = dma.vmem_to_hbm [thread:$0]  %s5457, 256, %s5459, [#allocation9], 128, 128, 8
        $region164: #{equivariant_block_forward.1} parent=123 // pred_fallthru
          _
        // Predicated region
        $region165: #{equivariant_block_forward.1} parent=123 // pred_check
          %p5465 = pneg %p707
        $region166: #{equivariant_block_forward.1} parent=123 // pred_check_branch
          %5467 = sbr.rel (%p5465) target = $region168
        $region167: #{equivariant_block_forward.1} parent=123 // pred_region
          _
        $region168: #{equivariant_block_forward.1} parent=123 // pred_fallthru
          _
        // Predicated region
        $region169: #{equivariant_block_forward.1} parent=123 // pred_check
          %p5468 = pneg %p686
        $region170: #{equivariant_block_forward.1} parent=123 // pred_check_branch
          %5470 = sbr.rel (%p5468) target = $region172
        $region171: #{equivariant_block_forward.1} parent=123 // pred_region
          %5472 = dma.done [#allocation9], 256
        $region172: #{equivariant_block_forward.1} parent=123 // pred_fallthru
          _
        // Predicated region
        $region173: #{equivariant_block_forward.1} parent=123 // pred_check
          %p5473 = pneg %p707
        $region174: #{equivariant_block_forward.1} parent=123 // pred_check_branch
          %5475 = sbr.rel (%p5473) target = $region176
        $region175: #{equivariant_block_forward.1} parent=123 // pred_region
          _
        $region176: #{equivariant_block_forward.1} parent=123 // pred_fallthru
          _
      $region124: #{equivariant_block_forward.1} parent=5 // pred_fallthru
        _
      %p5476 = scmp.le.s32.totalorder 2, %s35
      // Predicated region
      $region177: #{equivariant_block_forward.1} parent=5 // pred_check
        %p5477 = pneg %p5476
      $region178: #{equivariant_block_forward.1} parent=5 // pred_check_branch
        %5479 = sbr.rel (%p5477) target = $region180
      $region179: #{equivariant_block_forward.1} parent=5 // pred_region
        %s5480 = ssub.s32 %s35, 2
      $region180: #{equivariant_block_forward.1} parent=5 // pred_fallthru
        _
    $region6: #{equivariant_block_forward.1} parent=1 // loop_footer
      %s39 = sadd.s32 1, %s35
    $region7: #{equivariant_block_forward.1} parent=1 // loop_footer_branch
      %34 = sbr.rel target = $region3
    $region8: #{equivariant_block_forward.1} parent=1 // loop_exit
      _
    %5481 = vsyncpa [#allocation9], 1
    %s5482 = scalar_lea.sflag [#allocation9], 1
    %5483 = vsyncpa %s5482, 1

</llo_original>
